<compile_context>
chip_gen: v7x
topology: tpu7x:2x2x1
jax: 0.10.0
libtpu: 0.0.40
codegen_flags: <defaults>
</compile_context>

<pallas_src>
import math
import jax
import jax.numpy as jnp
from jax.experimental import pallas as pl
from jax.experimental.pallas import tpu as pltpu


def gcn_sage_kernel(hT_ref, adjT_ref, geoT_ref, efT_ref, norm_ref,
                    wh_ref, wge_ref, b_ref, gamma_ref, beta_ref,
                    out_ref, acc_ref):
    G = geoT_ref.shape[0]           # geometric (per-src-node) feature count
    E = efT_ref.shape[0]            # per-edge feature planes
    s = pl.program_id(1)

    @pl.when(s == 0)
    def _init():
        acc_ref[...] = jnp.zeros_like(acc_ref)

    adjT = adjT_ref[...]                                         # [TS, TD] bf16 in {0,1}

    # --- neighbor aggregation, accumulated over src tiles ----------------------
    # Geometric part on the MXU: (A @ Geo)^T = Geo^T @ A^T -> accumulator rows 0:G.
    acc_ref[:G, :] += jnp.dot(geoT_ref[...], adjT,
                              preferred_element_type=jnp.float32)

    # Edge-feature part: mask by adjacency (exact in bf16: adj is 0/1) and sum
    # over the src sublane axis, accumulating in f32.  Each plane lands directly
    # on its own accumulator row (no per-step concatenate / sublane packing).
    for e in range(E):
        masked = efT_ref[e] * adjT                               # [TS, TD] bf16
        acc_ref[G + e:G + e + 1, :] += jnp.sum(
            masked, axis=0, keepdims=True, dtype=jnp.float32)    # [1, TD] f32

    # --- epilogue: Linear + LayerNorm + ReLU on the finished dst tile ----------
    @pl.when(s == pl.num_programs(1) - 1)
    def _finalize():
        nrm = norm_ref[...]                                      # [1, TD] f32
        # Linear(cat(h, ah*norm)) in feature-major form (exact up to float
        # reassociation):  y = W_h @ h^T  +  W_[geo|edge] @ (acc * norm)  +  b
        y = (jnp.dot(wh_ref[...], hT_ref[...],                    # bf16 MXU, f32 acc
                     preferred_element_type=jnp.float32)
             + jnp.dot(wge_ref[...], acc_ref[...] * nrm,          # small f32 dot (K = G+E)
                       preferred_element_type=jnp.float32)
             + b_ref[...])                                       # [out, TD] f32

        # LayerNorm over out_feats (axis 0), eps = 1e-5, affine — one pass.
        inv_f = 1.0 / y.shape[0]
        s1 = jnp.sum(y, axis=0, keepdims=True)
        s2 = jnp.sum(y * y, axis=0, keepdims=True)
        mu = s1 * inv_f
        var = s2 * inv_f - mu * mu
        y = (y - mu) * jax.lax.rsqrt(var + 1e-5)
        y = y * gamma_ref[...] + beta_ref[...]

        # Activation (ReLU assumed for the module's `activation`).
        out_ref[...] = jnp.maximum(y, 0.0).astype(out_ref.dtype)


def gcn_sage_forward(hT, adjT, geoT, efT, norm, W, b, gamma, beta, *,
                     tile_dst=512, tile_src=256, node_major_out=False):
    """Dense GcnSAGELayer forward.

    Kernel-native ("feature-major") input layouts — produce these upstream so
    no N^2-scale transpose/cast pass runs in XLA before the kernel:
      hT    [in_feats, N]        node features (bf16 preferred)
      adjT  [N_src, N_dst]       0/1 adjacency, adjT[s, d] = 1 iff edge s -> d
      geoT  [G, N]               per-node 'Geometric' features (G = 4)
      efT   [E, N_src, N_dst]    UNMASKED dense edge features, E = 20, message
                                 order [distance, angle, bin_angles(8), discrete(10)]
      norm  [1, N] (or [N])      per-dst normalization (DGL g.ndata['norm'])
      W     [out, in_feats+24]   linear weight;  b / gamma / beta  [out]
    Returns [out_feats, N] f32 (feature-major) unless node_major_out=True.
    """
    in_feats, N = hT.shape
    G = geoT.shape[0]
    E = efT.shape[0]
    out_feats = W.shape[0]
    assert adjT.shape == (N, N) and efT.shape == (E, N, N)
    assert W.shape[1] == in_feats + G + E

    tile_dst = min(tile_dst, N)
    tile_src = min(tile_src, N)
    assert N % tile_dst == 0 and N % tile_src == 0, "N must be divisible by tile sizes"
    nd, ns = N // tile_dst, N // tile_src   # keep nd >= 2 on v7x (2 TensorCores)

    # Cheap parameter-side casts only; graph-sized operands should already be
    # bf16 in the layouts above (astype is a no-op / elided if they are).
    hT = hT.astype(jnp.bfloat16)
    adjT = adjT.astype(jnp.bfloat16)
    geoT = geoT.astype(jnp.bfloat16)
    efT = efT.astype(jnp.bfloat16)
    norm_row = jnp.asarray(norm, jnp.float32).reshape(1, N)

    Wh = W[:, :in_feats].astype(jnp.bfloat16)              # [out, in]   (bf16 MXU path)
    Wge = W[:, in_feats:].astype(jnp.float32)              # [out, G+E]  (tiny, stays f32)
    b_c = b.reshape(out_feats, 1).astype(jnp.float32)
    g_c = gamma.reshape(out_feats, 1).astype(jnp.float32)
    be_c = beta.reshape(out_feats, 1).astype(jnp.float32)

    grid_spec = pltpu.PrefetchScalarGridSpec(
        num_scalar_prefetch=0,
        grid=(nd, ns),                                     # (dst tiles, src tiles); reduction last
        in_specs=[
            pl.BlockSpec((in_feats, tile_dst), lambda d, s: (0, d)),        # h^T
            pl.BlockSpec((tile_src, tile_dst), lambda d, s: (s, d)),        # adj^T
            pl.BlockSpec((G, tile_src), lambda d, s: (0, s)),               # geo^T
            pl.BlockSpec((E, tile_src, tile_dst), lambda d, s: (0, s, d)),  # EF^T
            pl.BlockSpec((1, tile_dst), lambda d, s: (0, d)),               # norm
            pl.BlockSpec((out_feats, in_feats), lambda d, s: (0, 0)),       # W_h
            pl.BlockSpec((out_feats, G + E), lambda d, s: (0, 0)),          # W_[geo|edge]
            pl.BlockSpec((out_feats, 1), lambda d, s: (0, 0)),              # b
            pl.BlockSpec((out_feats, 1), lambda d, s: (0, 0)),              # gamma
            pl.BlockSpec((out_feats, 1), lambda d, s: (0, 0)),              # beta
        ],
        out_specs=pl.BlockSpec((out_feats, tile_dst), lambda d, s: (0, d)),
        scratch_shapes=[pltpu.VMEM((G + E, tile_dst), jnp.float32)],        # merged accumulator
    )

    # VMEM budget: double-buffered blocks + scratch; derive the compiler limit
    # from it and keep it <= 48 MiB so the same code also fits v7x (64 MiB VMEM).
    bpe16, bpe32 = 2, 4
    block_bytes = (E * tile_src * tile_dst * bpe16        # EF tile (dominant)
                   + tile_src * tile_dst * bpe16          # adj tile
                   + in_feats * tile_dst * bpe16          # h tile
                   + G * tile_src * bpe16                 # geo tile
                   + tile_dst * bpe32                     # norm tile
                   + out_feats * in_feats * bpe16         # W_h
                   + out_feats * (G + E + 3) * bpe32      # W_ge, b, gamma, beta
                   + out_feats * tile_dst * bpe32)        # output tile
    vmem_need = 2 * block_bytes + (G + E) * tile_dst * bpe32
    vmem_limit = min(max(vmem_need + (8 << 20), 32 << 20), 48 << 20)

    flops = (2 * G * N * N                                  # geo aggregation matmul
             + 2 * E * N * N                                # edge mask-mul + reduce adds
             + 2 * N * (in_feats + G + E) * out_feats)      # linear
    bytes_accessed = (bpe16 * (E * N * N + N * N + in_feats * N + G * N)
                      + bpe32 * N                                       # norm
                      + bpe16 * out_feats * in_feats
                      + bpe32 * out_feats * (G + E + 3)
                      + bpe32 * out_feats * N)                          # output

    outT = pl.pallas_call(
        gcn_sage_kernel,
        out_shape=jax.ShapeDtypeStruct((out_feats, N), jnp.float32),
        grid_spec=grid_spec,
        compiler_params=pltpu.CompilerParams(
            dimension_semantics=("parallel", "arbitrary"),   # dst tiles shard across TCs
            vmem_limit_bytes=vmem_limit),
        cost_estimate=pl.CostEstimate(flops=flops, transcendentals=N,
                                      bytes_accessed=bytes_accessed),
    )(hT, adjT, geoT, efT, norm_row, Wh, Wge, b_c, g_c, be_c)

    return outT.T if node_major_out else outT               # [out_feats, N] by default


if __name__ == "__main__":
    key = jax.random.PRNGKey(0)

    N = 256
    in_feats = 16
    out_feats = 32
    G = 4                        # 'Geometric' dim
    B_ANG = 8                    # bin_angles ('feat')
    D_DISC = 10                  # discrete_bin_edges
    E = 1 + 1 + B_ANG + D_DISC   # = 20 ;  G + E == 24

    ks = jax.random.split(key, 6)

    # Build the kernel-native feature-major layouts DIRECTLY (no big transpose
    # or cast pass before the kernel, per the performance review).
    hT = jax.random.normal(ks[0], (in_feats, N), jnp.bfloat16)       # h^T  [in, N]
    geoT = jax.random.normal(ks[1], (G, N), jnp.bfloat16)            # Geometric^T [G, N]

    adjT = (jax.random.uniform(ks[2], (N, N)) < 0.1).astype(jnp.bfloat16)
    adjT = adjT.at[jnp.arange(N), jnp.arange(N)].set(0)              # adjT[src, dst], no self loops

    # UNMASKED stacked edge features, message order [distance, angle,
    # bin_angles(8), discrete(10)], plane-major, src on sublanes: [E, N_src, N_dst].
    # TODO(synk): the Tresh_distance=False branch just swaps plane 0 for
    # 'distance_not_tresh'; pass that plane instead to reproduce it.
    efT = jax.random.uniform(ks[3], (E, N, N), dtype=jnp.bfloat16)

    # DGL-style normalization: norm = 1 / in_degree (g.ndata['norm']).
    deg = jnp.maximum(adjT.astype(jnp.float32).sum(axis=0, keepdims=True), 1.0)
    norm_row = 1.0 / deg                                             # [1, N]

    # Linear(in_feats + 24, out_feats) with reset_parameters(): uniform(-stdv, stdv).
    lin_in = in_feats + G + E
    stdv = 1.0 / math.sqrt(lin_in)
    W = jax.random.uniform(ks[4], (out_feats, lin_in), jnp.float32, -stdv, stdv)
    b = jax.random.uniform(ks[5], (out_feats,), jnp.float32, -stdv, stdv)
    # LayerNorm affine params (PyTorch init: ones / zeros).
    gamma = jnp.ones((out_feats,), jnp.float32)
    beta = jnp.zeros((out_feats,), jnp.float32)

    # Small tiles here only to exercise both grid axes (2 dst tiles x 2 src tiles)
    # at this demo size; production defaults are 512 x 256.
    outT = gcn_sage_forward(hT, adjT, geoT, efT, norm_row, W, b, gamma, beta,
                            tile_dst=128, tile_src=128)
    outT = jax.block_until_ready(outT)

    # Plain-JAX reference of the exact module semantics (message/reduce, concat,
    # linear, LayerNorm, ReLU) computed in f32 from the same bf16 inputs.
    hT32 = hT.astype(jnp.float32)
    geoT32 = geoT.astype(jnp.float32)
    adjT32 = adjT.astype(jnp.float32)
    efT32 = efT.astype(jnp.float32)
    ah_geoT = geoT32 @ adjT32                                 # [G, N]  = (A @ Geo)^T
    ah_edgeT = jnp.einsum('esd,sd->ed', efT32, adjT32)        # [E, N]
    ahT = jnp.concatenate([ah_geoT, ah_edgeT], axis=0) * norm_row
    xT = jnp.concatenate([hT32, ahT], axis=0)                 # cat(h, ah*norm)^T
    yT = W @ xT + b[:, None]
    mu = yT.mean(axis=0, keepdims=True)
    var = ((yT - mu) ** 2).mean(axis=0, keepdims=True)
    yT = (yT - mu) * jax.lax.rsqrt(var + 1e-5) * gamma[:, None] + beta[:, None]
    refT = jnp.maximum(yT, 0.0)

    assert outT.shape == refT.shape
    max_diff = jnp.max(jnp.abs(outT - refT))
    assert jnp.allclose(outT, refT, atol=1e-2, rtol=1e-2), (
        f"kernel/reference mismatch, max abs diff = {max_diff}")

    print("KERNEL_OK")
</pallas_src>

<mosaic_0001>
module attributes {stable_mosaic.version = 11 : i64} {
  func.func @gcn_sage_kernel(%arg0: i32, %arg1: i32, %arg2: memref<16x128xbf16, #tpu.memory_space<vmem>>, %arg3: memref<128x128xbf16, #tpu.memory_space<vmem>>, %arg4: memref<4x128xbf16, #tpu.memory_space<vmem>>, %arg5: memref<20x128x128xbf16, #tpu.memory_space<vmem>>, %arg6: memref<1x128xf32, #tpu.memory_space<vmem>>, %arg7: memref<32x16xbf16, #tpu.memory_space<vmem>>, %arg8: memref<32x24xf32, #tpu.memory_space<vmem>>, %arg9: memref<32x1xf32, #tpu.memory_space<vmem>>, %arg10: memref<32x1xf32, #tpu.memory_space<vmem>>, %arg11: memref<32x1xf32, #tpu.memory_space<vmem>>, %arg12: memref<32x128xf32, #tpu.memory_space<vmem>>, %arg13: memref<24x128xf32, #tpu.memory_space<vmem>>) attributes {dimension_semantics = [#tpu.dimension_semantics<parallel>, #tpu.dimension_semantics<arbitrary>], iteration_bounds = array<i64: 2, 2>, scalar_prefetch = 0 : i64, scratch_operands = 1 : i64, tpu.core_type = #tpu.core_type<tc>, window_params = [{transform_indices = @transform_0, window_bounds = array<i64: 16, 128>}, {transform_indices = @transform_1, window_bounds = array<i64: 128, 128>}, {transform_indices = @transform_2, window_bounds = array<i64: 4, 128>}, {transform_indices = @transform_3, window_bounds = array<i64: 20, 128, 128>}, {transform_indices = @transform_4, window_bounds = array<i64: 1, 128>}, {pipeline_mode = #tpu.pipeline_mode<synchronous>, transform_indices = @transform_5, window_bounds = array<i64: 32, 16>}, {pipeline_mode = #tpu.pipeline_mode<synchronous>, transform_indices = @transform_6, window_bounds = array<i64: 32, 24>}, {pipeline_mode = #tpu.pipeline_mode<synchronous>, transform_indices = @transform_7, window_bounds = array<i64: 32, 1>}, {pipeline_mode = #tpu.pipeline_mode<synchronous>, transform_indices = @transform_8, window_bounds = array<i64: 32, 1>}, {pipeline_mode = #tpu.pipeline_mode<synchronous>, transform_indices = @transform_9, window_bounds = array<i64: 32, 1>}, {transform_indices = @transform_10, window_bounds = array<i64: 32, 128>}]} {
    %c0_i32 = arith.constant 0 : i32
    %0 = arith.cmpi eq, %arg1, %c0_i32 : i32
    %1 = arith.extui %0 : i1 to i32
    %c0_i32_0 = arith.constant 0 : i32
    %2 = arith.cmpi ne, %1, %c0_i32_0 : i32
    scf.if %2 {
      %cst_146 = arith.constant 0.000000e+00 : f32
      %192 = vector.broadcast %cst_146 : f32 to vector<24x128xf32>
      %c0_147 = arith.constant 0 : index
      %c0_148 = arith.constant 0 : index
      %193 = vector.load %arg13[%c0_147, %c0_148] : memref<24x128xf32, #tpu.memory_space<vmem>>, vector<24x128xf32>
      tpu.vector_store %arg13[%c0_147, %c0_148], %192 {strides = array<i32>} : memref<24x128xf32, #tpu.memory_space<vmem>>, vector<24x128xf32>,
    } else {
    }
    %c0 = arith.constant 0 : index
    %c0_1 = arith.constant 0 : index
    %3 = vector.load %arg3[%c0, %c0_1] : memref<128x128xbf16, #tpu.memory_space<vmem>>, vector<128x128xbf16>
    %c0_2 = arith.constant 0 : index
    %c0_3 = arith.constant 0 : index
    %4 = vector.load %arg13[%c0_2, %c0_3] : memref<24x128xf32, #tpu.memory_space<vmem>>, vector<4x128xf32>
    %c0_4 = arith.constant 0 : index
    %c0_5 = arith.constant 0 : index
    %5 = vector.load %arg4[%c0_4, %c0_5] : memref<4x128xbf16, #tpu.memory_space<vmem>>, vector<4x128xbf16>
    %cst = arith.constant dense<0.000000e+00> : vector<4x128xf32>
    %6 = tpu.matmul %5, %3, %cst {dimension_numbers = #tpu.dot_dimension_numbers<[1], [0], [0], [1], [0, 0, 1, 1], [], []>} : vector<4x128xbf16>, vector<128x128xbf16>, vector<4x128xf32> -> vector<4x128xf32>
    %7 = arith.addf %4, %6 : vector<4x128xf32>
    %c0_6 = arith.constant 0 : index
    %c0_7 = arith.constant 0 : index
    %8 = vector.load %arg13[%c0_6, %c0_7] : memref<24x128xf32, #tpu.memory_space<vmem>>, vector<4x128xf32>
    tpu.vector_store %arg13[%c0_6, %c0_7], %7 {strides = array<i32>} : memref<24x128xf32, #tpu.memory_space<vmem>>, vector<4x128xf32>,
    %c0_8 = arith.constant 0 : index
    %c0_9 = arith.constant 0 : index
    %c0_10 = arith.constant 0 : index
    %9 = vector.load %arg5[%c0_8, %c0_9, %c0_10] : memref<20x128x128xbf16, #tpu.memory_space<vmem>>, vector<1x128x128xbf16>
    %10 = vector.shape_cast %9 : vector<1x128x128xbf16> to vector<128x128xbf16>
    %11 = arith.mulf %10, %3 : vector<128x128xbf16>
    %c4 = arith.constant 4 : index
    %c0_11 = arith.constant 0 : index
    %12 = vector.load %arg13[%c4, %c0_11] : memref<24x128xf32, #tpu.memory_space<vmem>>, vector<1x128xf32>
    %13 = arith.extf %11 : vector<128x128xbf16> to vector<128x128xf32>
    %cst_12 = arith.constant dense<0.000000e+00> : vector<128xf32>
    %14 = vector.multi_reduction <add>, %13, %cst_12 [0] : vector<128x128xf32> to vector<128xf32>
    %15 = vector.shape_cast %14 : vector<128xf32> to vector<1x128xf32>
    %16 = arith.addf %12, %15 : vector<1x128xf32>
    %c4_13 = arith.constant 4 : index
    %c0_14 = arith.constant 0 : index
    %17 = vector.load %arg13[%c4_13, %c0_14] : memref<24x128xf32, #tpu.memory_space<vmem>>, vector<1x128xf32>
    tpu.vector_store %arg13[%c4_13, %c0_14], %16 {strides = array<i32>} : memref<24x128xf32, #tpu.memory_space<vmem>>, vector<1x128xf32>,
    %c1 = arith.constant 1 : index
    %c0_15 = arith.constant 0 : index
    %c0_16 = arith.constant 0 : index
    %18 = vector.load %arg5[%c1, %c0_15, %c0_16] : memref<20x128x128xbf16, #tpu.memory_space<vmem>>, vector<1x128x128xbf16>
    %19 = vector.shape_cast %18 : vector<1x128x128xbf16> to vector<128x128xbf16>
    %20 = arith.mulf %19, %3 : vector<128x128xbf16>
    %c5 = arith.constant 5 : index
    %c0_17 = arith.constant 0 : index
    %21 = vector.load %arg13[%c5, %c0_17] : memref<24x128xf32, #tpu.memory_space<vmem>>, vector<1x128xf32>
    %22 = arith.extf %20 : vector<128x128xbf16> to vector<128x128xf32>
    %cst_18 = arith.constant dense<0.000000e+00> : vector<128xf32>
    %23 = vector.multi_reduction <add>, %22, %cst_18 [0] : vector<128x128xf32> to vector<128xf32>
    %24 = vector.shape_cast %23 : vector<128xf32> to vector<1x128xf32>
    %25 = arith.addf %21, %24 : vector<1x128xf32>
    %c5_19 = arith.constant 5 : index
    %c0_20 = arith.constant 0 : index
    %26 = vector.load %arg13[%c5_19, %c0_20] : memref<24x128xf32, #tpu.memory_space<vmem>>, vector<1x128xf32>
    tpu.vector_store %arg13[%c5_19, %c0_20], %25 {strides = array<i32>} : memref<24x128xf32, #tpu.memory_space<vmem>>, vector<1x128xf32>,
    %c2 = arith.constant 2 : index
    %c0_21 = arith.constant 0 : index
    %c0_22 = arith.constant 0 : index
    %27 = vector.load %arg5[%c2, %c0_21, %c0_22] : memref<20x128x128xbf16, #tpu.memory_space<vmem>>, vector<1x128x128xbf16>
    %28 = vector.shape_cast %27 : vector<1x128x128xbf16> to vector<128x128xbf16>
    %29 = arith.mulf %28, %3 : vector<128x128xbf16>
    %c6 = arith.constant 6 : index
    %c0_23 = arith.constant 0 : index
    %30 = vector.load %arg13[%c6, %c0_23] : memref<24x128xf32, #tpu.memory_space<vmem>>, vector<1x128xf32>
    %31 = arith.extf %29 : vector<128x128xbf16> to vector<128x128xf32>
    %cst_24 = arith.constant dense<0.000000e+00> : vector<128xf32>
    %32 = vector.multi_reduction <add>, %31, %cst_24 [0] : vector<128x128xf32> to vector<128xf32>
    %33 = vector.shape_cast %32 : vector<128xf32> to vector<1x128xf32>
    %34 = arith.addf %30, %33 : vector<1x128xf32>
    %c6_25 = arith.constant 6 : index
    %c0_26 = arith.constant 0 : index
    %35 = vector.load %arg13[%c6_25, %c0_26] : memref<24x128xf32, #tpu.memory_space<vmem>>, vector<1x128xf32>
    tpu.vector_store %arg13[%c6_25, %c0_26], %34 {strides = array<i32>} : memref<24x128xf32, #tpu.memory_space<vmem>>, vector<1x128xf32>,
    %c3 = arith.constant 3 : index
    %c0_27 = arith.constant 0 : index
    %c0_28 = arith.constant 0 : index
    %36 = vector.load %arg5[%c3, %c0_27, %c0_28] : memref<20x128x128xbf16, #tpu.memory_space<vmem>>, vector<1x128x128xbf16>
    %37 = vector.shape_cast %36 : vector<1x128x128xbf16> to vector<128x128xbf16>
    %38 = arith.mulf %37, %3 : vector<128x128xbf16>
    %c7 = arith.constant 7 : index
    %c0_29 = arith.constant 0 : index
    %39 = vector.load %arg13[%c7, %c0_29] : memref<24x128xf32, #tpu.memory_space<vmem>>, vector<1x128xf32>
    %40 = arith.extf %38 : vector<128x128xbf16> to vector<128x128xf32>
    %cst_30 = arith.constant dense<0.000000e+00> : vector<128xf32>
    %41 = vector.multi_reduction <add>, %40, %cst_30 [0] : vector<128x128xf32> to vector<128xf32>
    %42 = vector.shape_cast %41 : vector<128xf32> to vector<1x128xf32>
    %43 = arith.addf %39, %42 : vector<1x128xf32>
    %c7_31 = arith.constant 7 : index
    %c0_32 = arith.constant 0 : index
    %44 = vector.load %arg13[%c7_31, %c0_32] : memref<24x128xf32, #tpu.memory_space<vmem>>, vector<1x128xf32>
    tpu.vector_store %arg13[%c7_31, %c0_32], %43 {strides = array<i32>} : memref<24x128xf32, #tpu.memory_space<vmem>>, vector<1x128xf32>,
    %c4_33 = arith.constant 4 : index
    %c0_34 = arith.constant 0 : index
    %c0_35 = arith.constant 0 : index
    %45 = vector.load %arg5[%c4_33, %c0_34, %c0_35] : memref<20x128x128xbf16, #tpu.memory_space<vmem>>, vector<1x128x128xbf16>
    %46 = vector.shape_cast %45 : vector<1x128x128xbf16> to vector<128x128xbf16>
    %47 = arith.mulf %46, %3 : vector<128x128xbf16>
    %c8 = arith.constant 8 : index
    %c0_36 = arith.constant 0 : index
    %48 = vector.load %arg13[%c8, %c0_36] : memref<24x128xf32, #tpu.memory_space<vmem>>, vector<1x128xf32>
    %49 = arith.extf %47 : vector<128x128xbf16> to vector<128x128xf32>
    %cst_37 = arith.constant dense<0.000000e+00> : vector<128xf32>
    %50 = vector.multi_reduction <add>, %49, %cst_37 [0] : vector<128x128xf32> to vector<128xf32>
    %51 = vector.shape_cast %50 : vector<128xf32> to vector<1x128xf32>
    %52 = arith.addf %48, %51 : vector<1x128xf32>
    %c8_38 = arith.constant 8 : index
    %c0_39 = arith.constant 0 : index
    %53 = vector.load %arg13[%c8_38, %c0_39] : memref<24x128xf32, #tpu.memory_space<vmem>>, vector<1x128xf32>
    tpu.vector_store %arg13[%c8_38, %c0_39], %52 {strides = array<i32>} : memref<24x128xf32, #tpu.memory_space<vmem>>, vector<1x128xf32>,
    %c5_40 = arith.constant 5 : index
    %c0_41 = arith.constant 0 : index
    %c0_42 = arith.constant 0 : index
    %54 = vector.load %arg5[%c5_40, %c0_41, %c0_42] : memref<20x128x128xbf16, #tpu.memory_space<vmem>>, vector<1x128x128xbf16>
    %55 = vector.shape_cast %54 : vector<1x128x128xbf16> to vector<128x128xbf16>
    %56 = arith.mulf %55, %3 : vector<128x128xbf16>
    %c9 = arith.constant 9 : index
    %c0_43 = arith.constant 0 : index
    %57 = vector.load %arg13[%c9, %c0_43] : memref<24x128xf32, #tpu.memory_space<vmem>>, vector<1x128xf32>
    %58 = arith.extf %56 : vector<128x128xbf16> to vector<128x128xf32>
    %cst_44 = arith.constant dense<0.000000e+00> : vector<128xf32>
    %59 = vector.multi_reduction <add>, %58, %cst_44 [0] : vector<128x128xf32> to vector<128xf32>
    %60 = vector.shape_cast %59 : vector<128xf32> to vector<1x128xf32>
    %61 = arith.addf %57, %60 : vector<1x128xf32>
    %c9_45 = arith.constant 9 : index
    %c0_46 = arith.constant 0 : index
    %62 = vector.load %arg13[%c9_45, %c0_46] : memref<24x128xf32, #tpu.memory_space<vmem>>, vector<1x128xf32>
    tpu.vector_store %arg13[%c9_45, %c0_46], %61 {strides = array<i32>} : memref<24x128xf32, #tpu.memory_space<vmem>>, vector<1x128xf32>,
    %c6_47 = arith.constant 6 : index
    %c0_48 = arith.constant 0 : index
    %c0_49 = arith.constant 0 : index
    %63 = vector.load %arg5[%c6_47, %c0_48, %c0_49] : memref<20x128x128xbf16, #tpu.memory_space<vmem>>, vector<1x128x128xbf16>
    %64 = vector.shape_cast %63 : vector<1x128x128xbf16> to vector<128x128xbf16>
    %65 = arith.mulf %64, %3 : vector<128x128xbf16>
    %c10 = arith.constant 10 : index
    %c0_50 = arith.constant 0 : index
    %66 = vector.load %arg13[%c10, %c0_50] : memref<24x128xf32, #tpu.memory_space<vmem>>, vector<1x128xf32>
    %67 = arith.extf %65 : vector<128x128xbf16> to vector<128x128xf32>
    %cst_51 = arith.constant dense<0.000000e+00> : vector<128xf32>
    %68 = vector.multi_reduction <add>, %67, %cst_51 [0] : vector<128x128xf32> to vector<128xf32>
    %69 = vector.shape_cast %68 : vector<128xf32> to vector<1x128xf32>
    %70 = arith.addf %66, %69 : vector<1x128xf32>
    %c10_52 = arith.constant 10 : index
    %c0_53 = arith.constant 0 : index
    %71 = vector.load %arg13[%c10_52, %c0_53] : memref<24x128xf32, #tpu.memory_space<vmem>>, vector<1x128xf32>
    tpu.vector_store %arg13[%c10_52, %c0_53], %70 {strides = array<i32>} : memref<24x128xf32, #tpu.memory_space<vmem>>, vector<1x128xf32>,
    %c7_54 = arith.constant 7 : index
    %c0_55 = arith.constant 0 : index
    %c0_56 = arith.constant 0 : index
    %72 = vector.load %arg5[%c7_54, %c0_55, %c0_56] : memref<20x128x128xbf16, #tpu.memory_space<vmem>>, vector<1x128x128xbf16>
    %73 = vector.shape_cast %72 : vector<1x128x128xbf16> to vector<128x128xbf16>
    %74 = arith.mulf %73, %3 : vector<128x128xbf16>
    %c11 = arith.constant 11 : index
    %c0_57 = arith.constant 0 : index
    %75 = vector.load %arg13[%c11, %c0_57] : memref<24x128xf32, #tpu.memory_space<vmem>>, vector<1x128xf32>
    %76 = arith.extf %74 : vector<128x128xbf16> to vector<128x128xf32>
    %cst_58 = arith.constant dense<0.000000e+00> : vector<128xf32>
    %77 = vector.multi_reduction <add>, %76, %cst_58 [0] : vector<128x128xf32> to vector<128xf32>
    %78 = vector.shape_cast %77 : vector<128xf32> to vector<1x128xf32>
    %79 = arith.addf %75, %78 : vector<1x128xf32>
    %c11_59 = arith.constant 11 : index
    %c0_60 = arith.constant 0 : index
    %80 = vector.load %arg13[%c11_59, %c0_60] : memref<24x128xf32, #tpu.memory_space<vmem>>, vector<1x128xf32>
    tpu.vector_store %arg13[%c11_59, %c0_60], %79 {strides = array<i32>} : memref<24x128xf32, #tpu.memory_space<vmem>>, vector<1x128xf32>,
    %c8_61 = arith.constant 8 : index
    %c0_62 = arith.constant 0 : index
    %c0_63 = arith.constant 0 : index
    %81 = vector.load %arg5[%c8_61, %c0_62, %c0_63] : memref<20x128x128xbf16, #tpu.memory_space<vmem>>, vector<1x128x128xbf16>
    %82 = vector.shape_cast %81 : vector<1x128x128xbf16> to vector<128x128xbf16>
    %83 = arith.mulf %82, %3 : vector<128x128xbf16>
    %c12 = arith.constant 12 : index
    %c0_64 = arith.constant 0 : index
    %84 = vector.load %arg13[%c12, %c0_64] : memref<24x128xf32, #tpu.memory_space<vmem>>, vector<1x128xf32>
    %85 = arith.extf %83 : vector<128x128xbf16> to vector<128x128xf32>
    %cst_65 = arith.constant dense<0.000000e+00> : vector<128xf32>
    %86 = vector.multi_reduction <add>, %85, %cst_65 [0] : vector<128x128xf32> to vector<128xf32>
    %87 = vector.shape_cast %86 : vector<128xf32> to vector<1x128xf32>
    %88 = arith.addf %84, %87 : vector<1x128xf32>
    %c12_66 = arith.constant 12 : index
    %c0_67 = arith.constant 0 : index
    %89 = vector.load %arg13[%c12_66, %c0_67] : memref<24x128xf32, #tpu.memory_space<vmem>>, vector<1x128xf32>
    tpu.vector_store %arg13[%c12_66, %c0_67], %88 {strides = array<i32>} : memref<24x128xf32, #tpu.memory_space<vmem>>, vector<1x128xf32>,
    %c9_68 = arith.constant 9 : index
    %c0_69 = arith.constant 0 : index
    %c0_70 = arith.constant 0 : index
    %90 = vector.load %arg5[%c9_68, %c0_69, %c0_70] : memref<20x128x128xbf16, #tpu.memory_space<vmem>>, vector<1x128x128xbf16>
    %91 = vector.shape_cast %90 : vector<1x128x128xbf16> to vector<128x128xbf16>
    %92 = arith.mulf %91, %3 : vector<128x128xbf16>
    %c13 = arith.constant 13 : index
    %c0_71 = arith.constant 0 : index
    %93 = vector.load %arg13[%c13, %c0_71] : memref<24x128xf32, #tpu.memory_space<vmem>>, vector<1x128xf32>
    %94 = arith.extf %92 : vector<128x128xbf16> to vector<128x128xf32>
    %cst_72 = arith.constant dense<0.000000e+00> : vector<128xf32>
    %95 = vector.multi_reduction <add>, %94, %cst_72 [0] : vector<128x128xf32> to vector<128xf32>
    %96 = vector.shape_cast %95 : vector<128xf32> to vector<1x128xf32>
    %97 = arith.addf %93, %96 : vector<1x128xf32>
    %c13_73 = arith.constant 13 : index
    %c0_74 = arith.constant 0 : index
    %98 = vector.load %arg13[%c13_73, %c0_74] : memref<24x128xf32, #tpu.memory_space<vmem>>, vector<1x128xf32>
    tpu.vector_store %arg13[%c13_73, %c0_74], %97 {strides = array<i32>} : memref<24x128xf32, #tpu.memory_space<vmem>>, vector<1x128xf32>,
    %c10_75 = arith.constant 10 : index
    %c0_76 = arith.constant 0 : index
    %c0_77 = arith.constant 0 : index
    %99 = vector.load %arg5[%c10_75, %c0_76, %c0_77] : memref<20x128x128xbf16, #tpu.memory_space<vmem>>, vector<1x128x128xbf16>
    %100 = vector.shape_cast %99 : vector<1x128x128xbf16> to vector<128x128xbf16>
    %101 = arith.mulf %100, %3 : vector<128x128xbf16>
    %c14 = arith.constant 14 : index
    %c0_78 = arith.constant 0 : index
    %102 = vector.load %arg13[%c14, %c0_78] : memref<24x128xf32, #tpu.memory_space<vmem>>, vector<1x128xf32>
    %103 = arith.extf %101 : vector<128x128xbf16> to vector<128x128xf32>
    %cst_79 = arith.constant dense<0.000000e+00> : vector<128xf32>
    %104 = vector.multi_reduction <add>, %103, %cst_79 [0] : vector<128x128xf32> to vector<128xf32>
    %105 = vector.shape_cast %104 : vector<128xf32> to vector<1x128xf32>
    %106 = arith.addf %102, %105 : vector<1x128xf32>
    %c14_80 = arith.constant 14 : index
    %c0_81 = arith.constant 0 : index
    %107 = vector.load %arg13[%c14_80, %c0_81] : memref<24x128xf32, #tpu.memory_space<vmem>>, vector<1x128xf32>
    tpu.vector_store %arg13[%c14_80, %c0_81], %106 {strides = array<i32>} : memref<24x128xf32, #tpu.memory_space<vmem>>, vector<1x128xf32>,
    %c11_82 = arith.constant 11 : index
    %c0_83 = arith.constant 0 : index
    %c0_84 = arith.constant 0 : index
    %108 = vector.load %arg5[%c11_82, %c0_83, %c0_84] : memref<20x128x128xbf16, #tpu.memory_space<vmem>>, vector<1x128x128xbf16>
    %109 = vector.shape_cast %108 : vector<1x128x128xbf16> to vector<128x128xbf16>
    %110 = arith.mulf %109, %3 : vector<128x128xbf16>
    %c15 = arith.constant 15 : index
    %c0_85 = arith.constant 0 : index
    %111 = vector.load %arg13[%c15, %c0_85] : memref<24x128xf32, #tpu.memory_space<vmem>>, vector<1x128xf32>
    %112 = arith.extf %110 : vector<128x128xbf16> to vector<128x128xf32>
    %cst_86 = arith.constant dense<0.000000e+00> : vector<128xf32>
    %113 = vector.multi_reduction <add>, %112, %cst_86 [0] : vector<128x128xf32> to vector<128xf32>
    %114 = vector.shape_cast %113 : vector<128xf32> to vector<1x128xf32>
    %115 = arith.addf %111, %114 : vector<1x128xf32>
    %c15_87 = arith.constant 15 : index
    %c0_88 = arith.constant 0 : index
    %116 = vector.load %arg13[%c15_87, %c0_88] : memref<24x128xf32, #tpu.memory_space<vmem>>, vector<1x128xf32>
    tpu.vector_store %arg13[%c15_87, %c0_88], %115 {strides = array<i32>} : memref<24x128xf32, #tpu.memory_space<vmem>>, vector<1x128xf32>,
    %c12_89 = arith.constant 12 : index
    %c0_90 = arith.constant 0 : index
    %c0_91 = arith.constant 0 : index
    %117 = vector.load %arg5[%c12_89, %c0_90, %c0_91] : memref<20x128x128xbf16, #tpu.memory_space<vmem>>, vector<1x128x128xbf16>
    %118 = vector.shape_cast %117 : vector<1x128x128xbf16> to vector<128x128xbf16>
    %119 = arith.mulf %118, %3 : vector<128x128xbf16>
    %c16 = arith.constant 16 : index
    %c0_92 = arith.constant 0 : index
    %120 = vector.load %arg13[%c16, %c0_92] : memref<24x128xf32, #tpu.memory_space<vmem>>, vector<1x128xf32>
    %121 = arith.extf %119 : vector<128x128xbf16> to vector<128x128xf32>
    %cst_93 = arith.constant dense<0.000000e+00> : vector<128xf32>
    %122 = vector.multi_reduction <add>, %121, %cst_93 [0] : vector<128x128xf32> to vector<128xf32>
    %123 = vector.shape_cast %122 : vector<128xf32> to vector<1x128xf32>
    %124 = arith.addf %120, %123 : vector<1x128xf32>
    %c16_94 = arith.constant 16 : index
    %c0_95 = arith.constant 0 : index
    %125 = vector.load %arg13[%c16_94, %c0_95] : memref<24x128xf32, #tpu.memory_space<vmem>>, vector<1x128xf32>
    tpu.vector_store %arg13[%c16_94, %c0_95], %124 {strides = array<i32>} : memref<24x128xf32, #tpu.memory_space<vmem>>, vector<1x128xf32>,
    %c13_96 = arith.constant 13 : index
    %c0_97 = arith.constant 0 : index
    %c0_98 = arith.constant 0 : index
    %126 = vector.load %arg5[%c13_96, %c0_97, %c0_98] : memref<20x128x128xbf16, #tpu.memory_space<vmem>>, vector<1x128x128xbf16>
    %127 = vector.shape_cast %126 : vector<1x128x128xbf16> to vector<128x128xbf16>
    %128 = arith.mulf %127, %3 : vector<128x128xbf16>
    %c17 = arith.constant 17 : index
    %c0_99 = arith.constant 0 : index
    %129 = vector.load %arg13[%c17, %c0_99] : memref<24x128xf32, #tpu.memory_space<vmem>>, vector<1x128xf32>
    %130 = arith.extf %128 : vector<128x128xbf16> to vector<128x128xf32>
    %cst_100 = arith.constant dense<0.000000e+00> : vector<128xf32>
    %131 = vector.multi_reduction <add>, %130, %cst_100 [0] : vector<128x128xf32> to vector<128xf32>
    %132 = vector.shape_cast %131 : vector<128xf32> to vector<1x128xf32>
    %133 = arith.addf %129, %132 : vector<1x128xf32>
    %c17_101 = arith.constant 17 : index
    %c0_102 = arith.constant 0 : index
    %134 = vector.load %arg13[%c17_101, %c0_102] : memref<24x128xf32, #tpu.memory_space<vmem>>, vector<1x128xf32>
    tpu.vector_store %arg13[%c17_101, %c0_102], %133 {strides = array<i32>} : memref<24x128xf32, #tpu.memory_space<vmem>>, vector<1x128xf32>,
    %c14_103 = arith.constant 14 : index
    %c0_104 = arith.constant 0 : index
    %c0_105 = arith.constant 0 : index
    %135 = vector.load %arg5[%c14_103, %c0_104, %c0_105] : memref<20x128x128xbf16, #tpu.memory_space<vmem>>, vector<1x128x128xbf16>
    %136 = vector.shape_cast %135 : vector<1x128x128xbf16> to vector<128x128xbf16>
    %137 = arith.mulf %136, %3 : vector<128x128xbf16>
    %c18 = arith.constant 18 : index
    %c0_106 = arith.constant 0 : index
    %138 = vector.load %arg13[%c18, %c0_106] : memref<24x128xf32, #tpu.memory_space<vmem>>, vector<1x128xf32>
    %139 = arith.extf %137 : vector<128x128xbf16> to vector<128x128xf32>
    %cst_107 = arith.constant dense<0.000000e+00> : vector<128xf32>
    %140 = vector.multi_reduction <add>, %139, %cst_107 [0] : vector<128x128xf32> to vector<128xf32>
    %141 = vector.shape_cast %140 : vector<128xf32> to vector<1x128xf32>
    %142 = arith.addf %138, %141 : vector<1x128xf32>
    %c18_108 = arith.constant 18 : index
    %c0_109 = arith.constant 0 : index
    %143 = vector.load %arg13[%c18_108, %c0_109] : memref<24x128xf32, #tpu.memory_space<vmem>>, vector<1x128xf32>
    tpu.vector_store %arg13[%c18_108, %c0_109], %142 {strides = array<i32>} : memref<24x128xf32, #tpu.memory_space<vmem>>, vector<1x128xf32>,
    %c15_110 = arith.constant 15 : index
    %c0_111 = arith.constant 0 : index
    %c0_112 = arith.constant 0 : index
    %144 = vector.load %arg5[%c15_110, %c0_111, %c0_112] : memref<20x128x128xbf16, #tpu.memory_space<vmem>>, vector<1x128x128xbf16>
    %145 = vector.shape_cast %144 : vector<1x128x128xbf16> to vector<128x128xbf16>
    %146 = arith.mulf %145, %3 : vector<128x128xbf16>
    %c19 = arith.constant 19 : index
    %c0_113 = arith.constant 0 : index
    %147 = vector.load %arg13[%c19, %c0_113] : memref<24x128xf32, #tpu.memory_space<vmem>>, vector<1x128xf32>
    %148 = arith.extf %146 : vector<128x128xbf16> to vector<128x128xf32>
    %cst_114 = arith.constant dense<0.000000e+00> : vector<128xf32>
    %149 = vector.multi_reduction <add>, %148, %cst_114 [0] : vector<128x128xf32> to vector<128xf32>
    %150 = vector.shape_cast %149 : vector<128xf32> to vector<1x128xf32>
    %151 = arith.addf %147, %150 : vector<1x128xf32>
    %c19_115 = arith.constant 19 : index
    %c0_116 = arith.constant 0 : index
    %152 = vector.load %arg13[%c19_115, %c0_116] : memref<24x128xf32, #tpu.memory_space<vmem>>, vector<1x128xf32>
    tpu.vector_store %arg13[%c19_115, %c0_116], %151 {strides = array<i32>} : memref<24x128xf32, #tpu.memory_space<vmem>>, vector<1x128xf32>,
    %c16_117 = arith.constant 16 : index
    %c0_118 = arith.constant 0 : index
    %c0_119 = arith.constant 0 : index
    %153 = vector.load %arg5[%c16_117, %c0_118, %c0_119] : memref<20x128x128xbf16, #tpu.memory_space<vmem>>, vector<1x128x128xbf16>
    %154 = vector.shape_cast %153 : vector<1x128x128xbf16> to vector<128x128xbf16>
    %155 = arith.mulf %154, %3 : vector<128x128xbf16>
    %c20 = arith.constant 20 : index
    %c0_120 = arith.constant 0 : index
    %156 = vector.load %arg13[%c20, %c0_120] : memref<24x128xf32, #tpu.memory_space<vmem>>, vector<1x128xf32>
    %157 = arith.extf %155 : vector<128x128xbf16> to vector<128x128xf32>
    %cst_121 = arith.constant dense<0.000000e+00> : vector<128xf32>
    %158 = vector.multi_reduction <add>, %157, %cst_121 [0] : vector<128x128xf32> to vector<128xf32>
    %159 = vector.shape_cast %158 : vector<128xf32> to vector<1x128xf32>
    %160 = arith.addf %156, %159 : vector<1x128xf32>
    %c20_122 = arith.constant 20 : index
    %c0_123 = arith.constant 0 : index
    %161 = vector.load %arg13[%c20_122, %c0_123] : memref<24x128xf32, #tpu.memory_space<vmem>>, vector<1x128xf32>
    tpu.vector_store %arg13[%c20_122, %c0_123], %160 {strides = array<i32>} : memref<24x128xf32, #tpu.memory_space<vmem>>, vector<1x128xf32>,
    %c17_124 = arith.constant 17 : index
    %c0_125 = arith.constant 0 : index
    %c0_126 = arith.constant 0 : index
    %162 = vector.load %arg5[%c17_124, %c0_125, %c0_126] : memref<20x128x128xbf16, #tpu.memory_space<vmem>>, vector<1x128x128xbf16>
    %163 = vector.shape_cast %162 : vector<1x128x128xbf16> to vector<128x128xbf16>
    %164 = arith.mulf %163, %3 : vector<128x128xbf16>
    %c21 = arith.constant 21 : index
    %c0_127 = arith.constant 0 : index
    %165 = vector.load %arg13[%c21, %c0_127] : memref<24x128xf32, #tpu.memory_space<vmem>>, vector<1x128xf32>
    %166 = arith.extf %164 : vector<128x128xbf16> to vector<128x128xf32>
    %cst_128 = arith.constant dense<0.000000e+00> : vector<128xf32>
    %167 = vector.multi_reduction <add>, %166, %cst_128 [0] : vector<128x128xf32> to vector<128xf32>
    %168 = vector.shape_cast %167 : vector<128xf32> to vector<1x128xf32>
    %169 = arith.addf %165, %168 : vector<1x128xf32>
    %c21_129 = arith.constant 21 : index
    %c0_130 = arith.constant 0 : index
    %170 = vector.load %arg13[%c21_129, %c0_130] : memref<24x128xf32, #tpu.memory_space<vmem>>, vector<1x128xf32>
    tpu.vector_store %arg13[%c21_129, %c0_130], %169 {strides = array<i32>} : memref<24x128xf32, #tpu.memory_space<vmem>>, vector<1x128xf32>,
    %c18_131 = arith.constant 18 : index
    %c0_132 = arith.constant 0 : index
    %c0_133 = arith.constant 0 : index
    %171 = vector.load %arg5[%c18_131, %c0_132, %c0_133] : memref<20x128x128xbf16, #tpu.memory_space<vmem>>, vector<1x128x128xbf16>
    %172 = vector.shape_cast %171 : vector<1x128x128xbf16> to vector<128x128xbf16>
    %173 = arith.mulf %172, %3 : vector<128x128xbf16>
    %c22 = arith.constant 22 : index
    %c0_134 = arith.constant 0 : index
    %174 = vector.load %arg13[%c22, %c0_134] : memref<24x128xf32, #tpu.memory_space<vmem>>, vector<1x128xf32>
    %175 = arith.extf %173 : vector<128x128xbf16> to vector<128x128xf32>
    %cst_135 = arith.constant dense<0.000000e+00> : vector<128xf32>
    %176 = vector.multi_reduction <add>, %175, %cst_135 [0] : vector<128x128xf32> to vector<128xf32>
    %177 = vector.shape_cast %176 : vector<128xf32> to vector<1x128xf32>
    %178 = arith.addf %174, %177 : vector<1x128xf32>
    %c22_136 = arith.constant 22 : index
    %c0_137 = arith.constant 0 : index
    %179 = vector.load %arg13[%c22_136, %c0_137] : memref<24x128xf32, #tpu.memory_space<vmem>>, vector<1x128xf32>
    tpu.vector_store %arg13[%c22_136, %c0_137], %178 {strides = array<i32>} : memref<24x128xf32, #tpu.memory_space<vmem>>, vector<1x128xf32>,
    %c19_138 = arith.constant 19 : index
    %c0_139 = arith.constant 0 : index
    %c0_140 = arith.constant 0 : index
    %180 = vector.load %arg5[%c19_138, %c0_139, %c0_140] : memref<20x128x128xbf16, #tpu.memory_space<vmem>>, vector<1x128x128xbf16>
    %181 = vector.shape_cast %180 : vector<1x128x128xbf16> to vector<128x128xbf16>
    %182 = arith.mulf %181, %3 : vector<128x128xbf16>
    %c23 = arith.constant 23 : index
    %c0_141 = arith.constant 0 : index
    %183 = vector.load %arg13[%c23, %c0_141] : memref<24x128xf32, #tpu.memory_space<vmem>>, vector<1x128xf32>
    %184 = arith.extf %182 : vector<128x128xbf16> to vector<128x128xf32>
    %cst_142 = arith.constant dense<0.000000e+00> : vector<128xf32>
    %185 = vector.multi_reduction <add>, %184, %cst_142 [0] : vector<128x128xf32> to vector<128xf32>
    %186 = vector.shape_cast %185 : vector<128xf32> to vector<1x128xf32>
    %187 = arith.addf %183, %186 : vector<1x128xf32>
    %c23_143 = arith.constant 23 : index
    %c0_144 = arith.constant 0 : index
    %188 = vector.load %arg13[%c23_143, %c0_144] : memref<24x128xf32, #tpu.memory_space<vmem>>, vector<1x128xf32>
    tpu.vector_store %arg13[%c23_143, %c0_144], %187 {strides = array<i32>} : memref<24x128xf32, #tpu.memory_space<vmem>>, vector<1x128xf32>,
    %c1_i32 = arith.constant 1 : i32
    %189 = arith.cmpi eq, %arg1, %c1_i32 : i32
    %190 = arith.extui %189 : i1 to i32
    %c0_i32_145 = arith.constant 0 : i32
    %191 = arith.cmpi ne, %190, %c0_i32_145 : i32
    scf.if %191 {
      %c0_146 = arith.constant 0 : index
      %c0_147 = arith.constant 0 : index
      %192 = vector.load %arg6[%c0_146, %c0_147] : memref<1x128xf32, #tpu.memory_space<vmem>>, vector<1x128xf32>
      %c0_148 = arith.constant 0 : index
      %c0_149 = arith.constant 0 : index
      %193 = vector.load %arg7[%c0_148, %c0_149] : memref<32x16xbf16, #tpu.memory_space<vmem>>, vector<32x16xbf16>
      %c0_150 = arith.constant 0 : index
      %c0_151 = arith.constant 0 : index
      %194 = vector.load %arg2[%c0_150, %c0_151] : memref<16x128xbf16, #tpu.memory_space<vmem>>, vector<16x128xbf16>
      %cst_152 = arith.constant dense<0.000000e+00> : vector<32x128xf32>
      %195 = tpu.matmul %193, %194, %cst_152 {dimension_numbers = #tpu.dot_dimension_numbers<[1], [0], [0], [1], [0, 0, 1, 1], [], []>} : vector<32x16xbf16>, vector<16x128xbf16>, vector<32x128xf32> -> vector<32x128xf32>
      %c0_153 = arith.constant 0 : index
      %c0_154 = arith.constant 0 : index
      %196 = vector.load %arg8[%c0_153, %c0_154] : memref<32x24xf32, #tpu.memory_space<vmem>>, vector<32x24xf32>
      %c0_155 = arith.constant 0 : index
      %c0_156 = arith.constant 0 : index
      %197 = vector.load %arg13[%c0_155, %c0_156] : memref<24x128xf32, #tpu.memory_space<vmem>>, vector<24x128xf32>
      %198 = vector.broadcast %192 : vector<1x128xf32> to vector<24x128xf32>
      %199 = arith.mulf %197, %198 : vector<24x128xf32>
      %cst_157 = arith.constant dense<0.000000e+00> : vector<32x128xf32>
      %200 = tpu.matmul %196, %199, %cst_157 {dimension_numbers = #tpu.dot_dimension_numbers<[1], [0], [0], [1], [0, 0, 1, 1], [], []>} : vector<32x24xf32>, vector<24x128xf32>, vector<32x128xf32> -> vector<32x128xf32>
      %201 = arith.addf %195, %200 : vector<32x128xf32>
      %c0_158 = arith.constant 0 : index
      %c0_159 = arith.constant 0 : index
      %202 = vector.load %arg9[%c0_158, %c0_159] : memref<32x1xf32, #tpu.memory_space<vmem>>, vector<32x1xf32>
      %203 = vector.broadcast %202 : vector<32x1xf32> to vector<32x128xf32>
      %204 = arith.addf %201, %203 : vector<32x128xf32>
      %cst_160 = arith.constant dense<0.000000e+00> : vector<128xf32>
      %205 = vector.multi_reduction <add>, %204, %cst_160 [0] : vector<32x128xf32> to vector<128xf32>
      %206 = vector.shape_cast %205 : vector<128xf32> to vector<1x128xf32>
      %207 = arith.mulf %204, %204 : vector<32x128xf32>
      %cst_161 = arith.constant dense<0.000000e+00> : vector<128xf32>
      %208 = vector.multi_reduction <add>, %207, %cst_161 [0] : vector<32x128xf32> to vector<128xf32>
      %209 = vector.shape_cast %208 : vector<128xf32> to vector<1x128xf32>
      %cst_162 = arith.constant 3.125000e-02 : f32
      %210 = vector.broadcast %cst_162 : f32 to vector<1x128xf32>
      %211 = arith.mulf %206, %210 : vector<1x128xf32>
      %cst_163 = arith.constant 3.125000e-02 : f32
      %212 = vector.broadcast %cst_163 : f32 to vector<1x128xf32>
      %213 = arith.mulf %209, %212 : vector<1x128xf32>
      %214 = arith.mulf %211, %211 : vector<1x128xf32>
      %215 = arith.subf %213, %214 : vector<1x128xf32>
      %216 = vector.broadcast %211 : vector<1x128xf32> to vector<32x128xf32>
      %217 = arith.subf %204, %216 : vector<32x128xf32>
      %cst_164 = arith.constant 9.99999974E-6 : f32
      %218 = vector.broadcast %cst_164 : f32 to vector<1x128xf32>
      %219 = arith.addf %215, %218 : vector<1x128xf32>
      %220 = math.rsqrt %219 : vector<1x128xf32>
      %221 = vector.broadcast %220 : vector<1x128xf32> to vector<32x128xf32>
      %222 = arith.mulf %217, %221 : vector<32x128xf32>
      %c0_165 = arith.constant 0 : index
      %c0_166 = arith.constant 0 : index
      %223 = vector.load %arg10[%c0_165, %c0_166] : memref<32x1xf32, #tpu.memory_space<vmem>>, vector<32x1xf32>
      %224 = vector.broadcast %223 : vector<32x1xf32> to vector<32x128xf32>
      %225 = arith.mulf %222, %224 : vector<32x128xf32>
      %c0_167 = arith.constant 0 : index
      %c0_168 = arith.constant 0 : index
      %226 = vector.load %arg11[%c0_167, %c0_168] : memref<32x1xf32, #tpu.memory_space<vmem>>, vector<32x1xf32>
      %227 = vector.broadcast %226 : vector<32x1xf32> to vector<32x128xf32>
      %228 = arith.addf %225, %227 : vector<32x128xf32>
      %cst_169 = arith.constant 0.000000e+00 : f32
      %229 = vector.broadcast %cst_169 : f32 to vector<32x128xf32>
      %230 = arith.maximumf %228, %229 : vector<32x128xf32>
      %c0_170 = arith.constant 0 : index
      %c0_171 = arith.constant 0 : index
      %231 = vector.load %arg12[%c0_170, %c0_171] : memref<32x128xf32, #tpu.memory_space<vmem>>, vector<32x128xf32>
      tpu.vector_store %arg12[%c0_170, %c0_171], %230 {strides = array<i32>} : memref<32x128xf32, #tpu.memory_space<vmem>>, vector<32x128xf32>,
    } else {
    }
    return
  }
  func.func @transform_0(%arg0: i32, %arg1: i32) -> (i32, i32) {
    %c0_i32 = arith.constant 0 : i32
    %c0_i32_0 = arith.constant 0 : i32
    return %c0_i32, %arg0 : i32, i32
  }
  func.func @transform_1(%arg0: i32, %arg1: i32) -> (i32, i32) {
    %c0_i32 = arith.constant 0 : i32
    return %arg1, %arg0 : i32, i32
  }
  func.func @transform_2(%arg0: i32, %arg1: i32) -> (i32, i32) {
    %c0_i32 = arith.constant 0 : i32
    %c0_i32_0 = arith.constant 0 : i32
    return %c0_i32, %arg1 : i32, i32
  }
  func.func @transform_3(%arg0: i32, %arg1: i32) -> (i32, i32, i32) {
    %c0_i32 = arith.constant 0 : i32
    %c0_i32_0 = arith.constant 0 : i32
    return %c0_i32, %arg1, %arg0 : i32, i32, i32
  }
  func.func @transform_4(%arg0: i32, %arg1: i32) -> (i32, i32) {
    %c0_i32 = arith.constant 0 : i32
    %c0_i32_0 = arith.constant 0 : i32
    return %c0_i32, %arg0 : i32, i32
  }
  func.func @transform_5(%arg0: i32, %arg1: i32) -> (i32, i32) {
    %c0_i32 = arith.constant 0 : i32
    %c0_i32_0 = arith.constant 0 : i32
    %c0_i32_1 = arith.constant 0 : i32
    return %c0_i32, %c0_i32_0 : i32, i32
  }
  func.func @transform_6(%arg0: i32, %arg1: i32) -> (i32, i32) {
    %c0_i32 = arith.constant 0 : i32
    %c0_i32_0 = arith.constant 0 : i32
    %c0_i32_1 = arith.constant 0 : i32
    return %c0_i32, %c0_i32_0 : i32, i32
  }
  func.func @transform_7(%arg0: i32, %arg1: i32) -> (i32, i32) {
    %c0_i32 = arith.constant 0 : i32
    %c0_i32_0 = arith.constant 0 : i32
    %c0_i32_1 = arith.constant 0 : i32
    return %c0_i32, %c0_i32_0 : i32, i32
  }
  func.func @transform_8(%arg0: i32, %arg1: i32) -> (i32, i32) {
    %c0_i32 = arith.constant 0 : i32
    %c0_i32_0 = arith.constant 0 : i32
    %c0_i32_1 = arith.constant 0 : i32
    return %c0_i32, %c0_i32_0 : i32, i32
  }
  func.func @transform_9(%arg0: i32, %arg1: i32) -> (i32, i32) {
    %c0_i32 = arith.constant 0 : i32
    %c0_i32_0 = arith.constant 0 : i32
    %c0_i32_1 = arith.constant 0 : i32
    return %c0_i32, %c0_i32_0 : i32, i32
  }
  func.func @transform_10(%arg0: i32, %arg1: i32) -> (i32, i32) {
    %c0_i32 = arith.constant 0 : i32
    %c0_i32_0 = arith.constant 0 : i32
    return %c0_i32, %arg0 : i32, i32
  }
}

</mosaic_0001>

<llo_original>
// kernel: tpu_custom_call.1
$region0: #{tpu_custom_call.1}
  #allocation0 [shape = 'u32[]', space=smem, size = 0x4, offset = 0x4, fixed_abs, tag = 'smem constant byte address 0x4 - core index']
  #allocation1 [shape = 'u32[144,128]{1,0:T(1,128)}', space=vmem, size = 0x12000, scoped, tag = 'internal scratch']
  #allocation2 [shape = 'f32[24,128]{1,0:T(8,128)}', space=vmem, size = 0x3000, scoped, tag = 'scratch operand']
  #allocation13 [shape = 's32[]', space=sflag, size = 0x4, offset = 0, fixed_abs, tag = 'sflag constant byte address 0x0 - dummy sync flag']
  %s0 = inlined_call_operand.hbm [shape: bf16[16,256], index: 0, kind: input, shape index: {}]
  %s1 = inlined_call_operand.hbm [shape: bf16[256,256], index: 1, kind: input, shape index: {}]
  %s2 = inlined_call_operand.hbm [shape: bf16[4,256], index: 2, kind: input, shape index: {}]
  %s3 = inlined_call_operand.hbm [shape: bf16[20,256,256], index: 3, kind: input, shape index: {}]
  %s4 = inlined_call_operand.hbm [shape: f32[1,256], index: 4, kind: input, shape index: {}]
  %s5 = inlined_call_operand.vmem [shape: bf16[32,16], index: 5, kind: input, shape index: {}]
  %s6 = inlined_call_operand.vmem [shape: f32[32,24], index: 6, kind: input, shape index: {}]
  %s7 = inlined_call_operand.vmem [shape: f32[32,1], index: 7, kind: input, shape index: {}]
  %s8 = inlined_call_operand.vmem [shape: f32[32,1], index: 8, kind: input, shape index: {}]
  %s9 = inlined_call_operand.vmem [shape: f32[32,1], index: 9, kind: input, shape index: {}]
  %s10 = inlined_call_operand.hbm [shape: f32[32,256], index: 10, kind: output, shape index: {}]
  %s11 = sld [smem:[#allocation0]]
  $region101: #{tpu_custom_call.1} parent=0
    _
  %s13 = ssub.s32 1, %s11
  %s14 = scalar_select 0, %s13, %s11
  $region1: #{tpu_custom_call.1} parent=0
    #allocation3 [shape = 'u8[8192]{0}', space=vmem, size = 0x2000, scoped, tag = 'input window, operand 0']
    #allocation4 [shape = 's32[2]{0}', space=sflag, size = 0x8, scoped, tag = 'scoped memory for tpu_custom_call.1']
    #allocation5 [shape = 's32[2]{0}', space=sflag, size = 0x8, scoped, tag = 'scoped memory for tpu_custom_call.1']
    #allocation6 [shape = 'u8[65536]{0}', space=vmem, size = 0x10000, scoped, tag = 'input window, operand 1']
    #allocation7 [shape = 's32[2]{0}', space=sflag, size = 0x8, scoped, tag = 'scoped memory for tpu_custom_call.1']
    #allocation8 [shape = 'u8[2048]{0}', space=vmem, size = 0x800, scoped, tag = 'input window, operand 2']
    #allocation9 [shape = 'u8[1310720]{0}', space=vmem, size = 0x140000, scoped, tag = 'input window, operand 3']
    #allocation10 [shape = 's32[2]{0}', space=sflag, size = 0x8, scoped, tag = 'scoped memory for tpu_custom_call.1']
    #allocation11 [shape = 'u8[1024]{0}', space=vmem, size = 0x400, scoped, tag = 'input window, operand 4']
    #allocation12 [shape = 'u8[32768]{0}', space=vmem, size = 0x8000, scoped, tag = 'output window, operand 0']
    %15 = vsyncpa [#allocation4], 0
    %s16 = scalar_lea.sflag [#allocation4], 1
    %17 = vsyncpa %s16, 0
    %18 = vsyncpa [#allocation7], 0
    %s19 = scalar_lea.sflag [#allocation7], 1
    %20 = vsyncpa %s19, 0
    %21 = vsyncpa [#allocation10], 0
    %s22 = scalar_lea.sflag [#allocation10], 1
    %23 = vsyncpa %s22, 0
    %24 = vsyncpa [#allocation5], 0
    %s25 = scalar_lea.sflag [#allocation5], 1
    %26 = vsyncpa %s25, 0
    loop: start=0, step=1, limit=6
    $region2: #{tpu_custom_call.1} parent=1 // loop_pre_header
      _
    $region3: #{tpu_custom_call.1} parent=1 // loop_header
      %s28 = sphi 0, %s32
      %p29 = scmp.ge.s32.totalorder %s28, 6
      %s35 = sphi 0, %s47
      %s36 = sphi 0, %s43
      %s37 = sphi 0, %s35
      %s38 = sphi 0, %s36
      %s39 = sphi 0, %s37
      %s40 = sphi 0, %s38
      %s50 = sphi 0, %s52
      %s53 = sphi 0, %s50
      %s54 = sphi 0, %s53
      %s70 = sphi 0, %s54
      %s78 = sphi 0, %s80
      %s81 = sphi 0, %s78
      %s82 = sphi 0, %s81
      %s98 = sphi 0, %s82
      %s104 = sphi 0, %s106
      %s107 = sphi 0, %s104
      %s108 = sphi 0, %s107
      %s124 = sphi 0, %s108
      %s132 = sphi 0, %s134
      %s135 = sphi 0, %s132
      %s136 = sphi 0, %s135
      %s152 = sphi 0, %s136
      %s158 = sphi 0, %s160
      %s161 = sphi 0, %s158
      %s162 = sphi 0, %s161
      %s178 = sphi 0, %s162
      %s182 = sphi 0, %s182
      %s184 = sphi 0, %s182
      %s185 = sphi 0, %s184
      %s199 = sphi 0, %s185
      %s203 = sphi 0, %s203
      %s205 = sphi 0, %s203
      %s206 = sphi 0, %s205
      %s220 = sphi 0, %s206
      %s224 = sphi 0, %s224
      %s226 = sphi 0, %s224
      %s227 = sphi 0, %s226
      %s241 = sphi 0, %s227
      %s245 = sphi 0, %s245
      %s247 = sphi 0, %s245
      %s248 = sphi 0, %s247
      %s262 = sphi 0, %s248
      %s266 = sphi 0, %s266
      %s268 = sphi 0, %s266
      %s269 = sphi 0, %s268
      %s283 = sphi 0, %s269
      %s289 = sphi 0, %s291
      %s292 = sphi 0, %s289
      %s293 = sphi 0, %s292
      %s309 = sphi 0, %s293
    $region4: #{tpu_custom_call.1} parent=1 // loop_header_branch
      %31 = sbr.rel (%p29) target = $region8
    $region5: #{tpu_custom_call.1} parent=1 // loop_body
      %s33 = ssub.s32 %s28, 1
      %s34 = ssub.s32 %s28, 2
      %s41 = sadd.s32 1, %s36
      %p42 = scmp.ge.s32.totalorder %s41, 2
      %s43 = scalar_select %p42, 0, %s41
      %s44 = sadd.s32 1, %s35
      %s45 = scalar_select %p42, %s44, %s35
      %p46 = scmp.ge.s32.totalorder %s45, 2
      %s47 = scalar_select %p46, 0, %s45
      %s48 = ssub.s32 %s35, %s47
      %p49 = scmp.eq.s32.totalorder %s48, 0
      %s51 = sadd.s32 %s50, 1
      %s52 = scalar_select %p49, %s50, %s51
      %p55 = pneg %p49
      %p56 = scmp.eq.s32.totalorder %s28, 3
      %p57 = por %p55, %p56
      %p58 = scmp.ne.s32.totalorder %s50, %s53
      %p59 = scmp.eq.s32.totalorder %s28, 0
      %p60 = por %p58, %p59
      %p61 = scmp.ne.s32.totalorder %s50, %s53
      %p62 = scmp.eq.s32.totalorder %s33, 3
      %p63 = por %p61, %p62
      %p64 = scmp.ne.s32.totalorder %s53, %s54
      %p65 = scmp.eq.s32.totalorder %s33, 0
      %p66 = por %p64, %p65
      %p67 = scmp.ne.s32.totalorder %s53, %s54
      %p68 = scmp.eq.s32.totalorder %s34, 3
      %p69 = por %p67, %p68
      %p71 = scmp.ne.s32.totalorder %s54, %s70
      %p72 = scmp.eq.s32.totalorder %s34, 0
      %p73 = por %p71, %p72
      %s74 = ssub.s32 %s36, %s43
      %s75 = ssub.s32 %s35, %s47
      %s76 = sor.u32 %s74, %s75
      %p77 = scmp.eq.s32.totalorder %s76, 0
      %s79 = sadd.s32 %s78, 1
      %s80 = scalar_select %p77, %s78, %s79
      %p83 = pneg %p77
      %p84 = scmp.eq.s32.totalorder %s28, 3
      %p85 = por %p83, %p84
      %p86 = scmp.ne.s32.totalorder %s78, %s81
      %p87 = scmp.eq.s32.totalorder %s28, 0
      %p88 = por %p86, %p87
      %p89 = scmp.ne.s32.totalorder %s78, %s81
      %p90 = scmp.eq.s32.totalorder %s33, 3
      %p91 = por %p89, %p90
      %p92 = scmp.ne.s32.totalorder %s81, %s82
      %p93 = scmp.eq.s32.totalorder %s33, 0
      %p94 = por %p92, %p93
      %p95 = scmp.ne.s32.totalorder %s81, %s82
      %p96 = scmp.eq.s32.totalorder %s34, 3
      %p97 = por %p95, %p96
      %p99 = scmp.ne.s32.totalorder %s82, %s98
      %p100 = scmp.eq.s32.totalorder %s34, 0
      %p101 = por %p99, %p100
      %s102 = ssub.s32 %s36, %s43
      %p103 = scmp.eq.s32.totalorder %s102, 0
      %s105 = sadd.s32 %s104, 1
      %s106 = scalar_select %p103, %s104, %s105
      %p109 = pneg %p103
      %p110 = scmp.eq.s32.totalorder %s28, 3
      %p111 = por %p109, %p110
      %p112 = scmp.ne.s32.totalorder %s104, %s107
      %p113 = scmp.eq.s32.totalorder %s28, 0
      %p114 = por %p112, %p113
      %p115 = scmp.ne.s32.totalorder %s104, %s107
      %p116 = scmp.eq.s32.totalorder %s33, 3
      %p117 = por %p115, %p116
      %p118 = scmp.ne.s32.totalorder %s107, %s108
      %p119 = scmp.eq.s32.totalorder %s33, 0
      %p120 = por %p118, %p119
      %p121 = scmp.ne.s32.totalorder %s107, %s108
      %p122 = scmp.eq.s32.totalorder %s34, 3
      %p123 = por %p121, %p122
      %p125 = scmp.ne.s32.totalorder %s108, %s124
      %p126 = scmp.eq.s32.totalorder %s34, 0
      %p127 = por %p125, %p126
      %s128 = ssub.s32 %s36, %s43
      %s129 = ssub.s32 %s35, %s47
      %s130 = sor.u32 %s128, %s129
      %p131 = scmp.eq.s32.totalorder %s130, 0
      %s133 = sadd.s32 %s132, 1
      %s134 = scalar_select %p131, %s132, %s133
      %p137 = pneg %p131
      %p138 = scmp.eq.s32.totalorder %s28, 3
      %p139 = por %p137, %p138
      %p140 = scmp.ne.s32.totalorder %s132, %s135
      %p141 = scmp.eq.s32.totalorder %s28, 0
      %p142 = por %p140, %p141
      %p143 = scmp.ne.s32.totalorder %s132, %s135
      %p144 = scmp.eq.s32.totalorder %s33, 3
      %p145 = por %p143, %p144
      %p146 = scmp.ne.s32.totalorder %s135, %s136
      %p147 = scmp.eq.s32.totalorder %s33, 0
      %p148 = por %p146, %p147
      %p149 = scmp.ne.s32.totalorder %s135, %s136
      %p150 = scmp.eq.s32.totalorder %s34, 3
      %p151 = por %p149, %p150
      %p153 = scmp.ne.s32.totalorder %s136, %s152
      %p154 = scmp.eq.s32.totalorder %s34, 0
      %p155 = por %p153, %p154
      %s156 = ssub.s32 %s35, %s47
      %p157 = scmp.eq.s32.totalorder %s156, 0
      %s159 = sadd.s32 %s158, 1
      %s160 = scalar_select %p157, %s158, %s159
      %p163 = pneg %p157
      %p164 = scmp.eq.s32.totalorder %s28, 3
      %p165 = por %p163, %p164
      %p166 = scmp.ne.s32.totalorder %s158, %s161
      %p167 = scmp.eq.s32.totalorder %s28, 0
      %p168 = por %p166, %p167
      %p169 = scmp.ne.s32.totalorder %s158, %s161
      %p170 = scmp.eq.s32.totalorder %s33, 3
      %p171 = por %p169, %p170
      %p172 = scmp.ne.s32.totalorder %s161, %s162
      %p173 = scmp.eq.s32.totalorder %s33, 0
      %p174 = por %p172, %p173
      %p175 = scmp.ne.s32.totalorder %s161, %s162
      %p176 = scmp.eq.s32.totalorder %s34, 3
      %p177 = por %p175, %p176
      %p179 = scmp.ne.s32.totalorder %s162, %s178
      %p180 = scmp.eq.s32.totalorder %s34, 0
      %p181 = por %p179, %p180
      %s183 = sadd.s32 %s182, 1
      %p186 = scmp.eq.s32.totalorder %s28, 3
      %p187 = scmp.ne.s32.totalorder %s182, %s184
      %p188 = scmp.eq.s32.totalorder %s28, 0
      %p189 = por %p187, %p188
      %p190 = scmp.ne.s32.totalorder %s182, %s184
      %p191 = scmp.eq.s32.totalorder %s33, 3
      %p192 = por %p190, %p191
      %p193 = scmp.ne.s32.totalorder %s184, %s185
      %p194 = scmp.eq.s32.totalorder %s33, 0
      %p195 = por %p193, %p194
      %p196 = scmp.ne.s32.totalorder %s184, %s185
      %p197 = scmp.eq.s32.totalorder %s34, 3
      %p198 = por %p196, %p197
      %p200 = scmp.ne.s32.totalorder %s185, %s199
      %p201 = scmp.eq.s32.totalorder %s34, 0
      %p202 = por %p200, %p201
      %s204 = sadd.s32 %s203, 1
      %p207 = scmp.eq.s32.totalorder %s28, 3
      %p208 = scmp.ne.s32.totalorder %s203, %s205
      %p209 = scmp.eq.s32.totalorder %s28, 0
      %p210 = por %p208, %p209
      %p211 = scmp.ne.s32.totalorder %s203, %s205
      %p212 = scmp.eq.s32.totalorder %s33, 3
      %p213 = por %p211, %p212
      %p214 = scmp.ne.s32.totalorder %s205, %s206
      %p215 = scmp.eq.s32.totalorder %s33, 0
      %p216 = por %p214, %p215
      %p217 = scmp.ne.s32.totalorder %s205, %s206
      %p218 = scmp.eq.s32.totalorder %s34, 3
      %p219 = por %p217, %p218
      %p221 = scmp.ne.s32.totalorder %s206, %s220
      %p222 = scmp.eq.s32.totalorder %s34, 0
      %p223 = por %p221, %p222
      %s225 = sadd.s32 %s224, 1
      %p228 = scmp.eq.s32.totalorder %s28, 3
      %p229 = scmp.ne.s32.totalorder %s224, %s226
      %p230 = scmp.eq.s32.totalorder %s28, 0
      %p231 = por %p229, %p230
      %p232 = scmp.ne.s32.totalorder %s224, %s226
      %p233 = scmp.eq.s32.totalorder %s33, 3
      %p234 = por %p232, %p233
      %p235 = scmp.ne.s32.totalorder %s226, %s227
      %p236 = scmp.eq.s32.totalorder %s33, 0
      %p237 = por %p235, %p236
      %p238 = scmp.ne.s32.totalorder %s226, %s227
      %p239 = scmp.eq.s32.totalorder %s34, 3
      %p240 = por %p238, %p239
      %p242 = scmp.ne.s32.totalorder %s227, %s241
      %p243 = scmp.eq.s32.totalorder %s34, 0
      %p244 = por %p242, %p243
      %s246 = sadd.s32 %s245, 1
      %p249 = scmp.eq.s32.totalorder %s28, 3
      %p250 = scmp.ne.s32.totalorder %s245, %s247
      %p251 = scmp.eq.s32.totalorder %s28, 0
      %p252 = por %p250, %p251
      %p253 = scmp.ne.s32.totalorder %s245, %s247
      %p254 = scmp.eq.s32.totalorder %s33, 3
      %p255 = por %p253, %p254
      %p256 = scmp.ne.s32.totalorder %s247, %s248
      %p257 = scmp.eq.s32.totalorder %s33, 0
      %p258 = por %p256, %p257
      %p259 = scmp.ne.s32.totalorder %s247, %s248
      %p260 = scmp.eq.s32.totalorder %s34, 3
      %p261 = por %p259, %p260
      %p263 = scmp.ne.s32.totalorder %s248, %s262
      %p264 = scmp.eq.s32.totalorder %s34, 0
      %p265 = por %p263, %p264
      %s267 = sadd.s32 %s266, 1
      %p270 = scmp.eq.s32.totalorder %s28, 3
      %p271 = scmp.ne.s32.totalorder %s266, %s268
      %p272 = scmp.eq.s32.totalorder %s28, 0
      %p273 = por %p271, %p272
      %p274 = scmp.ne.s32.totalorder %s266, %s268
      %p275 = scmp.eq.s32.totalorder %s33, 3
      %p276 = por %p274, %p275
      %p277 = scmp.ne.s32.totalorder %s268, %s269
      %p278 = scmp.eq.s32.totalorder %s33, 0
      %p279 = por %p277, %p278
      %p280 = scmp.ne.s32.totalorder %s268, %s269
      %p281 = scmp.eq.s32.totalorder %s34, 3
      %p282 = por %p280, %p281
      %p284 = scmp.ne.s32.totalorder %s269, %s283
      %p285 = scmp.eq.s32.totalorder %s34, 0
      %p286 = por %p284, %p285
      %s287 = ssub.s32 %s35, %s47
      %p288 = scmp.eq.s32.totalorder %s287, 0
      %s290 = sadd.s32 %s289, 1
      %s291 = scalar_select %p288, %s289, %s290
      %p294 = pneg %p288
      %p295 = scmp.eq.s32.totalorder %s28, 3
      %p296 = por %p294, %p295
      %p297 = scmp.ne.s32.totalorder %s289, %s292
      %p298 = scmp.eq.s32.totalorder %s28, 0
      %p299 = por %p297, %p298
      %p300 = scmp.ne.s32.totalorder %s289, %s292
      %p301 = scmp.eq.s32.totalorder %s33, 3
      %p302 = por %p300, %p301
      %p303 = scmp.ne.s32.totalorder %s292, %s293
      %p304 = scmp.eq.s32.totalorder %s33, 0
      %p305 = por %p303, %p304
      %p306 = scmp.ne.s32.totalorder %s292, %s293
      %p307 = scmp.eq.s32.totalorder %s34, 3
      %p308 = por %p306, %p307
      %p310 = scmp.ne.s32.totalorder %s293, %s309
      %p311 = scmp.eq.s32.totalorder %s34, 0
      %p312 = por %p310, %p311
      %p313 = scmp.le.s32.totalorder 1, %s28
      %p314 = scmp.lt.s32.totalorder %s28, 5
      %p315 = pnand %p313, %p314
      %p316 = pneg %p315
      // Predicated region
      $region9: #{tpu_custom_call.1} parent=5 // pred_check
        _
      $region10: #{tpu_custom_call.1} parent=5 // pred_check_branch
        %318 = sbr.rel (%p315) target = $region12
      $region11: #{tpu_custom_call.1} parent=5 // pred_region
        %s319 = ssub.s32 %s28, 1
        // Predicated region
        $region13: #{tpu_custom_call.1} parent=11 // pred_check
          %p320 = pneg %p195
        $region14: #{tpu_custom_call.1} parent=11 // pred_check_branch
          %322 = sbr.rel (%p320) target = $region16
        $region15: #{tpu_custom_call.1} parent=11 // pred_region
          _
        $region16: #{tpu_custom_call.1} parent=11 // pred_fallthru
          _
        // Predicated region
        $region17: #{tpu_custom_call.1} parent=11 // pred_check
          %p323 = pneg %p216
        $region18: #{tpu_custom_call.1} parent=11 // pred_check_branch
          %325 = sbr.rel (%p323) target = $region20
        $region19: #{tpu_custom_call.1} parent=11 // pred_region
          _
        $region20: #{tpu_custom_call.1} parent=11 // pred_fallthru
          _
        // Predicated region
        $region21: #{tpu_custom_call.1} parent=11 // pred_check
          %p326 = pneg %p237
        $region22: #{tpu_custom_call.1} parent=11 // pred_check_branch
          %328 = sbr.rel (%p326) target = $region24
        $region23: #{tpu_custom_call.1} parent=11 // pred_region
          _
        $region24: #{tpu_custom_call.1} parent=11 // pred_fallthru
          _
        // Predicated region
        $region25: #{tpu_custom_call.1} parent=11 // pred_check
          %p329 = pneg %p258
        $region26: #{tpu_custom_call.1} parent=11 // pred_check_branch
          %331 = sbr.rel (%p329) target = $region28
        $region27: #{tpu_custom_call.1} parent=11 // pred_region
          _
        $region28: #{tpu_custom_call.1} parent=11 // pred_fallthru
          _
        // Predicated region
        $region29: #{tpu_custom_call.1} parent=11 // pred_check
          %p332 = pneg %p279
        $region30: #{tpu_custom_call.1} parent=11 // pred_check_branch
          %334 = sbr.rel (%p332) target = $region32
        $region31: #{tpu_custom_call.1} parent=11 // pred_region
          _
        $region32: #{tpu_custom_call.1} parent=11 // pred_fallthru
          _
      $region12: #{tpu_custom_call.1} parent=5 // pred_fallthru
        _
      %p335 = scmp.lt.s32.totalorder %s28, 4
      // Predicated region
      $region33: #{tpu_custom_call.1} parent=5 // pred_check
        %p336 = pneg %p335
      $region34: #{tpu_custom_call.1} parent=5 // pred_check_branch
        %338 = sbr.rel (%p336) target = $region36
      $region35: #{tpu_custom_call.1} parent=5 // pred_region
        // Predicated region
        $region37: #{tpu_custom_call.1} parent=35 // pred_check
          %p339 = pneg %p60
        $region38: #{tpu_custom_call.1} parent=35 // pred_check_branch
          %341 = sbr.rel (%p339) target = $region40
        $region39: #{tpu_custom_call.1} parent=35 // pred_region
          %s342 = sand.u32 %s50, 1
          %s343 = scalar_lea.sflag [#allocation4], %s342
          %s344 = sand.u32 %s50, 1
          %s345 = smul.addr %s344, 8
          %s346 = scalar_lea.vmem [#allocation3], %s345
          %s348 = ssub.s32 128, 128
          %349 = vsyncadd %s343, %s348
          %s350 = smul.addr %s35, 64
          %s351 = scalar_lea.hbm %s0, %s350
          %s352 = sshll.u32 %s346, 4
          %s353 = int_to_ptr.vmem [resolvable:$true] %s352
          %358 = dma.hbm_to_vmem [thread:$0]  %s351, 128, %s353, %s343, 128, 64, 4
        $region40: #{tpu_custom_call.1} parent=35 // pred_fallthru
          _
        // Predicated region
        $region41: #{tpu_custom_call.1} parent=35 // pred_check
          %p359 = pneg %p88
        $region42: #{tpu_custom_call.1} parent=35 // pred_check_branch
          %361 = sbr.rel (%p359) target = $region44
        $region43: #{tpu_custom_call.1} parent=35 // pred_region
          %s362 = sand.u32 %s28, 1
          %s363 = scalar_lea.sflag [#allocation7], %s362
          %s364 = sand.u32 %s78, 1
          %s365 = smul.addr %s364, 64
          %s366 = scalar_lea.vmem [#allocation6], %s365
          %s367 = smul.u32 16, %s36
          %s369 = ssub.s32 1024, 1024
          %370 = vsyncadd %s363, %s369
          %s371 = smul.addr %s367, 2
          %s372 = sadd.s32 %s35, %s371
          %s373 = smul.addr %s372, 64
          %s374 = scalar_lea.hbm %s1, %s373
          %s375 = sshll.u32 %s366, 4
          %s376 = int_to_ptr.vmem [resolvable:$true] %s375
          %381 = dma.hbm_to_vmem [thread:$0]  %s374, 1024, %s376, %s363, 128, 64, 4
        $region44: #{tpu_custom_call.1} parent=35 // pred_fallthru
          _
        // Predicated region
        $region45: #{tpu_custom_call.1} parent=35 // pred_check
          %p382 = pneg %p114
        $region46: #{tpu_custom_call.1} parent=35 // pred_check_branch
          %384 = sbr.rel (%p382) target = $region48
        $region47: #{tpu_custom_call.1} parent=35 // pred_region
          %s385 = sand.u32 %s28, 1
          %s386 = scalar_lea.sflag [#allocation7], %s385
          %s387 = sand.u32 %s104, 1
          %s388 = smul.addr %s387, 2
          %s389 = scalar_lea.vmem [#allocation8], %s388
          %s391 = ssub.s32 32, 32
          %392 = vsyncadd %s386, %s391
          %s393 = smul.addr %s36, 32
          %s394 = scalar_lea.hbm %s2, %s393
          %s396 = sshll.u32 %s389, 4
          %s397 = int_to_ptr.vmem [resolvable:$true] %s396
          %399 = dma.hbm_to_vmem [thread:$0]  %s394, 32, %s397, %s386
        $region48: #{tpu_custom_call.1} parent=35 // pred_fallthru
          _
        // Predicated region
        $region49: #{tpu_custom_call.1} parent=35 // pred_check
          %p400 = pneg %p142
        $region50: #{tpu_custom_call.1} parent=35 // pred_check_branch
          %402 = sbr.rel (%p400) target = $region52
        $region51: #{tpu_custom_call.1} parent=35 // pred_region
          #allocation14 [shape = 'u32[6]{0}', space=smem, size = 0x18, scoped, tag = 'DMA stride descriptor']
          %s403 = sand.u32 %s28, 1
          %s404 = scalar_lea.sflag [#allocation10], %s403
          %s405 = sand.u32 %s132, 1
          %s406 = smul.addr %s405, 1280
          %s407 = scalar_lea.vmem [#allocation9], %s406
          %s408 = smul.u32 16, %s36
          %s410 = ssub.s32 20480, 20480
          %411 = vsyncadd %s404, %s410
          %s412 = smul.addr %s408, 2
          %s413 = sadd.s32 %s35, %s412
          %s414 = smul.addr %s413, 64
          %s415 = scalar_lea.hbm %s3, %s414
          %s417 = sshll.u32 1, 14
          %s418 = sxor.u32 4294967295, %s417
          %s420 = sld [smem:[#allocation0]]
          %s421 = sadd.s32 2, %s420
          %s423 = sshll.u32 7, 26
          %s424 = sxor.u32 4294967295, %s423
          %s425 = sand.u32 0, %s424
          %s426 = sshll.u32 %s421, 26
          %s427 = sor.u32 %s425, %s426
          %s428 = sshll.u32 %s407, 4
          %s429 = int_to_ptr.vmem [resolvable:$true] %s428
          %435 = sst [smem:[#allocation14]] 4096
          %s436 = scalar_lea.smem [#allocation14], 1
          %437 = sst [smem:[%s436]] 1024
          %s438 = scalar_lea.smem [#allocation14], 2
          %439 = sst [smem:[%s438]] 16
          %s440 = scalar_lea.smem [#allocation14], 3
          %441 = sst [smem:[%s440]] 128
          %s442 = scalar_lea.smem [#allocation14], 4
          %443 = sst [smem:[%s442]] 64
          %s444 = scalar_lea.smem [#allocation14], 5
          %445 = sst [smem:[%s444]] 4
          %447 = dma.general %s415, 20480, %s429, %s404, [#allocation13], [#allocation14], %s427, 0
        $region52: #{tpu_custom_call.1} parent=35 // pred_fallthru
          _
        // Predicated region
        $region53: #{tpu_custom_call.1} parent=35 // pred_check
          %p448 = pneg %p168
        $region54: #{tpu_custom_call.1} parent=35 // pred_check_branch
          %450 = sbr.rel (%p448) target = $region56
        $region55: #{tpu_custom_call.1} parent=35 // pred_region
          %s451 = sand.u32 %s28, 1
          %s452 = scalar_lea.sflag [#allocation10], %s451
          %s453 = sand.u32 %s158, 1
          %s454 = scalar_lea.vmem [#allocation11], %s453
          %s456 = ssub.s32 16, 16
          %457 = vsyncadd %s452, %s456
          %s458 = smul.addr %s35, 16
          %s459 = scalar_lea.hbm %s4, %s458
          %s461 = sshll.u32 %s454, 4
          %s462 = int_to_ptr.vmem [resolvable:$true] %s461
          %464 = dma.hbm_to_vmem [thread:$0]  %s459, 16, %s462, %s452
        $region56: #{tpu_custom_call.1} parent=35 // pred_fallthru
          _
      $region36: #{tpu_custom_call.1} parent=5 // pred_fallthru
        _
      %p465 = scmp.le.s32.totalorder 1, %s28
      %p466 = scmp.lt.s32.totalorder %s28, 5
      %p467 = pnand %p465, %p466
      %p468 = pneg %p467
      // Predicated region
      $region57: #{tpu_custom_call.1} parent=5 // pred_check
        _
      $region58: #{tpu_custom_call.1} parent=5 // pred_check_branch
        %470 = sbr.rel (%p467) target = $region60
      $region59: #{tpu_custom_call.1} parent=5 // pred_region
        %s471 = ssub.s32 %s28, 1
        %s472 = sand.u32 %s53, 1
        %s473 = scalar_lea.sflag [#allocation4], %s472
        %s474 = sand.u32 %s53, 1
        %s475 = smul.addr %s474, 8
        %s476 = scalar_lea.vmem [#allocation3], %s475
        // Predicated region
        $region61: #{tpu_custom_call.1} parent=59 // pred_check
          %p477 = pneg %p66
        $region62: #{tpu_custom_call.1} parent=59 // pred_check_branch
          %479 = sbr.rel (%p477) target = $region64
        $region63: #{tpu_custom_call.1} parent=59 // pred_region
          %480 = dma.done %s473, 128
        $region64: #{tpu_custom_call.1} parent=59 // pred_fallthru
          _
        %s481 = sand.u32 %s33, 1
        %s482 = scalar_lea.sflag [#allocation7], %s481
        %s483 = sand.u32 %s81, 1
        %s484 = smul.addr %s483, 64
        %s485 = scalar_lea.vmem [#allocation6], %s484
        // Predicated region
        $region65: #{tpu_custom_call.1} parent=59 // pred_check
          %p486 = pneg %p94
        $region66: #{tpu_custom_call.1} parent=59 // pred_check_branch
          %488 = sbr.rel (%p486) target = $region68
        $region67: #{tpu_custom_call.1} parent=59 // pred_region
          %489 = dma.done %s482, 1024
        $region68: #{tpu_custom_call.1} parent=59 // pred_fallthru
          _
        %s490 = sand.u32 %s33, 1
        %s491 = scalar_lea.sflag [#allocation7], %s490
        %s492 = sand.u32 %s107, 1
        %s493 = smul.addr %s492, 2
        %s494 = scalar_lea.vmem [#allocation8], %s493
        // Predicated region
        $region69: #{tpu_custom_call.1} parent=59 // pred_check
          %p495 = pneg %p120
        $region70: #{tpu_custom_call.1} parent=59 // pred_check_branch
          %497 = sbr.rel (%p495) target = $region72
        $region71: #{tpu_custom_call.1} parent=59 // pred_region
          %498 = dma.done %s491, 32
        $region72: #{tpu_custom_call.1} parent=59 // pred_fallthru
          _
        %s499 = sand.u32 %s33, 1
        %s500 = scalar_lea.sflag [#allocation10], %s499
        %s501 = sand.u32 %s135, 1
        %s502 = smul.addr %s501, 1280
        %s503 = scalar_lea.vmem [#allocation9], %s502
        // Predicated region
        $region73: #{tpu_custom_call.1} parent=59 // pred_check
          %p504 = pneg %p148
        $region74: #{tpu_custom_call.1} parent=59 // pred_check_branch
          %506 = sbr.rel (%p504) target = $region76
        $region75: #{tpu_custom_call.1} parent=59 // pred_region
          %507 = dma.done %s500, 20480
        $region76: #{tpu_custom_call.1} parent=59 // pred_fallthru
          _
        %s508 = sand.u32 %s33, 1
        %s509 = scalar_lea.sflag [#allocation10], %s508
        %s510 = sand.u32 %s161, 1
        %s511 = scalar_lea.vmem [#allocation11], %s510
        // Predicated region
        $region77: #{tpu_custom_call.1} parent=59 // pred_check
          %p512 = pneg %p174
        $region78: #{tpu_custom_call.1} parent=59 // pred_check_branch
          %514 = sbr.rel (%p512) target = $region80
        $region79: #{tpu_custom_call.1} parent=59 // pred_region
          %515 = dma.done %s509, 16
        $region80: #{tpu_custom_call.1} parent=59 // pred_fallthru
          _
        %s516 = sand.u32 %s53, 1
        %s517 = scalar_lea.sflag [#allocation4], %s516
        %s518 = sand.u32 %s53, 1
        %s519 = smul.addr %s518, 8
        %s520 = scalar_lea.vmem [#allocation3], %s519
        %p521 = pneg %p66
        %p522 = pneg %p63
        %s523 = sand.u32 %s33, 1
        %s524 = scalar_lea.sflag [#allocation7], %s523
        %s525 = sand.u32 %s81, 1
        %s526 = smul.addr %s525, 64
        %s527 = scalar_lea.vmem [#allocation6], %s526
        %p528 = pneg %p94
        %p529 = pneg %p91
        %s530 = sand.u32 %s33, 1
        %s531 = scalar_lea.sflag [#allocation7], %s530
        %s532 = sand.u32 %s107, 1
        %s533 = smul.addr %s532, 2
        %s534 = scalar_lea.vmem [#allocation8], %s533
        %p535 = pneg %p120
        %p536 = pneg %p117
        %s537 = sand.u32 %s33, 1
        %s538 = scalar_lea.sflag [#allocation10], %s537
        %s539 = sand.u32 %s135, 1
        %s540 = smul.addr %s539, 1280
        %s541 = scalar_lea.vmem [#allocation9], %s540
        %p542 = pneg %p148
        %p543 = pneg %p145
        %s544 = sand.u32 %s33, 1
        %s545 = scalar_lea.sflag [#allocation10], %s544
        %s546 = sand.u32 %s161, 1
        %s547 = scalar_lea.vmem [#allocation11], %s546
        %p548 = pneg %p174
        %p549 = pneg %p171
        %p550 = pneg %p195
        %p551 = pneg %p192
        %p552 = pneg %p216
        %p553 = pneg %p213
        %p554 = pneg %p237
        %p555 = pneg %p234
        %p556 = pneg %p258
        %p557 = pneg %p255
        %p558 = pneg %p279
        %p559 = pneg %p276
        %p560 = pneg %p305
        %p561 = pneg %p302
        %s562 = sand.u32 %s292, 1
        %s563 = scalar_lea.sflag [#allocation5], %s562
        %s564 = sand.u32 %s292, 1
        %s565 = smul.addr %s564, 32
        %s566 = scalar_lea.vmem [#allocation12], %s565
        %s567 = smul.u32 16, %s38
        %s568 = smul.u32 16, %s38
        %p570 = scmp.eq.s32.totalorder %s38, 0
        // Predicated region
        $region81: #{tpu_custom_call.1} parent=59 // pred_check
          %p571 = pneg %p570
        $region82: #{tpu_custom_call.1} parent=59 // pred_check_branch
          %573 = sbr.rel (%p571) target = $region84
        $region83: #{tpu_custom_call.1} parent=59 // pred_region
          %574 = vst [vmem:[#allocation2] sm:$0xff] 0.0
          %575 = vst [vmem:[#allocation2 + $0x8] sm:$0xff] 0.0
          %576 = vst [vmem:[#allocation2 + $0x10] sm:$0xff] 0.0
        $region84: #{tpu_custom_call.1} parent=59 // pred_fallthru
          _
        %v577 = vld [vmem:[%s485] sm:$0xf]
        %v578 = vld [vmem:[%s485 + $0x4] sm:$0xf]
        %v579 = vld [vmem:[%s485 + $0x8] sm:$0xf]
        %v580 = vld [vmem:[%s485 + $0xc] sm:$0xf]
        %v581 = vld [vmem:[%s485 + $0x10] sm:$0xf]
        %v582 = vld [vmem:[%s485 + $0x14] sm:$0xf]
        %v583 = vld [vmem:[%s485 + $0x18] sm:$0xf]
        %v584 = vld [vmem:[%s485 + $0x1c] sm:$0xf]
        %v585 = vld [vmem:[%s485 + $0x20] sm:$0xf]
        %v586 = vld [vmem:[%s485 + $0x24] sm:$0xf]
        %v587 = vld [vmem:[%s485 + $0x28] sm:$0xf]
        %v588 = vld [vmem:[%s485 + $0x2c] sm:$0xf]
        %v589 = vld [vmem:[%s485 + $0x30] sm:$0xf]
        %v590 = vld [vmem:[%s485 + $0x34] sm:$0xf]
        %v591 = vld [vmem:[%s485 + $0x38] sm:$0xf]
        %v592 = vld [vmem:[%s485 + $0x3c] sm:$0xf]
        %v593 = vld [vmem:[#allocation2] sm:$0xf]
        %v594 = vld [vmem:[%s494] sm:$0x3]
        %v611 = vunpack.c.l.b16 %v577
        %v612 = vunpack.c.l.b16 %v578
        %v613 = vunpack.c.l.b16 %v579
        %v614 = vunpack.c.l.b16 %v580
        %v615 = vunpack.c.l.b16 %v581
        %v616 = vunpack.c.l.b16 %v582
        %v617 = vunpack.c.l.b16 %v583
        %v618 = vunpack.c.l.b16 %v584
        %v619 = vunpack.c.l.b16 %v585
        %v620 = vunpack.c.l.b16 %v586
        %v621 = vunpack.c.l.b16 %v587
        %v622 = vunpack.c.l.b16 %v588
        %v623 = vunpack.c.l.b16 %v589
        %v624 = vunpack.c.l.b16 %v590
        %v625 = vunpack.c.l.b16 %v591
        %v626 = vunpack.c.l.b16 %v592
        %v627 = vpack.c.b16 %v612, %v611
        %v628 = vpack.c.b16 %v614, %v613
        %v629 = vpack.c.b16 %v616, %v615
        %v630 = vpack.c.b16 %v618, %v617
        %v631 = vpack.c.b16 %v620, %v619
        %v632 = vpack.c.b16 %v622, %v621
        %v633 = vpack.c.b16 %v624, %v623
        %v634 = vpack.c.b16 %v626, %v625
        %643 = vmatprep.subr.bf16.mxu0 0
        %644 = vmatpush1.bf16.msra.mxu0 %v627
        %645 = vmatprep.subr.bf16.mxu0 0
        %646 = vmatpush1.bf16.msra.mxu0 %v628
        %647 = vmatprep.subr.bf16.mxu0 0
        %648 = vmatpush1.bf16.msra.mxu0 %v629
        %649 = vmatprep.subr.bf16.mxu0 0
        %650 = vmatpush1.bf16.msra.mxu0 %v630
        %651 = vmatprep.subr.bf16.mxu0 0
        %652 = vmatpush1.bf16.msra.mxu0 %v631
        %653 = vmatprep.subr.bf16.mxu0 0
        %654 = vmatpush1.bf16.msra.mxu0 %v632
        %655 = vmatprep.subr.bf16.mxu0 0
        %656 = vmatpush1.bf16.msra.mxu0 %v633
        %657 = vmatprep.subr.bf16.mxu0 0
        %658 = vmatpush1.bf16.msra.mxu0 %v634
        %659 = vmatprep.subr.bf16.mxu0 0
        %660 = vmatpush1.bf16.msra.mxu0 0
        %661 = vmatprep.subr.bf16.mxu0 0
        %662 = vmatpush1.bf16.msra.mxu0 0
        %663 = vmatprep.subr.bf16.mxu0 0
        %664 = vmatpush1.bf16.msra.mxu0 0
        %665 = vmatprep.subr.bf16.mxu0 0
        %666 = vmatpush1.bf16.msra.mxu0 0
        %667 = vmatprep.subr.bf16.mxu0 0
        %668 = vmatpush1.bf16.msra.mxu0 0
        %669 = vmatprep.subr.bf16.mxu0 0
        %670 = vmatpush1.bf16.msra.mxu0 0
        %671 = vmatprep.subr.bf16.mxu0 0
        %672 = vmatpush1.bf16.msra.mxu0 0
        %673 = vmatprep.subr.bf16.mxu0 0
        %674 = vmatpush1.bf16.msra.mxu0 0
        %675 = vmatprep.mubr.bf16.mxu0 0
        %676 = vmatmul.mubr.bf16.gmra.mrb[0].mxu0 %v594
        %v677 = vpop.f32.mrb[0].mxu0
        %v678 = vadd.f32 0.0, %v677
        %v679 = vpop.f32.mrb[0].mxu0
        %v680 = vpop.f32.mrb[0].mxu0
        %v681 = vpop.f32.mrb[0].mxu0
        %682 = vdwg.mxu0
        %v683 = vadd.f32 %v593, %v678
        %684 = vst [vmem:[#allocation2] sm:$0xf] %v683
        %v685 = vld [vmem:[%s503] sm:$0xf]
        %v686 = vld [vmem:[%s503 + $0x4] sm:$0xf]
        %v687 = vld [vmem:[%s503 + $0x8] sm:$0xf]
        %v688 = vld [vmem:[%s503 + $0xc] sm:$0xf]
        %v689 = vld [vmem:[%s503 + $0x10] sm:$0xf]
        %v690 = vld [vmem:[%s503 + $0x14] sm:$0xf]
        %v691 = vld [vmem:[%s503 + $0x18] sm:$0xf]
        %v692 = vld [vmem:[%s503 + $0x1c] sm:$0xf]
        %v693 = vld [vmem:[%s503 + $0x20] sm:$0xf]
        %v694 = vld [vmem:[%s503 + $0x24] sm:$0xf]
        %v695 = vld [vmem:[%s503 + $0x28] sm:$0xf]
        %v696 = vld [vmem:[%s503 + $0x2c] sm:$0xf]
        %v697 = vld [vmem:[%s503 + $0x30] sm:$0xf]
        %v698 = vld [vmem:[%s503 + $0x34] sm:$0xf]
        %v699 = vld [vmem:[%s503 + $0x38] sm:$0xf]
        %v700 = vld [vmem:[%s503 + $0x3c] sm:$0xf]
        %v701 = vmul.bf16 %v685, %v577
        %v702 = vmul.bf16 %v686, %v578
        %v703 = vmul.bf16 %v687, %v579
        %v704 = vmul.bf16 %v688, %v580
        %v705 = vmul.bf16 %v689, %v581
        %v706 = vmul.bf16 %v690, %v582
        %v707 = vmul.bf16 %v691, %v583
        %v708 = vmul.bf16 %v692, %v584
        %v709 = vmul.bf16 %v693, %v585
        %v710 = vmul.bf16 %v694, %v586
        %v711 = vmul.bf16 %v695, %v587
        %v712 = vmul.bf16 %v696, %v588
        %v713 = vmul.bf16 %v697, %v589
        %v714 = vmul.bf16 %v698, %v590
        %v715 = vmul.bf16 %v699, %v591
        %v716 = vmul.bf16 %v700, %v592
        %v717 = vld [vmem:[#allocation2 + $0x4] sm:$0x1]
        %v718 = vunpack.c.l.bf16 %v701
        %v719 = vunpack.c.l.bf16 %v702
        %v720 = vunpack.c.l.bf16 %v703
        %v721 = vunpack.c.l.bf16 %v704
        %v722 = vunpack.c.l.bf16 %v705
        %v723 = vunpack.c.l.bf16 %v706
        %v724 = vunpack.c.l.bf16 %v707
        %v725 = vunpack.c.l.bf16 %v708
        %v726 = vunpack.c.l.bf16 %v709
        %v727 = vunpack.c.l.bf16 %v710
        %v728 = vunpack.c.l.bf16 %v711
        %v729 = vunpack.c.l.bf16 %v712
        %v730 = vunpack.c.l.bf16 %v713
        %v731 = vunpack.c.l.bf16 %v714
        %v732 = vunpack.c.l.bf16 %v715
        %v733 = vunpack.c.l.bf16 %v716
        %v734 = vadd.f32 %v718, %v719
        %v735 = vadd.f32 %v734, %v720
        %v736 = vadd.f32 %v735, %v721
        %v737 = vadd.f32 %v736, %v722
        %v738 = vadd.f32 %v737, %v723
        %v739 = vadd.f32 %v738, %v724
        %v740 = vadd.f32 %v739, %v725
        %v741 = vadd.f32 %v740, %v726
        %v742 = vadd.f32 %v741, %v727
        %v743 = vadd.f32 %v742, %v728
        %v744 = vadd.f32 %v743, %v729
        %v745 = vadd.f32 %v744, %v730
        %v746 = vadd.f32 %v745, %v731
        %v747 = vadd.f32 %v746, %v732
        %v748 = vadd.f32 %v747, %v733
        %v749 = vrot.slane %v748, 4
        %v750 = vadd.f32 %v748, %v749
        %v751 = vrot.slane %v750, 2
        %v752 = vadd.f32 %v750, %v751
        %v753 = vrot.slane %v752, 1
        %v754 = vadd.f32 %v752, %v753
        %v755 = vadd.f32 %v717, %v754
        %756 = vst [vmem:[#allocation2 + $0x4] sm:$0x1] %v755
        %s757 = scalar_lea.vmem %s503, 64 [#allocation9]
        %v758 = vld [vmem:[%s757] sm:$0xf]
        %v759 = vld [vmem:[%s757 + $0x4] sm:$0xf]
        %v760 = vld [vmem:[%s757 + $0x8] sm:$0xf]
        %v761 = vld [vmem:[%s757 + $0xc] sm:$0xf]
        %v762 = vld [vmem:[%s757 + $0x10] sm:$0xf]
        %v763 = vld [vmem:[%s757 + $0x14] sm:$0xf]
        %v764 = vld [vmem:[%s757 + $0x18] sm:$0xf]
        %v765 = vld [vmem:[%s757 + $0x1c] sm:$0xf]
        %v766 = vld [vmem:[%s757 + $0x20] sm:$0xf]
        %v767 = vld [vmem:[%s757 + $0x24] sm:$0xf]
        %v768 = vld [vmem:[%s757 + $0x28] sm:$0xf]
        %v769 = vld [vmem:[%s757 + $0x2c] sm:$0xf]
        %v770 = vld [vmem:[%s757 + $0x30] sm:$0xf]
        %v771 = vld [vmem:[%s757 + $0x34] sm:$0xf]
        %v772 = vld [vmem:[%s757 + $0x38] sm:$0xf]
        %v773 = vld [vmem:[%s757 + $0x3c] sm:$0xf]
        %v774 = vmul.bf16 %v758, %v577
        %v775 = vmul.bf16 %v759, %v578
        %v776 = vmul.bf16 %v760, %v579
        %v777 = vmul.bf16 %v761, %v580
        %v778 = vmul.bf16 %v762, %v581
        %v779 = vmul.bf16 %v763, %v582
        %v780 = vmul.bf16 %v764, %v583
        %v781 = vmul.bf16 %v765, %v584
        %v782 = vmul.bf16 %v766, %v585
        %v783 = vmul.bf16 %v767, %v586
        %v784 = vmul.bf16 %v768, %v587
        %v785 = vmul.bf16 %v769, %v588
        %v786 = vmul.bf16 %v770, %v589
        %v787 = vmul.bf16 %v771, %v590
        %v788 = vmul.bf16 %v772, %v591
        %v789 = vmul.bf16 %v773, %v592
        %v790 = vld [vmem:[#allocation2 + $0x5] sm:$0x1]
        %v791 = vunpack.c.l.bf16 %v774
        %v792 = vunpack.c.l.bf16 %v775
        %v793 = vunpack.c.l.bf16 %v776
        %v794 = vunpack.c.l.bf16 %v777
        %v795 = vunpack.c.l.bf16 %v778
        %v796 = vunpack.c.l.bf16 %v779
        %v797 = vunpack.c.l.bf16 %v780
        %v798 = vunpack.c.l.bf16 %v781
        %v799 = vunpack.c.l.bf16 %v782
        %v800 = vunpack.c.l.bf16 %v783
        %v801 = vunpack.c.l.bf16 %v784
        %v802 = vunpack.c.l.bf16 %v785
        %v803 = vunpack.c.l.bf16 %v786
        %v804 = vunpack.c.l.bf16 %v787
        %v805 = vunpack.c.l.bf16 %v788
        %v806 = vunpack.c.l.bf16 %v789
        %v807 = vadd.f32 %v791, %v792
        %v808 = vadd.f32 %v807, %v793
        %v809 = vadd.f32 %v808, %v794
        %v810 = vadd.f32 %v809, %v795
        %v811 = vadd.f32 %v810, %v796
        %v812 = vadd.f32 %v811, %v797
        %v813 = vadd.f32 %v812, %v798
        %v814 = vadd.f32 %v813, %v799
        %v815 = vadd.f32 %v814, %v800
        %v816 = vadd.f32 %v815, %v801
        %v817 = vadd.f32 %v816, %v802
        %v818 = vadd.f32 %v817, %v803
        %v819 = vadd.f32 %v818, %v804
        %v820 = vadd.f32 %v819, %v805
        %v821 = vadd.f32 %v820, %v806
        %v822 = vrot.slane %v821, 4
        %v823 = vadd.f32 %v821, %v822
        %v824 = vrot.slane %v823, 2
        %v825 = vadd.f32 %v823, %v824
        %v826 = vrot.slane %v825, 1
        %v827 = vadd.f32 %v825, %v826
        %v828 = vadd.f32 %v790, %v827
        %829 = vst [vmem:[#allocation2 + $0x5] sm:$0x1] %v828
        %s830 = scalar_lea.vmem %s503, 128 [#allocation9]
        %v831 = vld [vmem:[%s830] sm:$0xf]
        %v832 = vld [vmem:[%s830 + $0x4] sm:$0xf]
        %v833 = vld [vmem:[%s830 + $0x8] sm:$0xf]
        %v834 = vld [vmem:[%s830 + $0xc] sm:$0xf]
        %v835 = vld [vmem:[%s830 + $0x10] sm:$0xf]
        %v836 = vld [vmem:[%s830 + $0x14] sm:$0xf]
        %v837 = vld [vmem:[%s830 + $0x18] sm:$0xf]
        %v838 = vld [vmem:[%s830 + $0x1c] sm:$0xf]
        %v839 = vld [vmem:[%s830 + $0x20] sm:$0xf]
        %v840 = vld [vmem:[%s830 + $0x24] sm:$0xf]
        %v841 = vld [vmem:[%s830 + $0x28] sm:$0xf]
        %v842 = vld [vmem:[%s830 + $0x2c] sm:$0xf]
        %v843 = vld [vmem:[%s830 + $0x30] sm:$0xf]
        %v844 = vld [vmem:[%s830 + $0x34] sm:$0xf]
        %v845 = vld [vmem:[%s830 + $0x38] sm:$0xf]
        %v846 = vld [vmem:[%s830 + $0x3c] sm:$0xf]
        %v847 = vmul.bf16 %v831, %v577
        %v848 = vmul.bf16 %v832, %v578
        %v849 = vmul.bf16 %v833, %v579
        %v850 = vmul.bf16 %v834, %v580
        %v851 = vmul.bf16 %v835, %v581
        %v852 = vmul.bf16 %v836, %v582
        %v853 = vmul.bf16 %v837, %v583
        %v854 = vmul.bf16 %v838, %v584
        %v855 = vmul.bf16 %v839, %v585
        %v856 = vmul.bf16 %v840, %v586
        %v857 = vmul.bf16 %v841, %v587
        %v858 = vmul.bf16 %v842, %v588
        %v859 = vmul.bf16 %v843, %v589
        %v860 = vmul.bf16 %v844, %v590
        %v861 = vmul.bf16 %v845, %v591
        %v862 = vmul.bf16 %v846, %v592
        %v863 = vld [vmem:[#allocation2 + $0x6] sm:$0x1]
        %v864 = vunpack.c.l.bf16 %v847
        %v865 = vunpack.c.l.bf16 %v848
        %v866 = vunpack.c.l.bf16 %v849
        %v867 = vunpack.c.l.bf16 %v850
        %v868 = vunpack.c.l.bf16 %v851
        %v869 = vunpack.c.l.bf16 %v852
        %v870 = vunpack.c.l.bf16 %v853
        %v871 = vunpack.c.l.bf16 %v854
        %v872 = vunpack.c.l.bf16 %v855
        %v873 = vunpack.c.l.bf16 %v856
        %v874 = vunpack.c.l.bf16 %v857
        %v875 = vunpack.c.l.bf16 %v858
        %v876 = vunpack.c.l.bf16 %v859
        %v877 = vunpack.c.l.bf16 %v860
        %v878 = vunpack.c.l.bf16 %v861
        %v879 = vunpack.c.l.bf16 %v862
        %v880 = vadd.f32 %v864, %v865
        %v881 = vadd.f32 %v880, %v866
        %v882 = vadd.f32 %v881, %v867
        %v883 = vadd.f32 %v882, %v868
        %v884 = vadd.f32 %v883, %v869
        %v885 = vadd.f32 %v884, %v870
        %v886 = vadd.f32 %v885, %v871
        %v887 = vadd.f32 %v886, %v872
        %v888 = vadd.f32 %v887, %v873
        %v889 = vadd.f32 %v888, %v874
        %v890 = vadd.f32 %v889, %v875
        %v891 = vadd.f32 %v890, %v876
        %v892 = vadd.f32 %v891, %v877
        %v893 = vadd.f32 %v892, %v878
        %v894 = vadd.f32 %v893, %v879
        %v895 = vrot.slane %v894, 4
        %v896 = vadd.f32 %v894, %v895
        %v897 = vrot.slane %v896, 2
        %v898 = vadd.f32 %v896, %v897
        %v899 = vrot.slane %v898, 1
        %v900 = vadd.f32 %v898, %v899
        %v901 = vadd.f32 %v863, %v900
        %902 = vst [vmem:[#allocation2 + $0x6] sm:$0x1] %v901
        %s903 = scalar_lea.vmem %s503, 192 [#allocation9]
        %v904 = vld [vmem:[%s903] sm:$0xf]
        %v905 = vld [vmem:[%s903 + $0x4] sm:$0xf]
        %v906 = vld [vmem:[%s903 + $0x8] sm:$0xf]
        %v907 = vld [vmem:[%s903 + $0xc] sm:$0xf]
        %v908 = vld [vmem:[%s903 + $0x10] sm:$0xf]
        %v909 = vld [vmem:[%s903 + $0x14] sm:$0xf]
        %v910 = vld [vmem:[%s903 + $0x18] sm:$0xf]
        %v911 = vld [vmem:[%s903 + $0x1c] sm:$0xf]
        %v912 = vld [vmem:[%s903 + $0x20] sm:$0xf]
        %v913 = vld [vmem:[%s903 + $0x24] sm:$0xf]
        %v914 = vld [vmem:[%s903 + $0x28] sm:$0xf]
        %v915 = vld [vmem:[%s903 + $0x2c] sm:$0xf]
        %v916 = vld [vmem:[%s903 + $0x30] sm:$0xf]
        %v917 = vld [vmem:[%s903 + $0x34] sm:$0xf]
        %v918 = vld [vmem:[%s903 + $0x38] sm:$0xf]
        %v919 = vld [vmem:[%s903 + $0x3c] sm:$0xf]
        %v920 = vmul.bf16 %v904, %v577
        %v921 = vmul.bf16 %v905, %v578
        %v922 = vmul.bf16 %v906, %v579
        %v923 = vmul.bf16 %v907, %v580
        %v924 = vmul.bf16 %v908, %v581
        %v925 = vmul.bf16 %v909, %v582
        %v926 = vmul.bf16 %v910, %v583
        %v927 = vmul.bf16 %v911, %v584
        %v928 = vmul.bf16 %v912, %v585
        %v929 = vmul.bf16 %v913, %v586
        %v930 = vmul.bf16 %v914, %v587
        %v931 = vmul.bf16 %v915, %v588
        %v932 = vmul.bf16 %v916, %v589
        %v933 = vmul.bf16 %v917, %v590
        %v934 = vmul.bf16 %v918, %v591
        %v935 = vmul.bf16 %v919, %v592
        %v936 = vld [vmem:[#allocation2 + $0x7] sm:$0x1]
        %v937 = vunpack.c.l.bf16 %v920
        %v938 = vunpack.c.l.bf16 %v921
        %v939 = vunpack.c.l.bf16 %v922
        %v940 = vunpack.c.l.bf16 %v923
        %v941 = vunpack.c.l.bf16 %v924
        %v942 = vunpack.c.l.bf16 %v925
        %v943 = vunpack.c.l.bf16 %v926
        %v944 = vunpack.c.l.bf16 %v927
        %v945 = vunpack.c.l.bf16 %v928
        %v946 = vunpack.c.l.bf16 %v929
        %v947 = vunpack.c.l.bf16 %v930
        %v948 = vunpack.c.l.bf16 %v931
        %v949 = vunpack.c.l.bf16 %v932
        %v950 = vunpack.c.l.bf16 %v933
        %v951 = vunpack.c.l.bf16 %v934
        %v952 = vunpack.c.l.bf16 %v935
        %v953 = vadd.f32 %v937, %v938
        %v954 = vadd.f32 %v953, %v939
        %v955 = vadd.f32 %v954, %v940
        %v956 = vadd.f32 %v955, %v941
        %v957 = vadd.f32 %v956, %v942
        %v958 = vadd.f32 %v957, %v943
        %v959 = vadd.f32 %v958, %v944
        %v960 = vadd.f32 %v959, %v945
        %v961 = vadd.f32 %v960, %v946
        %v962 = vadd.f32 %v961, %v947
        %v963 = vadd.f32 %v962, %v948
        %v964 = vadd.f32 %v963, %v949
        %v965 = vadd.f32 %v964, %v950
        %v966 = vadd.f32 %v965, %v951
        %v967 = vadd.f32 %v966, %v952
        %v968 = vrot.slane %v967, 4
        %v969 = vadd.f32 %v967, %v968
        %v970 = vrot.slane %v969, 2
        %v971 = vadd.f32 %v969, %v970
        %v972 = vrot.slane %v971, 1
        %v973 = vadd.f32 %v971, %v972
        %v974 = vadd.f32 %v936, %v973
        %975 = vst [vmem:[#allocation2 + $0x7] sm:$0x1] %v974
        %s976 = scalar_lea.vmem %s503, 256 [#allocation9]
        %v977 = vld [vmem:[%s976] sm:$0xf]
        %v978 = vld [vmem:[%s976 + $0x4] sm:$0xf]
        %v979 = vld [vmem:[%s976 + $0x8] sm:$0xf]
        %v980 = vld [vmem:[%s976 + $0xc] sm:$0xf]
        %v981 = vld [vmem:[%s976 + $0x10] sm:$0xf]
        %v982 = vld [vmem:[%s976 + $0x14] sm:$0xf]
        %v983 = vld [vmem:[%s976 + $0x18] sm:$0xf]
        %v984 = vld [vmem:[%s976 + $0x1c] sm:$0xf]
        %v985 = vld [vmem:[%s976 + $0x20] sm:$0xf]
        %v986 = vld [vmem:[%s976 + $0x24] sm:$0xf]
        %v987 = vld [vmem:[%s976 + $0x28] sm:$0xf]
        %v988 = vld [vmem:[%s976 + $0x2c] sm:$0xf]
        %v989 = vld [vmem:[%s976 + $0x30] sm:$0xf]
        %v990 = vld [vmem:[%s976 + $0x34] sm:$0xf]
        %v991 = vld [vmem:[%s976 + $0x38] sm:$0xf]
        %v992 = vld [vmem:[%s976 + $0x3c] sm:$0xf]
        %v993 = vmul.bf16 %v977, %v577
        %v994 = vmul.bf16 %v978, %v578
        %v995 = vmul.bf16 %v979, %v579
        %v996 = vmul.bf16 %v980, %v580
        %v997 = vmul.bf16 %v981, %v581
        %v998 = vmul.bf16 %v982, %v582
        %v999 = vmul.bf16 %v983, %v583
        %v1000 = vmul.bf16 %v984, %v584
        %v1001 = vmul.bf16 %v985, %v585
        %v1002 = vmul.bf16 %v986, %v586
        %v1003 = vmul.bf16 %v987, %v587
        %v1004 = vmul.bf16 %v988, %v588
        %v1005 = vmul.bf16 %v989, %v589
        %v1006 = vmul.bf16 %v990, %v590
        %v1007 = vmul.bf16 %v991, %v591
        %v1008 = vmul.bf16 %v992, %v592
        %v1009 = vld [vmem:[#allocation2 + $0x8] sm:$0x1]
        %v1010 = vunpack.c.l.bf16 %v993
        %v1011 = vunpack.c.l.bf16 %v994
        %v1012 = vunpack.c.l.bf16 %v995
        %v1013 = vunpack.c.l.bf16 %v996
        %v1014 = vunpack.c.l.bf16 %v997
        %v1015 = vunpack.c.l.bf16 %v998
        %v1016 = vunpack.c.l.bf16 %v999
        %v1017 = vunpack.c.l.bf16 %v1000
        %v1018 = vunpack.c.l.bf16 %v1001
        %v1019 = vunpack.c.l.bf16 %v1002
        %v1020 = vunpack.c.l.bf16 %v1003
        %v1021 = vunpack.c.l.bf16 %v1004
        %v1022 = vunpack.c.l.bf16 %v1005
        %v1023 = vunpack.c.l.bf16 %v1006
        %v1024 = vunpack.c.l.bf16 %v1007
        %v1025 = vunpack.c.l.bf16 %v1008
        %v1026 = vadd.f32 %v1010, %v1011
        %v1027 = vadd.f32 %v1026, %v1012
        %v1028 = vadd.f32 %v1027, %v1013
        %v1029 = vadd.f32 %v1028, %v1014
        %v1030 = vadd.f32 %v1029, %v1015
        %v1031 = vadd.f32 %v1030, %v1016
        %v1032 = vadd.f32 %v1031, %v1017
        %v1033 = vadd.f32 %v1032, %v1018
        %v1034 = vadd.f32 %v1033, %v1019
        %v1035 = vadd.f32 %v1034, %v1020
        %v1036 = vadd.f32 %v1035, %v1021
        %v1037 = vadd.f32 %v1036, %v1022
        %v1038 = vadd.f32 %v1037, %v1023
        %v1039 = vadd.f32 %v1038, %v1024
        %v1040 = vadd.f32 %v1039, %v1025
        %v1041 = vrot.slane %v1040, 4
        %v1042 = vadd.f32 %v1040, %v1041
        %v1043 = vrot.slane %v1042, 2
        %v1044 = vadd.f32 %v1042, %v1043
        %v1045 = vrot.slane %v1044, 1
        %v1046 = vadd.f32 %v1044, %v1045
        %v1047 = vadd.f32 %v1009, %v1046
        %1048 = vst [vmem:[#allocation2 + $0x8] sm:$0x1] %v1047
        %s1049 = scalar_lea.vmem %s503, 320 [#allocation9]
        %v1050 = vld [vmem:[%s1049] sm:$0xf]
        %v1051 = vld [vmem:[%s1049 + $0x4] sm:$0xf]
        %v1052 = vld [vmem:[%s1049 + $0x8] sm:$0xf]
        %v1053 = vld [vmem:[%s1049 + $0xc] sm:$0xf]
        %v1054 = vld [vmem:[%s1049 + $0x10] sm:$0xf]
        %v1055 = vld [vmem:[%s1049 + $0x14] sm:$0xf]
        %v1056 = vld [vmem:[%s1049 + $0x18] sm:$0xf]
        %v1057 = vld [vmem:[%s1049 + $0x1c] sm:$0xf]
        %v1058 = vld [vmem:[%s1049 + $0x20] sm:$0xf]
        %v1059 = vld [vmem:[%s1049 + $0x24] sm:$0xf]
        %v1060 = vld [vmem:[%s1049 + $0x28] sm:$0xf]
        %v1061 = vld [vmem:[%s1049 + $0x2c] sm:$0xf]
        %v1062 = vld [vmem:[%s1049 + $0x30] sm:$0xf]
        %v1063 = vld [vmem:[%s1049 + $0x34] sm:$0xf]
        %v1064 = vld [vmem:[%s1049 + $0x38] sm:$0xf]
        %v1065 = vld [vmem:[%s1049 + $0x3c] sm:$0xf]
        %v1066 = vmul.bf16 %v1050, %v577
        %v1067 = vmul.bf16 %v1051, %v578
        %v1068 = vmul.bf16 %v1052, %v579
        %v1069 = vmul.bf16 %v1053, %v580
        %v1070 = vmul.bf16 %v1054, %v581
        %v1071 = vmul.bf16 %v1055, %v582
        %v1072 = vmul.bf16 %v1056, %v583
        %v1073 = vmul.bf16 %v1057, %v584
        %v1074 = vmul.bf16 %v1058, %v585
        %v1075 = vmul.bf16 %v1059, %v586
        %v1076 = vmul.bf16 %v1060, %v587
        %v1077 = vmul.bf16 %v1061, %v588
        %v1078 = vmul.bf16 %v1062, %v589
        %v1079 = vmul.bf16 %v1063, %v590
        %v1080 = vmul.bf16 %v1064, %v591
        %v1081 = vmul.bf16 %v1065, %v592
        %v1082 = vld [vmem:[#allocation2 + $0x9] sm:$0x1]
        %v1083 = vunpack.c.l.bf16 %v1066
        %v1084 = vunpack.c.l.bf16 %v1067
        %v1085 = vunpack.c.l.bf16 %v1068
        %v1086 = vunpack.c.l.bf16 %v1069
        %v1087 = vunpack.c.l.bf16 %v1070
        %v1088 = vunpack.c.l.bf16 %v1071
        %v1089 = vunpack.c.l.bf16 %v1072
        %v1090 = vunpack.c.l.bf16 %v1073
        %v1091 = vunpack.c.l.bf16 %v1074
        %v1092 = vunpack.c.l.bf16 %v1075
        %v1093 = vunpack.c.l.bf16 %v1076
        %v1094 = vunpack.c.l.bf16 %v1077
        %v1095 = vunpack.c.l.bf16 %v1078
        %v1096 = vunpack.c.l.bf16 %v1079
        %v1097 = vunpack.c.l.bf16 %v1080
        %v1098 = vunpack.c.l.bf16 %v1081
        %v1099 = vadd.f32 %v1083, %v1084
        %v1100 = vadd.f32 %v1099, %v1085
        %v1101 = vadd.f32 %v1100, %v1086
        %v1102 = vadd.f32 %v1101, %v1087
        %v1103 = vadd.f32 %v1102, %v1088
        %v1104 = vadd.f32 %v1103, %v1089
        %v1105 = vadd.f32 %v1104, %v1090
        %v1106 = vadd.f32 %v1105, %v1091
        %v1107 = vadd.f32 %v1106, %v1092
        %v1108 = vadd.f32 %v1107, %v1093
        %v1109 = vadd.f32 %v1108, %v1094
        %v1110 = vadd.f32 %v1109, %v1095
        %v1111 = vadd.f32 %v1110, %v1096
        %v1112 = vadd.f32 %v1111, %v1097
        %v1113 = vadd.f32 %v1112, %v1098
        %v1114 = vrot.slane %v1113, 4
        %v1115 = vadd.f32 %v1113, %v1114
        %v1116 = vrot.slane %v1115, 2
        %v1117 = vadd.f32 %v1115, %v1116
        %v1118 = vrot.slane %v1117, 1
        %v1119 = vadd.f32 %v1117, %v1118
        %v1120 = vadd.f32 %v1082, %v1119
        %1121 = vst [vmem:[#allocation2 + $0x9] sm:$0x1] %v1120
        %s1122 = scalar_lea.vmem %s503, 384 [#allocation9]
        %v1123 = vld [vmem:[%s1122] sm:$0xf]
        %v1124 = vld [vmem:[%s1122 + $0x4] sm:$0xf]
        %v1125 = vld [vmem:[%s1122 + $0x8] sm:$0xf]
        %v1126 = vld [vmem:[%s1122 + $0xc] sm:$0xf]
        %v1127 = vld [vmem:[%s1122 + $0x10] sm:$0xf]
        %v1128 = vld [vmem:[%s1122 + $0x14] sm:$0xf]
        %v1129 = vld [vmem:[%s1122 + $0x18] sm:$0xf]
        %v1130 = vld [vmem:[%s1122 + $0x1c] sm:$0xf]
        %v1131 = vld [vmem:[%s1122 + $0x20] sm:$0xf]
        %v1132 = vld [vmem:[%s1122 + $0x24] sm:$0xf]
        %v1133 = vld [vmem:[%s1122 + $0x28] sm:$0xf]
        %v1134 = vld [vmem:[%s1122 + $0x2c] sm:$0xf]
        %v1135 = vld [vmem:[%s1122 + $0x30] sm:$0xf]
        %v1136 = vld [vmem:[%s1122 + $0x34] sm:$0xf]
        %v1137 = vld [vmem:[%s1122 + $0x38] sm:$0xf]
        %v1138 = vld [vmem:[%s1122 + $0x3c] sm:$0xf]
        %v1139 = vmul.bf16 %v1123, %v577
        %v1140 = vmul.bf16 %v1124, %v578
        %v1141 = vmul.bf16 %v1125, %v579
        %v1142 = vmul.bf16 %v1126, %v580
        %v1143 = vmul.bf16 %v1127, %v581
        %v1144 = vmul.bf16 %v1128, %v582
        %v1145 = vmul.bf16 %v1129, %v583
        %v1146 = vmul.bf16 %v1130, %v584
        %v1147 = vmul.bf16 %v1131, %v585
        %v1148 = vmul.bf16 %v1132, %v586
        %v1149 = vmul.bf16 %v1133, %v587
        %v1150 = vmul.bf16 %v1134, %v588
        %v1151 = vmul.bf16 %v1135, %v589
        %v1152 = vmul.bf16 %v1136, %v590
        %v1153 = vmul.bf16 %v1137, %v591
        %v1154 = vmul.bf16 %v1138, %v592
        %v1155 = vld [vmem:[#allocation2 + $0xa] sm:$0x1]
        %v1156 = vunpack.c.l.bf16 %v1139
        %v1157 = vunpack.c.l.bf16 %v1140
        %v1158 = vunpack.c.l.bf16 %v1141
        %v1159 = vunpack.c.l.bf16 %v1142
        %v1160 = vunpack.c.l.bf16 %v1143
        %v1161 = vunpack.c.l.bf16 %v1144
        %v1162 = vunpack.c.l.bf16 %v1145
        %v1163 = vunpack.c.l.bf16 %v1146
        %v1164 = vunpack.c.l.bf16 %v1147
        %v1165 = vunpack.c.l.bf16 %v1148
        %v1166 = vunpack.c.l.bf16 %v1149
        %v1167 = vunpack.c.l.bf16 %v1150
        %v1168 = vunpack.c.l.bf16 %v1151
        %v1169 = vunpack.c.l.bf16 %v1152
        %v1170 = vunpack.c.l.bf16 %v1153
        %v1171 = vunpack.c.l.bf16 %v1154
        %v1172 = vadd.f32 %v1156, %v1157
        %v1173 = vadd.f32 %v1172, %v1158
        %v1174 = vadd.f32 %v1173, %v1159
        %v1175 = vadd.f32 %v1174, %v1160
        %v1176 = vadd.f32 %v1175, %v1161
        %v1177 = vadd.f32 %v1176, %v1162
        %v1178 = vadd.f32 %v1177, %v1163
        %v1179 = vadd.f32 %v1178, %v1164
        %v1180 = vadd.f32 %v1179, %v1165
        %v1181 = vadd.f32 %v1180, %v1166
        %v1182 = vadd.f32 %v1181, %v1167
        %v1183 = vadd.f32 %v1182, %v1168
        %v1184 = vadd.f32 %v1183, %v1169
        %v1185 = vadd.f32 %v1184, %v1170
        %v1186 = vadd.f32 %v1185, %v1171
        %v1187 = vrot.slane %v1186, 4
        %v1188 = vadd.f32 %v1186, %v1187
        %v1189 = vrot.slane %v1188, 2
        %v1190 = vadd.f32 %v1188, %v1189
        %v1191 = vrot.slane %v1190, 1
        %v1192 = vadd.f32 %v1190, %v1191
        %v1193 = vadd.f32 %v1155, %v1192
        %1194 = vst [vmem:[#allocation2 + $0xa] sm:$0x1] %v1193
        %s1195 = scalar_lea.vmem %s503, 448 [#allocation9]
        %v1196 = vld [vmem:[%s1195] sm:$0xf]
        %v1197 = vld [vmem:[%s1195 + $0x4] sm:$0xf]
        %v1198 = vld [vmem:[%s1195 + $0x8] sm:$0xf]
        %v1199 = vld [vmem:[%s1195 + $0xc] sm:$0xf]
        %v1200 = vld [vmem:[%s1195 + $0x10] sm:$0xf]
        %v1201 = vld [vmem:[%s1195 + $0x14] sm:$0xf]
        %v1202 = vld [vmem:[%s1195 + $0x18] sm:$0xf]
        %v1203 = vld [vmem:[%s1195 + $0x1c] sm:$0xf]
        %v1204 = vld [vmem:[%s1195 + $0x20] sm:$0xf]
        %v1205 = vld [vmem:[%s1195 + $0x24] sm:$0xf]
        %v1206 = vld [vmem:[%s1195 + $0x28] sm:$0xf]
        %v1207 = vld [vmem:[%s1195 + $0x2c] sm:$0xf]
        %v1208 = vld [vmem:[%s1195 + $0x30] sm:$0xf]
        %v1209 = vld [vmem:[%s1195 + $0x34] sm:$0xf]
        %v1210 = vld [vmem:[%s1195 + $0x38] sm:$0xf]
        %v1211 = vld [vmem:[%s1195 + $0x3c] sm:$0xf]
        %v1212 = vmul.bf16 %v1196, %v577
        %v1213 = vmul.bf16 %v1197, %v578
        %v1214 = vmul.bf16 %v1198, %v579
        %v1215 = vmul.bf16 %v1199, %v580
        %v1216 = vmul.bf16 %v1200, %v581
        %v1217 = vmul.bf16 %v1201, %v582
        %v1218 = vmul.bf16 %v1202, %v583
        %v1219 = vmul.bf16 %v1203, %v584
        %v1220 = vmul.bf16 %v1204, %v585
        %v1221 = vmul.bf16 %v1205, %v586
        %v1222 = vmul.bf16 %v1206, %v587
        %v1223 = vmul.bf16 %v1207, %v588
        %v1224 = vmul.bf16 %v1208, %v589
        %v1225 = vmul.bf16 %v1209, %v590
        %v1226 = vmul.bf16 %v1210, %v591
        %v1227 = vmul.bf16 %v1211, %v592
        %v1228 = vld [vmem:[#allocation2 + $0xb] sm:$0x1]
        %v1229 = vunpack.c.l.bf16 %v1212
        %v1230 = vunpack.c.l.bf16 %v1213
        %v1231 = vunpack.c.l.bf16 %v1214
        %v1232 = vunpack.c.l.bf16 %v1215
        %v1233 = vunpack.c.l.bf16 %v1216
        %v1234 = vunpack.c.l.bf16 %v1217
        %v1235 = vunpack.c.l.bf16 %v1218
        %v1236 = vunpack.c.l.bf16 %v1219
        %v1237 = vunpack.c.l.bf16 %v1220
        %v1238 = vunpack.c.l.bf16 %v1221
        %v1239 = vunpack.c.l.bf16 %v1222
        %v1240 = vunpack.c.l.bf16 %v1223
        %v1241 = vunpack.c.l.bf16 %v1224
        %v1242 = vunpack.c.l.bf16 %v1225
        %v1243 = vunpack.c.l.bf16 %v1226
        %v1244 = vunpack.c.l.bf16 %v1227
        %v1245 = vadd.f32 %v1229, %v1230
        %v1246 = vadd.f32 %v1245, %v1231
        %v1247 = vadd.f32 %v1246, %v1232
        %v1248 = vadd.f32 %v1247, %v1233
        %v1249 = vadd.f32 %v1248, %v1234
        %v1250 = vadd.f32 %v1249, %v1235
        %v1251 = vadd.f32 %v1250, %v1236
        %v1252 = vadd.f32 %v1251, %v1237
        %v1253 = vadd.f32 %v1252, %v1238
        %v1254 = vadd.f32 %v1253, %v1239
        %v1255 = vadd.f32 %v1254, %v1240
        %v1256 = vadd.f32 %v1255, %v1241
        %v1257 = vadd.f32 %v1256, %v1242
        %v1258 = vadd.f32 %v1257, %v1243
        %v1259 = vadd.f32 %v1258, %v1244
        %v1260 = vrot.slane %v1259, 4
        %v1261 = vadd.f32 %v1259, %v1260
        %v1262 = vrot.slane %v1261, 2
        %v1263 = vadd.f32 %v1261, %v1262
        %v1264 = vrot.slane %v1263, 1
        %v1265 = vadd.f32 %v1263, %v1264
        %v1266 = vadd.f32 %v1228, %v1265
        %1267 = vst [vmem:[#allocation2 + $0xb] sm:$0x1] %v1266
        %s1268 = scalar_lea.vmem %s503, 512 [#allocation9]
        %v1269 = vld [vmem:[%s1268] sm:$0xf]
        %v1270 = vld [vmem:[%s1268 + $0x4] sm:$0xf]
        %v1271 = vld [vmem:[%s1268 + $0x8] sm:$0xf]
        %v1272 = vld [vmem:[%s1268 + $0xc] sm:$0xf]
        %v1273 = vld [vmem:[%s1268 + $0x10] sm:$0xf]
        %v1274 = vld [vmem:[%s1268 + $0x14] sm:$0xf]
        %v1275 = vld [vmem:[%s1268 + $0x18] sm:$0xf]
        %v1276 = vld [vmem:[%s1268 + $0x1c] sm:$0xf]
        %v1277 = vld [vmem:[%s1268 + $0x20] sm:$0xf]
        %v1278 = vld [vmem:[%s1268 + $0x24] sm:$0xf]
        %v1279 = vld [vmem:[%s1268 + $0x28] sm:$0xf]
        %v1280 = vld [vmem:[%s1268 + $0x2c] sm:$0xf]
        %v1281 = vld [vmem:[%s1268 + $0x30] sm:$0xf]
        %v1282 = vld [vmem:[%s1268 + $0x34] sm:$0xf]
        %v1283 = vld [vmem:[%s1268 + $0x38] sm:$0xf]
        %v1284 = vld [vmem:[%s1268 + $0x3c] sm:$0xf]
        %v1285 = vmul.bf16 %v1269, %v577
        %v1286 = vmul.bf16 %v1270, %v578
        %v1287 = vmul.bf16 %v1271, %v579
        %v1288 = vmul.bf16 %v1272, %v580
        %v1289 = vmul.bf16 %v1273, %v581
        %v1290 = vmul.bf16 %v1274, %v582
        %v1291 = vmul.bf16 %v1275, %v583
        %v1292 = vmul.bf16 %v1276, %v584
        %v1293 = vmul.bf16 %v1277, %v585
        %v1294 = vmul.bf16 %v1278, %v586
        %v1295 = vmul.bf16 %v1279, %v587
        %v1296 = vmul.bf16 %v1280, %v588
        %v1297 = vmul.bf16 %v1281, %v589
        %v1298 = vmul.bf16 %v1282, %v590
        %v1299 = vmul.bf16 %v1283, %v591
        %v1300 = vmul.bf16 %v1284, %v592
        %v1301 = vld [vmem:[#allocation2 + $0xc] sm:$0x1]
        %v1302 = vunpack.c.l.bf16 %v1285
        %v1303 = vunpack.c.l.bf16 %v1286
        %v1304 = vunpack.c.l.bf16 %v1287
        %v1305 = vunpack.c.l.bf16 %v1288
        %v1306 = vunpack.c.l.bf16 %v1289
        %v1307 = vunpack.c.l.bf16 %v1290
        %v1308 = vunpack.c.l.bf16 %v1291
        %v1309 = vunpack.c.l.bf16 %v1292
        %v1310 = vunpack.c.l.bf16 %v1293
        %v1311 = vunpack.c.l.bf16 %v1294
        %v1312 = vunpack.c.l.bf16 %v1295
        %v1313 = vunpack.c.l.bf16 %v1296
        %v1314 = vunpack.c.l.bf16 %v1297
        %v1315 = vunpack.c.l.bf16 %v1298
        %v1316 = vunpack.c.l.bf16 %v1299
        %v1317 = vunpack.c.l.bf16 %v1300
        %v1318 = vadd.f32 %v1302, %v1303
        %v1319 = vadd.f32 %v1318, %v1304
        %v1320 = vadd.f32 %v1319, %v1305
        %v1321 = vadd.f32 %v1320, %v1306
        %v1322 = vadd.f32 %v1321, %v1307
        %v1323 = vadd.f32 %v1322, %v1308
        %v1324 = vadd.f32 %v1323, %v1309
        %v1325 = vadd.f32 %v1324, %v1310
        %v1326 = vadd.f32 %v1325, %v1311
        %v1327 = vadd.f32 %v1326, %v1312
        %v1328 = vadd.f32 %v1327, %v1313
        %v1329 = vadd.f32 %v1328, %v1314
        %v1330 = vadd.f32 %v1329, %v1315
        %v1331 = vadd.f32 %v1330, %v1316
        %v1332 = vadd.f32 %v1331, %v1317
        %v1333 = vrot.slane %v1332, 4
        %v1334 = vadd.f32 %v1332, %v1333
        %v1335 = vrot.slane %v1334, 2
        %v1336 = vadd.f32 %v1334, %v1335
        %v1337 = vrot.slane %v1336, 1
        %v1338 = vadd.f32 %v1336, %v1337
        %v1339 = vadd.f32 %v1301, %v1338
        %1340 = vst [vmem:[#allocation2 + $0xc] sm:$0x1] %v1339
        %s1341 = scalar_lea.vmem %s503, 576 [#allocation9]
        %v1342 = vld [vmem:[%s1341] sm:$0xf]
        %v1343 = vld [vmem:[%s1341 + $0x4] sm:$0xf]
        %v1344 = vld [vmem:[%s1341 + $0x8] sm:$0xf]
        %v1345 = vld [vmem:[%s1341 + $0xc] sm:$0xf]
        %v1346 = vld [vmem:[%s1341 + $0x10] sm:$0xf]
        %v1347 = vld [vmem:[%s1341 + $0x14] sm:$0xf]
        %v1348 = vld [vmem:[%s1341 + $0x18] sm:$0xf]
        %v1349 = vld [vmem:[%s1341 + $0x1c] sm:$0xf]
        %v1350 = vld [vmem:[%s1341 + $0x20] sm:$0xf]
        %v1351 = vld [vmem:[%s1341 + $0x24] sm:$0xf]
        %v1352 = vld [vmem:[%s1341 + $0x28] sm:$0xf]
        %v1353 = vld [vmem:[%s1341 + $0x2c] sm:$0xf]
        %v1354 = vld [vmem:[%s1341 + $0x30] sm:$0xf]
        %v1355 = vld [vmem:[%s1341 + $0x34] sm:$0xf]
        %v1356 = vld [vmem:[%s1341 + $0x38] sm:$0xf]
        %v1357 = vld [vmem:[%s1341 + $0x3c] sm:$0xf]
        %v1358 = vmul.bf16 %v1342, %v577
        %v1359 = vmul.bf16 %v1343, %v578
        %v1360 = vmul.bf16 %v1344, %v579
        %v1361 = vmul.bf16 %v1345, %v580
        %v1362 = vmul.bf16 %v1346, %v581
        %v1363 = vmul.bf16 %v1347, %v582
        %v1364 = vmul.bf16 %v1348, %v583
        %v1365 = vmul.bf16 %v1349, %v584
        %v1366 = vmul.bf16 %v1350, %v585
        %v1367 = vmul.bf16 %v1351, %v586
        %v1368 = vmul.bf16 %v1352, %v587
        %v1369 = vmul.bf16 %v1353, %v588
        %v1370 = vmul.bf16 %v1354, %v589
        %v1371 = vmul.bf16 %v1355, %v590
        %v1372 = vmul.bf16 %v1356, %v591
        %v1373 = vmul.bf16 %v1357, %v592
        %v1374 = vld [vmem:[#allocation2 + $0xd] sm:$0x1]
        %v1375 = vunpack.c.l.bf16 %v1358
        %v1376 = vunpack.c.l.bf16 %v1359
        %v1377 = vunpack.c.l.bf16 %v1360
        %v1378 = vunpack.c.l.bf16 %v1361
        %v1379 = vunpack.c.l.bf16 %v1362
        %v1380 = vunpack.c.l.bf16 %v1363
        %v1381 = vunpack.c.l.bf16 %v1364
        %v1382 = vunpack.c.l.bf16 %v1365
        %v1383 = vunpack.c.l.bf16 %v1366
        %v1384 = vunpack.c.l.bf16 %v1367
        %v1385 = vunpack.c.l.bf16 %v1368
        %v1386 = vunpack.c.l.bf16 %v1369
        %v1387 = vunpack.c.l.bf16 %v1370
        %v1388 = vunpack.c.l.bf16 %v1371
        %v1389 = vunpack.c.l.bf16 %v1372
        %v1390 = vunpack.c.l.bf16 %v1373
        %v1391 = vadd.f32 %v1375, %v1376
        %v1392 = vadd.f32 %v1391, %v1377
        %v1393 = vadd.f32 %v1392, %v1378
        %v1394 = vadd.f32 %v1393, %v1379
        %v1395 = vadd.f32 %v1394, %v1380
        %v1396 = vadd.f32 %v1395, %v1381
        %v1397 = vadd.f32 %v1396, %v1382
        %v1398 = vadd.f32 %v1397, %v1383
        %v1399 = vadd.f32 %v1398, %v1384
        %v1400 = vadd.f32 %v1399, %v1385
        %v1401 = vadd.f32 %v1400, %v1386
        %v1402 = vadd.f32 %v1401, %v1387
        %v1403 = vadd.f32 %v1402, %v1388
        %v1404 = vadd.f32 %v1403, %v1389
        %v1405 = vadd.f32 %v1404, %v1390
        %v1406 = vrot.slane %v1405, 4
        %v1407 = vadd.f32 %v1405, %v1406
        %v1408 = vrot.slane %v1407, 2
        %v1409 = vadd.f32 %v1407, %v1408
        %v1410 = vrot.slane %v1409, 1
        %v1411 = vadd.f32 %v1409, %v1410
        %v1412 = vadd.f32 %v1374, %v1411
        %1413 = vst [vmem:[#allocation2 + $0xd] sm:$0x1] %v1412
        %s1414 = scalar_lea.vmem %s503, 640 [#allocation9]
        %v1415 = vld [vmem:[%s1414] sm:$0xf]
        %v1416 = vld [vmem:[%s1414 + $0x4] sm:$0xf]
        %v1417 = vld [vmem:[%s1414 + $0x8] sm:$0xf]
        %v1418 = vld [vmem:[%s1414 + $0xc] sm:$0xf]
        %v1419 = vld [vmem:[%s1414 + $0x10] sm:$0xf]
        %v1420 = vld [vmem:[%s1414 + $0x14] sm:$0xf]
        %v1421 = vld [vmem:[%s1414 + $0x18] sm:$0xf]
        %v1422 = vld [vmem:[%s1414 + $0x1c] sm:$0xf]
        %v1423 = vld [vmem:[%s1414 + $0x20] sm:$0xf]
        %v1424 = vld [vmem:[%s1414 + $0x24] sm:$0xf]
        %v1425 = vld [vmem:[%s1414 + $0x28] sm:$0xf]
        %v1426 = vld [vmem:[%s1414 + $0x2c] sm:$0xf]
        %v1427 = vld [vmem:[%s1414 + $0x30] sm:$0xf]
        %v1428 = vld [vmem:[%s1414 + $0x34] sm:$0xf]
        %v1429 = vld [vmem:[%s1414 + $0x38] sm:$0xf]
        %v1430 = vld [vmem:[%s1414 + $0x3c] sm:$0xf]
        %v1431 = vmul.bf16 %v1415, %v577
        %v1432 = vmul.bf16 %v1416, %v578
        %v1433 = vmul.bf16 %v1417, %v579
        %v1434 = vmul.bf16 %v1418, %v580
        %v1435 = vmul.bf16 %v1419, %v581
        %v1436 = vmul.bf16 %v1420, %v582
        %v1437 = vmul.bf16 %v1421, %v583
        %v1438 = vmul.bf16 %v1422, %v584
        %v1439 = vmul.bf16 %v1423, %v585
        %v1440 = vmul.bf16 %v1424, %v586
        %v1441 = vmul.bf16 %v1425, %v587
        %v1442 = vmul.bf16 %v1426, %v588
        %v1443 = vmul.bf16 %v1427, %v589
        %v1444 = vmul.bf16 %v1428, %v590
        %v1445 = vmul.bf16 %v1429, %v591
        %v1446 = vmul.bf16 %v1430, %v592
        %v1447 = vld [vmem:[#allocation2 + $0xe] sm:$0x1]
        %v1448 = vunpack.c.l.bf16 %v1431
        %v1449 = vunpack.c.l.bf16 %v1432
        %v1450 = vunpack.c.l.bf16 %v1433
        %v1451 = vunpack.c.l.bf16 %v1434
        %v1452 = vunpack.c.l.bf16 %v1435
        %v1453 = vunpack.c.l.bf16 %v1436
        %v1454 = vunpack.c.l.bf16 %v1437
        %v1455 = vunpack.c.l.bf16 %v1438
        %v1456 = vunpack.c.l.bf16 %v1439
        %v1457 = vunpack.c.l.bf16 %v1440
        %v1458 = vunpack.c.l.bf16 %v1441
        %v1459 = vunpack.c.l.bf16 %v1442
        %v1460 = vunpack.c.l.bf16 %v1443
        %v1461 = vunpack.c.l.bf16 %v1444
        %v1462 = vunpack.c.l.bf16 %v1445
        %v1463 = vunpack.c.l.bf16 %v1446
        %v1464 = vadd.f32 %v1448, %v1449
        %v1465 = vadd.f32 %v1464, %v1450
        %v1466 = vadd.f32 %v1465, %v1451
        %v1467 = vadd.f32 %v1466, %v1452
        %v1468 = vadd.f32 %v1467, %v1453
        %v1469 = vadd.f32 %v1468, %v1454
        %v1470 = vadd.f32 %v1469, %v1455
        %v1471 = vadd.f32 %v1470, %v1456
        %v1472 = vadd.f32 %v1471, %v1457
        %v1473 = vadd.f32 %v1472, %v1458
        %v1474 = vadd.f32 %v1473, %v1459
        %v1475 = vadd.f32 %v1474, %v1460
        %v1476 = vadd.f32 %v1475, %v1461
        %v1477 = vadd.f32 %v1476, %v1462
        %v1478 = vadd.f32 %v1477, %v1463
        %v1479 = vrot.slane %v1478, 4
        %v1480 = vadd.f32 %v1478, %v1479
        %v1481 = vrot.slane %v1480, 2
        %v1482 = vadd.f32 %v1480, %v1481
        %v1483 = vrot.slane %v1482, 1
        %v1484 = vadd.f32 %v1482, %v1483
        %v1485 = vadd.f32 %v1447, %v1484
        %1486 = vst [vmem:[#allocation2 + $0xe] sm:$0x1] %v1485
        %s1487 = scalar_lea.vmem %s503, 704 [#allocation9]
        %v1488 = vld [vmem:[%s1487] sm:$0xf]
        %v1489 = vld [vmem:[%s1487 + $0x4] sm:$0xf]
        %v1490 = vld [vmem:[%s1487 + $0x8] sm:$0xf]
        %v1491 = vld [vmem:[%s1487 + $0xc] sm:$0xf]
        %v1492 = vld [vmem:[%s1487 + $0x10] sm:$0xf]
        %v1493 = vld [vmem:[%s1487 + $0x14] sm:$0xf]
        %v1494 = vld [vmem:[%s1487 + $0x18] sm:$0xf]
        %v1495 = vld [vmem:[%s1487 + $0x1c] sm:$0xf]
        %v1496 = vld [vmem:[%s1487 + $0x20] sm:$0xf]
        %v1497 = vld [vmem:[%s1487 + $0x24] sm:$0xf]
        %v1498 = vld [vmem:[%s1487 + $0x28] sm:$0xf]
        %v1499 = vld [vmem:[%s1487 + $0x2c] sm:$0xf]
        %v1500 = vld [vmem:[%s1487 + $0x30] sm:$0xf]
        %v1501 = vld [vmem:[%s1487 + $0x34] sm:$0xf]
        %v1502 = vld [vmem:[%s1487 + $0x38] sm:$0xf]
        %v1503 = vld [vmem:[%s1487 + $0x3c] sm:$0xf]
        %v1504 = vmul.bf16 %v1488, %v577
        %v1505 = vmul.bf16 %v1489, %v578
        %v1506 = vmul.bf16 %v1490, %v579
        %v1507 = vmul.bf16 %v1491, %v580
        %v1508 = vmul.bf16 %v1492, %v581
        %v1509 = vmul.bf16 %v1493, %v582
        %v1510 = vmul.bf16 %v1494, %v583
        %v1511 = vmul.bf16 %v1495, %v584
        %v1512 = vmul.bf16 %v1496, %v585
        %v1513 = vmul.bf16 %v1497, %v586
        %v1514 = vmul.bf16 %v1498, %v587
        %v1515 = vmul.bf16 %v1499, %v588
        %v1516 = vmul.bf16 %v1500, %v589
        %v1517 = vmul.bf16 %v1501, %v590
        %v1518 = vmul.bf16 %v1502, %v591
        %v1519 = vmul.bf16 %v1503, %v592
        %v1520 = vld [vmem:[#allocation2 + $0xf] sm:$0x1]
        %v1521 = vunpack.c.l.bf16 %v1504
        %v1522 = vunpack.c.l.bf16 %v1505
        %v1523 = vunpack.c.l.bf16 %v1506
        %v1524 = vunpack.c.l.bf16 %v1507
        %v1525 = vunpack.c.l.bf16 %v1508
        %v1526 = vunpack.c.l.bf16 %v1509
        %v1527 = vunpack.c.l.bf16 %v1510
        %v1528 = vunpack.c.l.bf16 %v1511
        %v1529 = vunpack.c.l.bf16 %v1512
        %v1530 = vunpack.c.l.bf16 %v1513
        %v1531 = vunpack.c.l.bf16 %v1514
        %v1532 = vunpack.c.l.bf16 %v1515
        %v1533 = vunpack.c.l.bf16 %v1516
        %v1534 = vunpack.c.l.bf16 %v1517
        %v1535 = vunpack.c.l.bf16 %v1518
        %v1536 = vunpack.c.l.bf16 %v1519
        %v1537 = vadd.f32 %v1521, %v1522
        %v1538 = vadd.f32 %v1537, %v1523
        %v1539 = vadd.f32 %v1538, %v1524
        %v1540 = vadd.f32 %v1539, %v1525
        %v1541 = vadd.f32 %v1540, %v1526
        %v1542 = vadd.f32 %v1541, %v1527
        %v1543 = vadd.f32 %v1542, %v1528
        %v1544 = vadd.f32 %v1543, %v1529
        %v1545 = vadd.f32 %v1544, %v1530
        %v1546 = vadd.f32 %v1545, %v1531
        %v1547 = vadd.f32 %v1546, %v1532
        %v1548 = vadd.f32 %v1547, %v1533
        %v1549 = vadd.f32 %v1548, %v1534
        %v1550 = vadd.f32 %v1549, %v1535
        %v1551 = vadd.f32 %v1550, %v1536
        %v1552 = vrot.slane %v1551, 4
        %v1553 = vadd.f32 %v1551, %v1552
        %v1554 = vrot.slane %v1553, 2
        %v1555 = vadd.f32 %v1553, %v1554
        %v1556 = vrot.slane %v1555, 1
        %v1557 = vadd.f32 %v1555, %v1556
        %v1558 = vadd.f32 %v1520, %v1557
        %1559 = vst [vmem:[#allocation2 + $0xf] sm:$0x1] %v1558
        %s1560 = scalar_lea.vmem %s503, 768 [#allocation9]
        %v1561 = vld [vmem:[%s1560] sm:$0xf]
        %v1562 = vld [vmem:[%s1560 + $0x4] sm:$0xf]
        %v1563 = vld [vmem:[%s1560 + $0x8] sm:$0xf]
        %v1564 = vld [vmem:[%s1560 + $0xc] sm:$0xf]
        %v1565 = vld [vmem:[%s1560 + $0x10] sm:$0xf]
        %v1566 = vld [vmem:[%s1560 + $0x14] sm:$0xf]
        %v1567 = vld [vmem:[%s1560 + $0x18] sm:$0xf]
        %v1568 = vld [vmem:[%s1560 + $0x1c] sm:$0xf]
        %v1569 = vld [vmem:[%s1560 + $0x20] sm:$0xf]
        %v1570 = vld [vmem:[%s1560 + $0x24] sm:$0xf]
        %v1571 = vld [vmem:[%s1560 + $0x28] sm:$0xf]
        %v1572 = vld [vmem:[%s1560 + $0x2c] sm:$0xf]
        %v1573 = vld [vmem:[%s1560 + $0x30] sm:$0xf]
        %v1574 = vld [vmem:[%s1560 + $0x34] sm:$0xf]
        %v1575 = vld [vmem:[%s1560 + $0x38] sm:$0xf]
        %v1576 = vld [vmem:[%s1560 + $0x3c] sm:$0xf]
        %v1577 = vmul.bf16 %v1561, %v577
        %v1578 = vmul.bf16 %v1562, %v578
        %v1579 = vmul.bf16 %v1563, %v579
        %v1580 = vmul.bf16 %v1564, %v580
        %v1581 = vmul.bf16 %v1565, %v581
        %v1582 = vmul.bf16 %v1566, %v582
        %v1583 = vmul.bf16 %v1567, %v583
        %v1584 = vmul.bf16 %v1568, %v584
        %v1585 = vmul.bf16 %v1569, %v585
        %v1586 = vmul.bf16 %v1570, %v586
        %v1587 = vmul.bf16 %v1571, %v587
        %v1588 = vmul.bf16 %v1572, %v588
        %v1589 = vmul.bf16 %v1573, %v589
        %v1590 = vmul.bf16 %v1574, %v590
        %v1591 = vmul.bf16 %v1575, %v591
        %v1592 = vmul.bf16 %v1576, %v592
        %v1593 = vld [vmem:[#allocation2 + $0x10] sm:$0x1]
        %v1594 = vunpack.c.l.bf16 %v1577
        %v1595 = vunpack.c.l.bf16 %v1578
        %v1596 = vunpack.c.l.bf16 %v1579
        %v1597 = vunpack.c.l.bf16 %v1580
        %v1598 = vunpack.c.l.bf16 %v1581
        %v1599 = vunpack.c.l.bf16 %v1582
        %v1600 = vunpack.c.l.bf16 %v1583
        %v1601 = vunpack.c.l.bf16 %v1584
        %v1602 = vunpack.c.l.bf16 %v1585
        %v1603 = vunpack.c.l.bf16 %v1586
        %v1604 = vunpack.c.l.bf16 %v1587
        %v1605 = vunpack.c.l.bf16 %v1588
        %v1606 = vunpack.c.l.bf16 %v1589
        %v1607 = vunpack.c.l.bf16 %v1590
        %v1608 = vunpack.c.l.bf16 %v1591
        %v1609 = vunpack.c.l.bf16 %v1592
        %v1610 = vadd.f32 %v1594, %v1595
        %v1611 = vadd.f32 %v1610, %v1596
        %v1612 = vadd.f32 %v1611, %v1597
        %v1613 = vadd.f32 %v1612, %v1598
        %v1614 = vadd.f32 %v1613, %v1599
        %v1615 = vadd.f32 %v1614, %v1600
        %v1616 = vadd.f32 %v1615, %v1601
        %v1617 = vadd.f32 %v1616, %v1602
        %v1618 = vadd.f32 %v1617, %v1603
        %v1619 = vadd.f32 %v1618, %v1604
        %v1620 = vadd.f32 %v1619, %v1605
        %v1621 = vadd.f32 %v1620, %v1606
        %v1622 = vadd.f32 %v1621, %v1607
        %v1623 = vadd.f32 %v1622, %v1608
        %v1624 = vadd.f32 %v1623, %v1609
        %v1625 = vrot.slane %v1624, 4
        %v1626 = vadd.f32 %v1624, %v1625
        %v1627 = vrot.slane %v1626, 2
        %v1628 = vadd.f32 %v1626, %v1627
        %v1629 = vrot.slane %v1628, 1
        %v1630 = vadd.f32 %v1628, %v1629
        %v1631 = vadd.f32 %v1593, %v1630
        %1632 = vst [vmem:[#allocation2 + $0x10] sm:$0x1] %v1631
        %s1633 = scalar_lea.vmem %s503, 832 [#allocation9]
        %v1634 = vld [vmem:[%s1633] sm:$0xf]
        %v1635 = vld [vmem:[%s1633 + $0x4] sm:$0xf]
        %v1636 = vld [vmem:[%s1633 + $0x8] sm:$0xf]
        %v1637 = vld [vmem:[%s1633 + $0xc] sm:$0xf]
        %v1638 = vld [vmem:[%s1633 + $0x10] sm:$0xf]
        %v1639 = vld [vmem:[%s1633 + $0x14] sm:$0xf]
        %v1640 = vld [vmem:[%s1633 + $0x18] sm:$0xf]
        %v1641 = vld [vmem:[%s1633 + $0x1c] sm:$0xf]
        %v1642 = vld [vmem:[%s1633 + $0x20] sm:$0xf]
        %v1643 = vld [vmem:[%s1633 + $0x24] sm:$0xf]
        %v1644 = vld [vmem:[%s1633 + $0x28] sm:$0xf]
        %v1645 = vld [vmem:[%s1633 + $0x2c] sm:$0xf]
        %v1646 = vld [vmem:[%s1633 + $0x30] sm:$0xf]
        %v1647 = vld [vmem:[%s1633 + $0x34] sm:$0xf]
        %v1648 = vld [vmem:[%s1633 + $0x38] sm:$0xf]
        %v1649 = vld [vmem:[%s1633 + $0x3c] sm:$0xf]
        %v1650 = vmul.bf16 %v1634, %v577
        %v1651 = vmul.bf16 %v1635, %v578
        %v1652 = vmul.bf16 %v1636, %v579
        %v1653 = vmul.bf16 %v1637, %v580
        %v1654 = vmul.bf16 %v1638, %v581
        %v1655 = vmul.bf16 %v1639, %v582
        %v1656 = vmul.bf16 %v1640, %v583
        %v1657 = vmul.bf16 %v1641, %v584
        %v1658 = vmul.bf16 %v1642, %v585
        %v1659 = vmul.bf16 %v1643, %v586
        %v1660 = vmul.bf16 %v1644, %v587
        %v1661 = vmul.bf16 %v1645, %v588
        %v1662 = vmul.bf16 %v1646, %v589
        %v1663 = vmul.bf16 %v1647, %v590
        %v1664 = vmul.bf16 %v1648, %v591
        %v1665 = vmul.bf16 %v1649, %v592
        %v1666 = vld [vmem:[#allocation2 + $0x11] sm:$0x1]
        %v1667 = vunpack.c.l.bf16 %v1650
        %v1668 = vunpack.c.l.bf16 %v1651
        %v1669 = vunpack.c.l.bf16 %v1652
        %v1670 = vunpack.c.l.bf16 %v1653
        %v1671 = vunpack.c.l.bf16 %v1654
        %v1672 = vunpack.c.l.bf16 %v1655
        %v1673 = vunpack.c.l.bf16 %v1656
        %v1674 = vunpack.c.l.bf16 %v1657
        %v1675 = vunpack.c.l.bf16 %v1658
        %v1676 = vunpack.c.l.bf16 %v1659
        %v1677 = vunpack.c.l.bf16 %v1660
        %v1678 = vunpack.c.l.bf16 %v1661
        %v1679 = vunpack.c.l.bf16 %v1662
        %v1680 = vunpack.c.l.bf16 %v1663
        %v1681 = vunpack.c.l.bf16 %v1664
        %v1682 = vunpack.c.l.bf16 %v1665
        %v1683 = vadd.f32 %v1667, %v1668
        %v1684 = vadd.f32 %v1683, %v1669
        %v1685 = vadd.f32 %v1684, %v1670
        %v1686 = vadd.f32 %v1685, %v1671
        %v1687 = vadd.f32 %v1686, %v1672
        %v1688 = vadd.f32 %v1687, %v1673
        %v1689 = vadd.f32 %v1688, %v1674
        %v1690 = vadd.f32 %v1689, %v1675
        %v1691 = vadd.f32 %v1690, %v1676
        %v1692 = vadd.f32 %v1691, %v1677
        %v1693 = vadd.f32 %v1692, %v1678
        %v1694 = vadd.f32 %v1693, %v1679
        %v1695 = vadd.f32 %v1694, %v1680
        %v1696 = vadd.f32 %v1695, %v1681
        %v1697 = vadd.f32 %v1696, %v1682
        %v1698 = vrot.slane %v1697, 4
        %v1699 = vadd.f32 %v1697, %v1698
        %v1700 = vrot.slane %v1699, 2
        %v1701 = vadd.f32 %v1699, %v1700
        %v1702 = vrot.slane %v1701, 1
        %v1703 = vadd.f32 %v1701, %v1702
        %v1704 = vadd.f32 %v1666, %v1703
        %1705 = vst [vmem:[#allocation2 + $0x11] sm:$0x1] %v1704
        %s1706 = scalar_lea.vmem %s503, 896 [#allocation9]
        %v1707 = vld [vmem:[%s1706] sm:$0xf]
        %v1708 = vld [vmem:[%s1706 + $0x4] sm:$0xf]
        %v1709 = vld [vmem:[%s1706 + $0x8] sm:$0xf]
        %v1710 = vld [vmem:[%s1706 + $0xc] sm:$0xf]
        %v1711 = vld [vmem:[%s1706 + $0x10] sm:$0xf]
        %v1712 = vld [vmem:[%s1706 + $0x14] sm:$0xf]
        %v1713 = vld [vmem:[%s1706 + $0x18] sm:$0xf]
        %v1714 = vld [vmem:[%s1706 + $0x1c] sm:$0xf]
        %v1715 = vld [vmem:[%s1706 + $0x20] sm:$0xf]
        %v1716 = vld [vmem:[%s1706 + $0x24] sm:$0xf]
        %v1717 = vld [vmem:[%s1706 + $0x28] sm:$0xf]
        %v1718 = vld [vmem:[%s1706 + $0x2c] sm:$0xf]
        %v1719 = vld [vmem:[%s1706 + $0x30] sm:$0xf]
        %v1720 = vld [vmem:[%s1706 + $0x34] sm:$0xf]
        %v1721 = vld [vmem:[%s1706 + $0x38] sm:$0xf]
        %v1722 = vld [vmem:[%s1706 + $0x3c] sm:$0xf]
        %v1723 = vmul.bf16 %v1707, %v577
        %v1724 = vmul.bf16 %v1708, %v578
        %v1725 = vmul.bf16 %v1709, %v579
        %v1726 = vmul.bf16 %v1710, %v580
        %v1727 = vmul.bf16 %v1711, %v581
        %v1728 = vmul.bf16 %v1712, %v582
        %v1729 = vmul.bf16 %v1713, %v583
        %v1730 = vmul.bf16 %v1714, %v584
        %v1731 = vmul.bf16 %v1715, %v585
        %v1732 = vmul.bf16 %v1716, %v586
        %v1733 = vmul.bf16 %v1717, %v587
        %v1734 = vmul.bf16 %v1718, %v588
        %v1735 = vmul.bf16 %v1719, %v589
        %v1736 = vmul.bf16 %v1720, %v590
        %v1737 = vmul.bf16 %v1721, %v591
        %v1738 = vmul.bf16 %v1722, %v592
        %v1739 = vld [vmem:[#allocation2 + $0x12] sm:$0x1]
        %v1740 = vunpack.c.l.bf16 %v1723
        %v1741 = vunpack.c.l.bf16 %v1724
        %v1742 = vunpack.c.l.bf16 %v1725
        %v1743 = vunpack.c.l.bf16 %v1726
        %v1744 = vunpack.c.l.bf16 %v1727
        %v1745 = vunpack.c.l.bf16 %v1728
        %v1746 = vunpack.c.l.bf16 %v1729
        %v1747 = vunpack.c.l.bf16 %v1730
        %v1748 = vunpack.c.l.bf16 %v1731
        %v1749 = vunpack.c.l.bf16 %v1732
        %v1750 = vunpack.c.l.bf16 %v1733
        %v1751 = vunpack.c.l.bf16 %v1734
        %v1752 = vunpack.c.l.bf16 %v1735
        %v1753 = vunpack.c.l.bf16 %v1736
        %v1754 = vunpack.c.l.bf16 %v1737
        %v1755 = vunpack.c.l.bf16 %v1738
        %v1756 = vadd.f32 %v1740, %v1741
        %v1757 = vadd.f32 %v1756, %v1742
        %v1758 = vadd.f32 %v1757, %v1743
        %v1759 = vadd.f32 %v1758, %v1744
        %v1760 = vadd.f32 %v1759, %v1745
        %v1761 = vadd.f32 %v1760, %v1746
        %v1762 = vadd.f32 %v1761, %v1747
        %v1763 = vadd.f32 %v1762, %v1748
        %v1764 = vadd.f32 %v1763, %v1749
        %v1765 = vadd.f32 %v1764, %v1750
        %v1766 = vadd.f32 %v1765, %v1751
        %v1767 = vadd.f32 %v1766, %v1752
        %v1768 = vadd.f32 %v1767, %v1753
        %v1769 = vadd.f32 %v1768, %v1754
        %v1770 = vadd.f32 %v1769, %v1755
        %v1771 = vrot.slane %v1770, 4
        %v1772 = vadd.f32 %v1770, %v1771
        %v1773 = vrot.slane %v1772, 2
        %v1774 = vadd.f32 %v1772, %v1773
        %v1775 = vrot.slane %v1774, 1
        %v1776 = vadd.f32 %v1774, %v1775
        %v1777 = vadd.f32 %v1739, %v1776
        %1778 = vst [vmem:[#allocation2 + $0x12] sm:$0x1] %v1777
        %s1779 = scalar_lea.vmem %s503, 960 [#allocation9]
        %v1780 = vld [vmem:[%s1779] sm:$0xf]
        %v1781 = vld [vmem:[%s1779 + $0x4] sm:$0xf]
        %v1782 = vld [vmem:[%s1779 + $0x8] sm:$0xf]
        %v1783 = vld [vmem:[%s1779 + $0xc] sm:$0xf]
        %v1784 = vld [vmem:[%s1779 + $0x10] sm:$0xf]
        %v1785 = vld [vmem:[%s1779 + $0x14] sm:$0xf]
        %v1786 = vld [vmem:[%s1779 + $0x18] sm:$0xf]
        %v1787 = vld [vmem:[%s1779 + $0x1c] sm:$0xf]
        %v1788 = vld [vmem:[%s1779 + $0x20] sm:$0xf]
        %v1789 = vld [vmem:[%s1779 + $0x24] sm:$0xf]
        %v1790 = vld [vmem:[%s1779 + $0x28] sm:$0xf]
        %v1791 = vld [vmem:[%s1779 + $0x2c] sm:$0xf]
        %v1792 = vld [vmem:[%s1779 + $0x30] sm:$0xf]
        %v1793 = vld [vmem:[%s1779 + $0x34] sm:$0xf]
        %v1794 = vld [vmem:[%s1779 + $0x38] sm:$0xf]
        %v1795 = vld [vmem:[%s1779 + $0x3c] sm:$0xf]
        %v1796 = vmul.bf16 %v1780, %v577
        %v1797 = vmul.bf16 %v1781, %v578
        %v1798 = vmul.bf16 %v1782, %v579
        %v1799 = vmul.bf16 %v1783, %v580
        %v1800 = vmul.bf16 %v1784, %v581
        %v1801 = vmul.bf16 %v1785, %v582
        %v1802 = vmul.bf16 %v1786, %v583
        %v1803 = vmul.bf16 %v1787, %v584
        %v1804 = vmul.bf16 %v1788, %v585
        %v1805 = vmul.bf16 %v1789, %v586
        %v1806 = vmul.bf16 %v1790, %v587
        %v1807 = vmul.bf16 %v1791, %v588
        %v1808 = vmul.bf16 %v1792, %v589
        %v1809 = vmul.bf16 %v1793, %v590
        %v1810 = vmul.bf16 %v1794, %v591
        %v1811 = vmul.bf16 %v1795, %v592
        %v1812 = vld [vmem:[#allocation2 + $0x13] sm:$0x1]
        %v1813 = vunpack.c.l.bf16 %v1796
        %v1814 = vunpack.c.l.bf16 %v1797
        %v1815 = vunpack.c.l.bf16 %v1798
        %v1816 = vunpack.c.l.bf16 %v1799
        %v1817 = vunpack.c.l.bf16 %v1800
        %v1818 = vunpack.c.l.bf16 %v1801
        %v1819 = vunpack.c.l.bf16 %v1802
        %v1820 = vunpack.c.l.bf16 %v1803
        %v1821 = vunpack.c.l.bf16 %v1804
        %v1822 = vunpack.c.l.bf16 %v1805
        %v1823 = vunpack.c.l.bf16 %v1806
        %v1824 = vunpack.c.l.bf16 %v1807
        %v1825 = vunpack.c.l.bf16 %v1808
        %v1826 = vunpack.c.l.bf16 %v1809
        %v1827 = vunpack.c.l.bf16 %v1810
        %v1828 = vunpack.c.l.bf16 %v1811
        %v1829 = vadd.f32 %v1813, %v1814
        %v1830 = vadd.f32 %v1829, %v1815
        %v1831 = vadd.f32 %v1830, %v1816
        %v1832 = vadd.f32 %v1831, %v1817
        %v1833 = vadd.f32 %v1832, %v1818
        %v1834 = vadd.f32 %v1833, %v1819
        %v1835 = vadd.f32 %v1834, %v1820
        %v1836 = vadd.f32 %v1835, %v1821
        %v1837 = vadd.f32 %v1836, %v1822
        %v1838 = vadd.f32 %v1837, %v1823
        %v1839 = vadd.f32 %v1838, %v1824
        %v1840 = vadd.f32 %v1839, %v1825
        %v1841 = vadd.f32 %v1840, %v1826
        %v1842 = vadd.f32 %v1841, %v1827
        %v1843 = vadd.f32 %v1842, %v1828
        %v1844 = vrot.slane %v1843, 4
        %v1845 = vadd.f32 %v1843, %v1844
        %v1846 = vrot.slane %v1845, 2
        %v1847 = vadd.f32 %v1845, %v1846
        %v1848 = vrot.slane %v1847, 1
        %v1849 = vadd.f32 %v1847, %v1848
        %v1850 = vadd.f32 %v1812, %v1849
        %1851 = vst [vmem:[#allocation2 + $0x13] sm:$0x1] %v1850
        %s1852 = scalar_lea.vmem %s503, 1024 [#allocation9]
        %v1853 = vld [vmem:[%s1852] sm:$0xf]
        %v1854 = vld [vmem:[%s1852 + $0x4] sm:$0xf]
        %v1855 = vld [vmem:[%s1852 + $0x8] sm:$0xf]
        %v1856 = vld [vmem:[%s1852 + $0xc] sm:$0xf]
        %v1857 = vld [vmem:[%s1852 + $0x10] sm:$0xf]
        %v1858 = vld [vmem:[%s1852 + $0x14] sm:$0xf]
        %v1859 = vld [vmem:[%s1852 + $0x18] sm:$0xf]
        %v1860 = vld [vmem:[%s1852 + $0x1c] sm:$0xf]
        %v1861 = vld [vmem:[%s1852 + $0x20] sm:$0xf]
        %v1862 = vld [vmem:[%s1852 + $0x24] sm:$0xf]
        %v1863 = vld [vmem:[%s1852 + $0x28] sm:$0xf]
        %v1864 = vld [vmem:[%s1852 + $0x2c] sm:$0xf]
        %v1865 = vld [vmem:[%s1852 + $0x30] sm:$0xf]
        %v1866 = vld [vmem:[%s1852 + $0x34] sm:$0xf]
        %v1867 = vld [vmem:[%s1852 + $0x38] sm:$0xf]
        %v1868 = vld [vmem:[%s1852 + $0x3c] sm:$0xf]
        %v1869 = vmul.bf16 %v1853, %v577
        %v1870 = vmul.bf16 %v1854, %v578
        %v1871 = vmul.bf16 %v1855, %v579
        %v1872 = vmul.bf16 %v1856, %v580
        %v1873 = vmul.bf16 %v1857, %v581
        %v1874 = vmul.bf16 %v1858, %v582
        %v1875 = vmul.bf16 %v1859, %v583
        %v1876 = vmul.bf16 %v1860, %v584
        %v1877 = vmul.bf16 %v1861, %v585
        %v1878 = vmul.bf16 %v1862, %v586
        %v1879 = vmul.bf16 %v1863, %v587
        %v1880 = vmul.bf16 %v1864, %v588
        %v1881 = vmul.bf16 %v1865, %v589
        %v1882 = vmul.bf16 %v1866, %v590
        %v1883 = vmul.bf16 %v1867, %v591
        %v1884 = vmul.bf16 %v1868, %v592
        %v1885 = vld [vmem:[#allocation2 + $0x14] sm:$0x1]
        %v1886 = vunpack.c.l.bf16 %v1869
        %v1887 = vunpack.c.l.bf16 %v1870
        %v1888 = vunpack.c.l.bf16 %v1871
        %v1889 = vunpack.c.l.bf16 %v1872
        %v1890 = vunpack.c.l.bf16 %v1873
        %v1891 = vunpack.c.l.bf16 %v1874
        %v1892 = vunpack.c.l.bf16 %v1875
        %v1893 = vunpack.c.l.bf16 %v1876
        %v1894 = vunpack.c.l.bf16 %v1877
        %v1895 = vunpack.c.l.bf16 %v1878
        %v1896 = vunpack.c.l.bf16 %v1879
        %v1897 = vunpack.c.l.bf16 %v1880
        %v1898 = vunpack.c.l.bf16 %v1881
        %v1899 = vunpack.c.l.bf16 %v1882
        %v1900 = vunpack.c.l.bf16 %v1883
        %v1901 = vunpack.c.l.bf16 %v1884
        %v1902 = vadd.f32 %v1886, %v1887
        %v1903 = vadd.f32 %v1902, %v1888
        %v1904 = vadd.f32 %v1903, %v1889
        %v1905 = vadd.f32 %v1904, %v1890
        %v1906 = vadd.f32 %v1905, %v1891
        %v1907 = vadd.f32 %v1906, %v1892
        %v1908 = vadd.f32 %v1907, %v1893
        %v1909 = vadd.f32 %v1908, %v1894
        %v1910 = vadd.f32 %v1909, %v1895
        %v1911 = vadd.f32 %v1910, %v1896
        %v1912 = vadd.f32 %v1911, %v1897
        %v1913 = vadd.f32 %v1912, %v1898
        %v1914 = vadd.f32 %v1913, %v1899
        %v1915 = vadd.f32 %v1914, %v1900
        %v1916 = vadd.f32 %v1915, %v1901
        %v1917 = vrot.slane %v1916, 4
        %v1918 = vadd.f32 %v1916, %v1917
        %v1919 = vrot.slane %v1918, 2
        %v1920 = vadd.f32 %v1918, %v1919
        %v1921 = vrot.slane %v1920, 1
        %v1922 = vadd.f32 %v1920, %v1921
        %v1923 = vadd.f32 %v1885, %v1922
        %1924 = vst [vmem:[#allocation2 + $0x14] sm:$0x1] %v1923
        %s1925 = scalar_lea.vmem %s503, 1088 [#allocation9]
        %v1926 = vld [vmem:[%s1925] sm:$0xf]
        %v1927 = vld [vmem:[%s1925 + $0x4] sm:$0xf]
        %v1928 = vld [vmem:[%s1925 + $0x8] sm:$0xf]
        %v1929 = vld [vmem:[%s1925 + $0xc] sm:$0xf]
        %v1930 = vld [vmem:[%s1925 + $0x10] sm:$0xf]
        %v1931 = vld [vmem:[%s1925 + $0x14] sm:$0xf]
        %v1932 = vld [vmem:[%s1925 + $0x18] sm:$0xf]
        %v1933 = vld [vmem:[%s1925 + $0x1c] sm:$0xf]
        %v1934 = vld [vmem:[%s1925 + $0x20] sm:$0xf]
        %v1935 = vld [vmem:[%s1925 + $0x24] sm:$0xf]
        %v1936 = vld [vmem:[%s1925 + $0x28] sm:$0xf]
        %v1937 = vld [vmem:[%s1925 + $0x2c] sm:$0xf]
        %v1938 = vld [vmem:[%s1925 + $0x30] sm:$0xf]
        %v1939 = vld [vmem:[%s1925 + $0x34] sm:$0xf]
        %v1940 = vld [vmem:[%s1925 + $0x38] sm:$0xf]
        %v1941 = vld [vmem:[%s1925 + $0x3c] sm:$0xf]
        %v1942 = vmul.bf16 %v1926, %v577
        %v1943 = vmul.bf16 %v1927, %v578
        %v1944 = vmul.bf16 %v1928, %v579
        %v1945 = vmul.bf16 %v1929, %v580
        %v1946 = vmul.bf16 %v1930, %v581
        %v1947 = vmul.bf16 %v1931, %v582
        %v1948 = vmul.bf16 %v1932, %v583
        %v1949 = vmul.bf16 %v1933, %v584
        %v1950 = vmul.bf16 %v1934, %v585
        %v1951 = vmul.bf16 %v1935, %v586
        %v1952 = vmul.bf16 %v1936, %v587
        %v1953 = vmul.bf16 %v1937, %v588
        %v1954 = vmul.bf16 %v1938, %v589
        %v1955 = vmul.bf16 %v1939, %v590
        %v1956 = vmul.bf16 %v1940, %v591
        %v1957 = vmul.bf16 %v1941, %v592
        %v1958 = vld [vmem:[#allocation2 + $0x15] sm:$0x1]
        %v1959 = vunpack.c.l.bf16 %v1942
        %v1960 = vunpack.c.l.bf16 %v1943
        %v1961 = vunpack.c.l.bf16 %v1944
        %v1962 = vunpack.c.l.bf16 %v1945
        %v1963 = vunpack.c.l.bf16 %v1946
        %v1964 = vunpack.c.l.bf16 %v1947
        %v1965 = vunpack.c.l.bf16 %v1948
        %v1966 = vunpack.c.l.bf16 %v1949
        %v1967 = vunpack.c.l.bf16 %v1950
        %v1968 = vunpack.c.l.bf16 %v1951
        %v1969 = vunpack.c.l.bf16 %v1952
        %v1970 = vunpack.c.l.bf16 %v1953
        %v1971 = vunpack.c.l.bf16 %v1954
        %v1972 = vunpack.c.l.bf16 %v1955
        %v1973 = vunpack.c.l.bf16 %v1956
        %v1974 = vunpack.c.l.bf16 %v1957
        %v1975 = vadd.f32 %v1959, %v1960
        %v1976 = vadd.f32 %v1975, %v1961
        %v1977 = vadd.f32 %v1976, %v1962
        %v1978 = vadd.f32 %v1977, %v1963
        %v1979 = vadd.f32 %v1978, %v1964
        %v1980 = vadd.f32 %v1979, %v1965
        %v1981 = vadd.f32 %v1980, %v1966
        %v1982 = vadd.f32 %v1981, %v1967
        %v1983 = vadd.f32 %v1982, %v1968
        %v1984 = vadd.f32 %v1983, %v1969
        %v1985 = vadd.f32 %v1984, %v1970
        %v1986 = vadd.f32 %v1985, %v1971
        %v1987 = vadd.f32 %v1986, %v1972
        %v1988 = vadd.f32 %v1987, %v1973
        %v1989 = vadd.f32 %v1988, %v1974
        %v1990 = vrot.slane %v1989, 4
        %v1991 = vadd.f32 %v1989, %v1990
        %v1992 = vrot.slane %v1991, 2
        %v1993 = vadd.f32 %v1991, %v1992
        %v1994 = vrot.slane %v1993, 1
        %v1995 = vadd.f32 %v1993, %v1994
        %v1996 = vadd.f32 %v1958, %v1995
        %1997 = vst [vmem:[#allocation2 + $0x15] sm:$0x1] %v1996
        %s1998 = scalar_lea.vmem %s503, 1152 [#allocation9]
        %v1999 = vld [vmem:[%s1998] sm:$0xf]
        %v2000 = vld [vmem:[%s1998 + $0x4] sm:$0xf]
        %v2001 = vld [vmem:[%s1998 + $0x8] sm:$0xf]
        %v2002 = vld [vmem:[%s1998 + $0xc] sm:$0xf]
        %v2003 = vld [vmem:[%s1998 + $0x10] sm:$0xf]
        %v2004 = vld [vmem:[%s1998 + $0x14] sm:$0xf]
        %v2005 = vld [vmem:[%s1998 + $0x18] sm:$0xf]
        %v2006 = vld [vmem:[%s1998 + $0x1c] sm:$0xf]
        %v2007 = vld [vmem:[%s1998 + $0x20] sm:$0xf]
        %v2008 = vld [vmem:[%s1998 + $0x24] sm:$0xf]
        %v2009 = vld [vmem:[%s1998 + $0x28] sm:$0xf]
        %v2010 = vld [vmem:[%s1998 + $0x2c] sm:$0xf]
        %v2011 = vld [vmem:[%s1998 + $0x30] sm:$0xf]
        %v2012 = vld [vmem:[%s1998 + $0x34] sm:$0xf]
        %v2013 = vld [vmem:[%s1998 + $0x38] sm:$0xf]
        %v2014 = vld [vmem:[%s1998 + $0x3c] sm:$0xf]
        %v2015 = vmul.bf16 %v1999, %v577
        %v2016 = vmul.bf16 %v2000, %v578
        %v2017 = vmul.bf16 %v2001, %v579
        %v2018 = vmul.bf16 %v2002, %v580
        %v2019 = vmul.bf16 %v2003, %v581
        %v2020 = vmul.bf16 %v2004, %v582
        %v2021 = vmul.bf16 %v2005, %v583
        %v2022 = vmul.bf16 %v2006, %v584
        %v2023 = vmul.bf16 %v2007, %v585
        %v2024 = vmul.bf16 %v2008, %v586
        %v2025 = vmul.bf16 %v2009, %v587
        %v2026 = vmul.bf16 %v2010, %v588
        %v2027 = vmul.bf16 %v2011, %v589
        %v2028 = vmul.bf16 %v2012, %v590
        %v2029 = vmul.bf16 %v2013, %v591
        %v2030 = vmul.bf16 %v2014, %v592
        %v2031 = vld [vmem:[#allocation2 + $0x16] sm:$0x1]
        %v2032 = vunpack.c.l.bf16 %v2015
        %v2033 = vunpack.c.l.bf16 %v2016
        %v2034 = vunpack.c.l.bf16 %v2017
        %v2035 = vunpack.c.l.bf16 %v2018
        %v2036 = vunpack.c.l.bf16 %v2019
        %v2037 = vunpack.c.l.bf16 %v2020
        %v2038 = vunpack.c.l.bf16 %v2021
        %v2039 = vunpack.c.l.bf16 %v2022
        %v2040 = vunpack.c.l.bf16 %v2023
        %v2041 = vunpack.c.l.bf16 %v2024
        %v2042 = vunpack.c.l.bf16 %v2025
        %v2043 = vunpack.c.l.bf16 %v2026
        %v2044 = vunpack.c.l.bf16 %v2027
        %v2045 = vunpack.c.l.bf16 %v2028
        %v2046 = vunpack.c.l.bf16 %v2029
        %v2047 = vunpack.c.l.bf16 %v2030
        %v2048 = vadd.f32 %v2032, %v2033
        %v2049 = vadd.f32 %v2048, %v2034
        %v2050 = vadd.f32 %v2049, %v2035
        %v2051 = vadd.f32 %v2050, %v2036
        %v2052 = vadd.f32 %v2051, %v2037
        %v2053 = vadd.f32 %v2052, %v2038
        %v2054 = vadd.f32 %v2053, %v2039
        %v2055 = vadd.f32 %v2054, %v2040
        %v2056 = vadd.f32 %v2055, %v2041
        %v2057 = vadd.f32 %v2056, %v2042
        %v2058 = vadd.f32 %v2057, %v2043
        %v2059 = vadd.f32 %v2058, %v2044
        %v2060 = vadd.f32 %v2059, %v2045
        %v2061 = vadd.f32 %v2060, %v2046
        %v2062 = vadd.f32 %v2061, %v2047
        %v2063 = vrot.slane %v2062, 4
        %v2064 = vadd.f32 %v2062, %v2063
        %v2065 = vrot.slane %v2064, 2
        %v2066 = vadd.f32 %v2064, %v2065
        %v2067 = vrot.slane %v2066, 1
        %v2068 = vadd.f32 %v2066, %v2067
        %v2069 = vadd.f32 %v2031, %v2068
        %2070 = vst [vmem:[#allocation2 + $0x16] sm:$0x1] %v2069
        %s2071 = scalar_lea.vmem %s503, 1216 [#allocation9]
        %v2072 = vld [vmem:[%s2071] sm:$0xf]
        %v2073 = vld [vmem:[%s2071 + $0x4] sm:$0xf]
        %v2074 = vld [vmem:[%s2071 + $0x8] sm:$0xf]
        %v2075 = vld [vmem:[%s2071 + $0xc] sm:$0xf]
        %v2076 = vld [vmem:[%s2071 + $0x10] sm:$0xf]
        %v2077 = vld [vmem:[%s2071 + $0x14] sm:$0xf]
        %v2078 = vld [vmem:[%s2071 + $0x18] sm:$0xf]
        %v2079 = vld [vmem:[%s2071 + $0x1c] sm:$0xf]
        %v2080 = vld [vmem:[%s2071 + $0x20] sm:$0xf]
        %v2081 = vld [vmem:[%s2071 + $0x24] sm:$0xf]
        %v2082 = vld [vmem:[%s2071 + $0x28] sm:$0xf]
        %v2083 = vld [vmem:[%s2071 + $0x2c] sm:$0xf]
        %v2084 = vld [vmem:[%s2071 + $0x30] sm:$0xf]
        %v2085 = vld [vmem:[%s2071 + $0x34] sm:$0xf]
        %v2086 = vld [vmem:[%s2071 + $0x38] sm:$0xf]
        %v2087 = vld [vmem:[%s2071 + $0x3c] sm:$0xf]
        %v2088 = vmul.bf16 %v2072, %v577
        %v2089 = vmul.bf16 %v2073, %v578
        %v2090 = vmul.bf16 %v2074, %v579
        %v2091 = vmul.bf16 %v2075, %v580
        %v2092 = vmul.bf16 %v2076, %v581
        %v2093 = vmul.bf16 %v2077, %v582
        %v2094 = vmul.bf16 %v2078, %v583
        %v2095 = vmul.bf16 %v2079, %v584
        %v2096 = vmul.bf16 %v2080, %v585
        %v2097 = vmul.bf16 %v2081, %v586
        %v2098 = vmul.bf16 %v2082, %v587
        %v2099 = vmul.bf16 %v2083, %v588
        %v2100 = vmul.bf16 %v2084, %v589
        %v2101 = vmul.bf16 %v2085, %v590
        %v2102 = vmul.bf16 %v2086, %v591
        %v2103 = vmul.bf16 %v2087, %v592
        %v2104 = vld [vmem:[#allocation2 + $0x17] sm:$0x1]
        %v2105 = vunpack.c.l.bf16 %v2088
        %v2106 = vunpack.c.l.bf16 %v2089
        %v2107 = vunpack.c.l.bf16 %v2090
        %v2108 = vunpack.c.l.bf16 %v2091
        %v2109 = vunpack.c.l.bf16 %v2092
        %v2110 = vunpack.c.l.bf16 %v2093
        %v2111 = vunpack.c.l.bf16 %v2094
        %v2112 = vunpack.c.l.bf16 %v2095
        %v2113 = vunpack.c.l.bf16 %v2096
        %v2114 = vunpack.c.l.bf16 %v2097
        %v2115 = vunpack.c.l.bf16 %v2098
        %v2116 = vunpack.c.l.bf16 %v2099
        %v2117 = vunpack.c.l.bf16 %v2100
        %v2118 = vunpack.c.l.bf16 %v2101
        %v2119 = vunpack.c.l.bf16 %v2102
        %v2120 = vunpack.c.l.bf16 %v2103
        %v2121 = vadd.f32 %v2105, %v2106
        %v2122 = vadd.f32 %v2121, %v2107
        %v2123 = vadd.f32 %v2122, %v2108
        %v2124 = vadd.f32 %v2123, %v2109
        %v2125 = vadd.f32 %v2124, %v2110
        %v2126 = vadd.f32 %v2125, %v2111
        %v2127 = vadd.f32 %v2126, %v2112
        %v2128 = vadd.f32 %v2127, %v2113
        %v2129 = vadd.f32 %v2128, %v2114
        %v2130 = vadd.f32 %v2129, %v2115
        %v2131 = vadd.f32 %v2130, %v2116
        %v2132 = vadd.f32 %v2131, %v2117
        %v2133 = vadd.f32 %v2132, %v2118
        %v2134 = vadd.f32 %v2133, %v2119
        %v2135 = vadd.f32 %v2134, %v2120
        %v2136 = vrot.slane %v2135, 4
        %v2137 = vadd.f32 %v2135, %v2136
        %v2138 = vrot.slane %v2137, 2
        %v2139 = vadd.f32 %v2137, %v2138
        %v2140 = vrot.slane %v2139, 1
        %v2141 = vadd.f32 %v2139, %v2140
        %v2142 = vadd.f32 %v2104, %v2141
        %2143 = vst [vmem:[#allocation2 + $0x17] sm:$0x1] %v2142
        %p2144 = scmp.eq.s32.totalorder %s38, 1
        // Predicated region
        $region85: #{tpu_custom_call.1} parent=59 // pred_check
          %p2145 = pneg %p2144
        $region86: #{tpu_custom_call.1} parent=59 // pred_check_branch
          %2147 = sbr.rel (%p2145) target = $region88
        $region87: #{tpu_custom_call.1} parent=59 // pred_region
          %v2148 = vld [vmem:[%s511] sm:$0x1]
          %v2149 = vld [vmem:[%s5] sm:$0xf]
          %v2150 = vld [vmem:[%s5 + $0x4] sm:$0xf]
          %v2151 = vld [vmem:[%s5 + $0x8] sm:$0xf]
          %v2152 = vld [vmem:[%s5 + $0xc] sm:$0xf]
          %v2153 = vld [vmem:[%s476] sm:$0xf]
          %v2154 = vld [vmem:[%s476 + $0x4] sm:$0xf]
          %v2155 = vld [vmem:[%s6] sm:$0xff]
          %v2156 = vld [vmem:[%s6 + $0x8] sm:$0xff]
          %v2157 = vld [vmem:[%s6 + $0x10] sm:$0xff]
          %v2158 = vld [vmem:[%s6 + $0x18] sm:$0xff]
          %v2159 = vld [vmem:[#allocation2] sm:$0xff]
          %v2160 = vld [vmem:[#allocation2 + $0x8] sm:$0xff]
          %v2161 = vld [vmem:[#allocation2 + $0x10] sm:$0xff]
          %v2163 = vlaneseq
          %v2164 = vshrl.u32 %v2163, 7
          %v2165 = vsub.s32 0, %v2164
          %v2166 = vrot.slane %v2148, %v2165
          %v2168 = vmul.f32 %v2159, %v2166
          %v2169 = vmul.f32 %v2160, %v2166
          %v2170 = vmul.f32 %v2161, %v2166
          %vm2171 = vcmask 195584
          %v2173 = vsel %vm2171, %v2155, 0
          %v2176 = vsel %vm2171, %v2156, 0
          %v2179 = vsel %vm2171, %v2157, 0
          %v2182 = vsel %vm2171, %v2158, 0
          %2184 = vmatprep.subr.mxu0 0.0
          %2185 = vmatpush1.msra.mxu0 %v2168
          %2186 = vmatprep.subr.mxu0 0.0
          %2187 = vmatpush1.msra.mxu0 %v2169
          %2188 = vmatprep.subr.mxu0 0.0
          %2189 = vmatpush1.msra.mxu0 %v2170
          %2190 = vmatprep.subr.mxu0 0.0
          %2191 = vmatpush1.msra.mxu0 0.0
          %2192 = vmatprep.subr.mxu0 0.0
          %2193 = vmatpush1.msra.mxu0 0.0
          %2194 = vmatprep.subr.mxu0 0.0
          %2195 = vmatpush1.msra.mxu0 0.0
          %2196 = vmatprep.subr.mxu0 0.0
          %2197 = vmatpush1.msra.mxu0 0.0
          %2198 = vmatprep.subr.mxu0 0.0
          %2199 = vmatpush1.msra.mxu0 0.0
          %2200 = vmatprep.subr.mxu0 0.0
          %2201 = vmatpush1.msra.mxu0 0.0
          %2202 = vmatprep.subr.mxu0 0.0
          %2203 = vmatpush1.msra.mxu0 0.0
          %2204 = vmatprep.subr.mxu0 0.0
          %2205 = vmatpush1.msra.mxu0 0.0
          %2206 = vmatprep.subr.mxu0 0.0
          %2207 = vmatpush1.msra.mxu0 0.0
          %2208 = vmatprep.subr.mxu0 0.0
          %2209 = vmatpush1.msra.mxu0 0.0
          %2210 = vmatprep.subr.mxu0 0.0
          %2211 = vmatpush1.msra.mxu0 0.0
          %2212 = vmatprep.subr.mxu0 0.0
          %2213 = vmatpush1.msra.mxu0 0.0
          %2214 = vmatprep.subr.mxu0 0.0
          %2215 = vmatpush1.msra.mxu0 0.0
          %2216 = vmatprep.subr.mxu0 0.0
          %2217 = vmatpush1.msra.mxu0 0.0
          %2218 = vmatprep.subr.mxu0 0.0
          %2219 = vmatpush1.msra.mxu0 0.0
          %2220 = vmatprep.subr.mxu0 0.0
          %2221 = vmatpush1.msra.mxu0 0.0
          %2222 = vmatprep.subr.mxu0 0.0
          %2223 = vmatpush1.msra.mxu0 0.0
          %2224 = vmatprep.subr.mxu0 0.0
          %2225 = vmatpush1.msra.mxu0 0.0
          %2226 = vmatprep.subr.mxu0 0.0
          %2227 = vmatpush1.msra.mxu0 0.0
          %2228 = vmatprep.subr.mxu0 0.0
          %2229 = vmatpush1.msra.mxu0 0.0
          %2230 = vmatprep.subr.mxu0 0.0
          %2231 = vmatpush1.msra.mxu0 0.0
          %2232 = vmatprep.subr.mxu0 0.0
          %2233 = vmatpush1.msra.mxu0 0.0
          %2234 = vmatprep.subr.mxu0 0.0
          %2235 = vmatpush1.msra.mxu0 0.0
          %2236 = vmatprep.subr.mxu0 0.0
          %2237 = vmatpush1.msra.mxu0 0.0
          %2238 = vmatprep.subr.mxu0 0.0
          %2239 = vmatpush1.msra.mxu0 0.0
          %2240 = vmatprep.subr.mxu0 0.0
          %2241 = vmatpush1.msra.mxu0 0.0
          %2242 = vmatprep.subr.mxu0 0.0
          %2243 = vmatpush1.msra.mxu0 0.0
          %2244 = vmatprep.subr.mxu0 0.0
          %2245 = vmatpush1.msra.mxu0 0.0
          %2246 = vmatprep.subr.mxu0 0.0
          %2247 = vmatpush1.msra.mxu0 0.0
          %2248 = vmatprep.mubr.f32.mxu0 0.0
          %2249 = vmatmul.mubr.f32.gmra.mrb[0].mxu0 %v2173
          %v2250 = vpop.f32.mrb[0].mxu0
          %v2251 = vadd.f32 0.0, %v2250
          %v2252 = vpop.f32.mrb[0].mxu0
          %2253 = vmatprep.mubr.f32.mxu0 0.0
          %2254 = vmatmul.mubr.f32.gmra.mrb[0].mxu0 %v2176
          %v2255 = vpop.f32.mrb[0].mxu0
          %v2256 = vadd.f32 0.0, %v2255
          %v2257 = vpop.f32.mrb[0].mxu0
          %2258 = vmatprep.mubr.f32.mxu0 0.0
          %2259 = vmatmul.mubr.f32.gmra.mrb[0].mxu0 %v2179
          %v2260 = vpop.f32.mrb[0].mxu0
          %v2261 = vadd.f32 0.0, %v2260
          %v2262 = vpop.f32.mrb[0].mxu0
          %2263 = vmatprep.mubr.f32.mxu0 0.0
          %2264 = vmatmul.mubr.f32.gmra.mrb[0].mxu0 %v2182
          %v2265 = vpop.f32.mrb[0].mxu0
          %v2266 = vadd.f32 0.0, %v2265
          %v2267 = vpop.f32.mrb[0].mxu0
          %2268 = vdwg.mxu0
          %v2273 = vunpack.c.l.b16 %v2149
          %v2274 = vunpack.c.l.b16 %v2150
          %v2275 = vunpack.c.l.b16 %v2151
          %v2276 = vunpack.c.l.b16 %v2152
          %v2277 = vpack.c.b16 %v2274, %v2273
          %v2278 = vpack.c.b16 %v2276, %v2275
          %v2281 = vunpack.c.l.b16 %v2153
          %v2282 = vunpack.c.l.b16 %v2154
          %v2283 = vpack.c.b16 %v2282, %v2281
          %vm2285 = vcmask 130048
          %v2287 = vsel %vm2285, %v2277, 0
          %v2290 = vsel %vm2285, %v2278, 0
          %2292 = vmatprep.subr.bf16.mxu0 0
          %2293 = vmatpush1.bf16.msra.mxu0 %v2283
          %2294 = vmatprep.subr.bf16.mxu0 0
          %2295 = vmatpush1.bf16.msra.mxu0 0
          %2296 = vmatprep.subr.bf16.mxu0 0
          %2297 = vmatpush1.bf16.msra.mxu0 0
          %2298 = vmatprep.subr.bf16.mxu0 0
          %2299 = vmatpush1.bf16.msra.mxu0 0
          %2300 = vmatprep.subr.bf16.mxu0 0
          %2301 = vmatpush1.bf16.msra.mxu0 0
          %2302 = vmatprep.subr.bf16.mxu0 0
          %2303 = vmatpush1.bf16.msra.mxu0 0
          %2304 = vmatprep.subr.bf16.mxu0 0
          %2305 = vmatpush1.bf16.msra.mxu0 0
          %2306 = vmatprep.subr.bf16.mxu0 0
          %2307 = vmatpush1.bf16.msra.mxu0 0
          %2308 = vmatprep.subr.bf16.mxu0 0
          %2309 = vmatpush1.bf16.msra.mxu0 0
          %2310 = vmatprep.subr.bf16.mxu0 0
          %2311 = vmatpush1.bf16.msra.mxu0 0
          %2312 = vmatprep.subr.bf16.mxu0 0
          %2313 = vmatpush1.bf16.msra.mxu0 0
          %2314 = vmatprep.subr.bf16.mxu0 0
          %2315 = vmatpush1.bf16.msra.mxu0 0
          %2316 = vmatprep.subr.bf16.mxu0 0
          %2317 = vmatpush1.bf16.msra.mxu0 0
          %2318 = vmatprep.subr.bf16.mxu0 0
          %2319 = vmatpush1.bf16.msra.mxu0 0
          %2320 = vmatprep.subr.bf16.mxu0 0
          %2321 = vmatpush1.bf16.msra.mxu0 0
          %2322 = vmatprep.subr.bf16.mxu0 0
          %2323 = vmatpush1.bf16.msra.mxu0 0
          %2324 = vmatprep.mubr.bf16.mxu0 0
          %2325 = vmatmul.mubr.bf16.gmra.mrb[0].mxu0 %v2287
          %v2326 = vpop.f32.mrb[0].mxu0
          %v2327 = vadd.f32 %v2251, %v2326
          %v2328 = vpop.f32.mrb[0].mxu0
          %v2329 = vpop.f32.mrb[0].mxu0
          %v2330 = vadd.f32 %v2256, %v2329
          %v2331 = vpop.f32.mrb[0].mxu0
          %2332 = vmatprep.mubr.bf16.mxu0 0
          %2333 = vmatmul.mubr.bf16.gmra.mrb[0].mxu0 %v2290
          %v2334 = vpop.f32.mrb[0].mxu0
          %v2335 = vadd.f32 %v2261, %v2334
          %v2336 = vpop.f32.mrb[0].mxu0
          %v2337 = vpop.f32.mrb[0].mxu0
          %v2338 = vadd.f32 %v2266, %v2337
          %v2339 = vpop.f32.mrb[0].mxu0
          %2340 = vdwg.mxu0
          %v2341 = vld [vmem:[%s7] sm:$0xff]
          %v2342 = vld [vmem:[%s7 + $0x8] sm:$0xff]
          %v2343 = vld [vmem:[%s7 + $0x10] sm:$0xff]
          %v2344 = vld [vmem:[%s7 + $0x18] sm:$0xff]
          %2346 = vset.pattern.permute.xlu0 0
          %2347 = vperm.xlu0 %2346, %v2341
          %v2348 = vpop.permute.xlu0 %2347
          %2351 = vset.pattern.permute.xlu0 0
          %2352 = vperm.xlu0 %2351, %v2342
          %v2353 = vpop.permute.xlu0 %2352
          %2356 = vset.pattern.permute.xlu0 0
          %2357 = vperm.xlu0 %2356, %v2343
          %v2358 = vpop.permute.xlu0 %2357
          %2361 = vset.pattern.permute.xlu0 0
          %2362 = vperm.xlu0 %2361, %v2344
          %v2363 = vpop.permute.xlu0 %2362
          %v2365 = vadd.f32 %v2327, %v2348
          %v2366 = vadd.f32 %v2330, %v2353
          %v2367 = vadd.f32 %v2335, %v2358
          %v2368 = vadd.f32 %v2338, %v2363
          %v2369 = vadd.f32 %v2365, %v2366
          %v2370 = vadd.f32 %v2369, %v2367
          %v2371 = vadd.f32 %v2370, %v2368
          %v2372 = vrot.slane %v2371, 4
          %v2373 = vadd.f32 %v2371, %v2372
          %v2374 = vrot.slane %v2373, 2
          %v2375 = vadd.f32 %v2373, %v2374
          %v2376 = vrot.slane %v2375, 1
          %v2377 = vadd.f32 %v2375, %v2376
          %v2378 = vmul.f32 %v2365, %v2365
          %v2379 = vmul.f32 %v2366, %v2366
          %v2380 = vmul.f32 %v2367, %v2367
          %v2381 = vmul.f32 %v2368, %v2368
          %v2382 = vadd.f32 %v2378, %v2379
          %v2383 = vadd.f32 %v2382, %v2380
          %v2384 = vadd.f32 %v2383, %v2381
          %v2385 = vrot.slane %v2384, 4
          %v2386 = vadd.f32 %v2384, %v2385
          %v2387 = vrot.slane %v2386, 2
          %v2388 = vadd.f32 %v2386, %v2387
          %v2389 = vrot.slane %v2388, 1
          %v2390 = vadd.f32 %v2388, %v2389
          %v2391 = vmul.f32 %v2377, 0.03125
          %v2392 = vmul.f32 %v2390, 0.03125
          %v2393 = vmul.f32 %v2391, %v2391
          %v2394 = vsub.f32 %v2392, %v2393
          %v2395 = vsub.f32 %v2365, %v2391
          %v2396 = vsub.f32 %v2366, %v2391
          %v2397 = vsub.f32 %v2367, %v2391
          %v2398 = vsub.f32 %v2368, %v2391
          %v2399 = vadd.f32 %v2394, 1e-05
          %v2400 = vrsqrt.pop %v2399
          %v2401 = vmul.f32 %v2395, %v2400
          %v2402 = vmul.f32 %v2396, %v2400
          %v2403 = vmul.f32 %v2397, %v2400
          %v2404 = vmul.f32 %v2398, %v2400
          %v2405 = vld [vmem:[%s8] sm:$0xff]
          %v2406 = vld [vmem:[%s8 + $0x8] sm:$0xff]
          %v2407 = vld [vmem:[%s8 + $0x10] sm:$0xff]
          %v2408 = vld [vmem:[%s8 + $0x18] sm:$0xff]
          %2410 = vset.pattern.permute.xlu0 0
          %2411 = vperm.xlu0 %2410, %v2405
          %v2412 = vpop.permute.xlu0 %2411
          %2415 = vset.pattern.permute.xlu0 0
          %2416 = vperm.xlu0 %2415, %v2406
          %v2417 = vpop.permute.xlu0 %2416
          %2420 = vset.pattern.permute.xlu0 0
          %2421 = vperm.xlu0 %2420, %v2407
          %v2422 = vpop.permute.xlu0 %2421
          %2425 = vset.pattern.permute.xlu0 0
          %2426 = vperm.xlu0 %2425, %v2408
          %v2427 = vpop.permute.xlu0 %2426
          %v2429 = vmul.f32 %v2401, %v2412
          %v2430 = vmul.f32 %v2402, %v2417
          %v2431 = vmul.f32 %v2403, %v2422
          %v2432 = vmul.f32 %v2404, %v2427
          %v2433 = vld [vmem:[%s9] sm:$0xff]
          %v2434 = vld [vmem:[%s9 + $0x8] sm:$0xff]
          %v2435 = vld [vmem:[%s9 + $0x10] sm:$0xff]
          %v2436 = vld [vmem:[%s9 + $0x18] sm:$0xff]
          %2438 = vset.pattern.permute.xlu0 0
          %2439 = vperm.xlu0 %2438, %v2433
          %v2440 = vpop.permute.xlu0 %2439
          %2443 = vset.pattern.permute.xlu0 0
          %2444 = vperm.xlu0 %2443, %v2434
          %v2445 = vpop.permute.xlu0 %2444
          %2448 = vset.pattern.permute.xlu0 0
          %2449 = vperm.xlu0 %2448, %v2435
          %v2450 = vpop.permute.xlu0 %2449
          %2453 = vset.pattern.permute.xlu0 0
          %2454 = vperm.xlu0 %2453, %v2436
          %v2455 = vpop.permute.xlu0 %2454
          %v2457 = vadd.f32 %v2429, %v2440
          %v2458 = vadd.f32 %v2430, %v2445
          %v2459 = vadd.f32 %v2431, %v2450
          %v2460 = vadd.f32 %v2432, %v2455
          %v2461 = vmax.f32 %v2457, 0.0
          %v2462 = vmax.f32 %v2458, 0.0
          %v2463 = vmax.f32 %v2459, 0.0
          %v2464 = vmax.f32 %v2460, 0.0
          %2465 = vst [vmem:[%s566] sm:$0xff] %v2461
          %2466 = vst [vmem:[%s566 + $0x8] sm:$0xff] %v2462
          %2467 = vst [vmem:[%s566 + $0x10] sm:$0xff] %v2463
          %2468 = vst [vmem:[%s566 + $0x18] sm:$0xff] %v2464
        $region88: #{tpu_custom_call.1} parent=59 // pred_fallthru
          _
        %s2469 = sand.u32 %s292, 1
        %s2470 = scalar_lea.sflag [#allocation5], %s2469
        %s2471 = sand.u32 %s292, 1
        %s2472 = smul.addr %s2471, 32
        %s2473 = scalar_lea.vmem [#allocation12], %s2472
        // Predicated region
        $region89: #{tpu_custom_call.1} parent=59 // pred_check
          %p2474 = pneg %p302
        $region90: #{tpu_custom_call.1} parent=59 // pred_check_branch
          %2476 = sbr.rel (%p2474) target = $region92
        $region91: #{tpu_custom_call.1} parent=59 // pred_region
          %s2478 = ssub.s32 512, 512
          %2479 = vsyncadd %s2470, %s2478
          %s2480 = smul.addr %s37, 128
          %s2481 = scalar_lea.hbm %s10, %s2480
          %s2482 = sshll.u32 %s2473, 4
          %s2483 = int_to_ptr.vmem [resolvable:$true] %s2482
          %2488 = dma.vmem_to_hbm [thread:$0]  %s2483, 512, %s2481, %s2470, 128, 256, 8
        $region92: #{tpu_custom_call.1} parent=59 // pred_fallthru
          _
      $region60: #{tpu_custom_call.1} parent=5 // pred_fallthru
        _
      %p2489 = scmp.le.s32.totalorder 2, %s28
      // Predicated region
      $region93: #{tpu_custom_call.1} parent=5 // pred_check
        %p2490 = pneg %p2489
      $region94: #{tpu_custom_call.1} parent=5 // pred_check_branch
        %2492 = sbr.rel (%p2490) target = $region96
      $region95: #{tpu_custom_call.1} parent=5 // pred_region
        %s2493 = ssub.s32 %s28, 2
        // Predicated region
        $region97: #{tpu_custom_call.1} parent=95 // pred_check
          %p2494 = pneg %p308
        $region98: #{tpu_custom_call.1} parent=95 // pred_check_branch
          %2496 = sbr.rel (%p2494) target = $region100
        $region99: #{tpu_custom_call.1} parent=95 // pred_region
          %s2497 = sand.u32 %s293, 1
          %s2498 = scalar_lea.sflag [#allocation5], %s2497
          %s2499 = sand.u32 %s293, 1
          %s2500 = smul.addr %s2499, 32
          %s2501 = scalar_lea.vmem [#allocation12], %s2500
          %2502 = dma.done %s2498, 512
        $region100: #{tpu_custom_call.1} parent=95 // pred_fallthru
          _
      $region96: #{tpu_custom_call.1} parent=5 // pred_fallthru
        _
    $region6: #{tpu_custom_call.1} parent=1 // loop_footer
      %s32 = sadd.s32 1, %s28
    $region7: #{tpu_custom_call.1} parent=1 // loop_footer_branch
      %27 = sbr.rel target = $region3
    $region8: #{tpu_custom_call.1} parent=1 // loop_exit
      _
    %2503 = vsyncpa [#allocation4], 1
    %s2504 = scalar_lea.sflag [#allocation4], 1
    %2505 = vsyncpa %s2504, 1
    %2506 = vsyncpa [#allocation7], 1
    %s2507 = scalar_lea.sflag [#allocation7], 1
    %2508 = vsyncpa %s2507, 1
    %2509 = vsyncpa [#allocation10], 1
    %s2510 = scalar_lea.sflag [#allocation10], 1
    %2511 = vsyncpa %s2510, 1
    %2512 = vsyncpa [#allocation5], 1
    %s2513 = scalar_lea.sflag [#allocation5], 1
    %2514 = vsyncpa %s2513, 1

</llo_original>
